<compile_context>
chip_gen: v7x
topology: tpu7x:2x2x1
jax: 0.10.0
libtpu: 0.0.40
codegen_flags: <defaults>
</compile_context>

<pallas_src>
import functools
import math

import jax
import jax.numpy as jnp
from jax.experimental import pallas as pl
from jax.experimental.pallas import tpu as pltpu


def decoder_cell_kernel(tgt_ref, src_ref, tmask_ref, smask_ref,
                        wqkv1_ref, bqkv1_ref, wo1_ref, bo1_ref, g1_ref, be1_ref,
                        wq2_ref, bq2_ref, wkv2_ref, bkv2_ref, wo2_ref, bo2_ref,
                        g2_ref, be2_ref,
                        w1_ref, b1_ref, w2_ref, b2_ref, g3_ref, be3_ref,
                        o_ref, *, heads, d_k, d_v, bt, s_tgt, s_src, d_model,
                        compute_dtype):
    """One batch tile per grid step: the full decoder cell runs in VMEM."""
    hdk = heads * d_k
    hdv = heads * d_v
    approx_recip = compute_dtype == jnp.bfloat16
    cdt = lambda x: x.astype(compute_dtype)

    tgt = tgt_ref[...].reshape(bt * s_tgt, d_model)        # f32 rows
    src = src_ref[...].reshape(bt * s_src, d_model)
    tmask = tmask_ref[...]                                 # (bt, s_tgt, s_tgt); 1.0 == masked
    smask = smask_ref[...]                                 # (bt, s_tgt, s_src)

    def layer_norm(x, gamma, beta):
        mean = jnp.mean(x, axis=-1, keepdims=True)
        var = jnp.mean((x - mean) ** 2, axis=-1, keepdims=True)
        return (x - mean) * jax.lax.rsqrt(var + 1e-6) * gamma + beta

    def split_heads(x, d):
        # (rows, heads*d) -> (heads, rows, d): head axis leads, so per-head attention
        # becomes one leading-batch-dim einsum instead of a per-head matmul loop.
        return jnp.stack([x[:, h * d:(h + 1) * d] for h in range(heads)], axis=0)

    def mha(Q, K, V, mask, wo, bo, gamma, beta, residual, s_q, s_kv):
        # Q already carries the 1/sqrt(d_k) scale (folded into Wq / bq host-side).
        Q, K, V = cdt(Q), cdt(K), cdt(V)
        ctx_rows = []
        for b in range(bt):                                # static, small batch tile
            qb = split_heads(Q[b * s_q:(b + 1) * s_q, :], d_k)      # (H, s_q, d_k)
            kb = split_heads(K[b * s_kv:(b + 1) * s_kv, :], d_k)    # (H, s_kv, d_k)
            vb = split_heads(V[b * s_kv:(b + 1) * s_kv, :], d_v)    # (H, s_kv, d_v)
            # trans-B contraction via dot_general dims (no explicit .T / XLU transpose)
            s = jnp.einsum('hqd,hkd->hqk', qb, kb,
                           preferred_element_type=jnp.float32)      # (H, s_q, s_kv)
            s = jnp.where(mask[b][None, :, :] > 0.5, -1e30, s)
            s = s - jnp.max(s, axis=-1, keepdims=True)
            p = jnp.exp(s)
            p = p * pl.reciprocal(jnp.sum(p, axis=-1, keepdims=True),
                                  approx=approx_recip)
            # TODO(synk): nn.Dropout on attention weights is identity in eval mode.
            ctx = jnp.einsum('hqk,hkd->hqd', cdt(p), vb,
                             preferred_element_type=jnp.float32)    # (H, s_q, d_v)
            ctx_rows.append(jnp.concatenate([ctx[h] for h in range(heads)], axis=-1))
        attn = ctx_rows[0] if bt == 1 else jnp.concatenate(ctx_rows, axis=0)
        # single lane-dense output projection for all heads and all batch rows
        attn = jnp.dot(cdt(attn), wo, preferred_element_type=jnp.float32) + bo
        # TODO(synk): nn.Dropout after Wout is identity in eval mode.
        return layer_norm(residual + attn, gamma, beta)

    # ---- self-attention (q = k = v = tgt): one fused QKV projection ----
    qkv = jnp.dot(cdt(tgt), wqkv1_ref[...],
                  preferred_element_type=jnp.float32) + bqkv1_ref[...]
    x1 = mha(qkv[:, :hdk], qkv[:, hdk:2 * hdk], qkv[:, 2 * hdk:],
             tmask, wo1_ref[...], bo1_ref[...], g1_ref[...], be1_ref[...],
             tgt, s_tgt, s_tgt)

    # ---- cross-attention (q = x1, k = v = src): fused K|V projection ----
    q2 = jnp.dot(cdt(x1), wq2_ref[...],
                 preferred_element_type=jnp.float32) + bq2_ref[...]
    kv = jnp.dot(cdt(src), wkv2_ref[...],
                 preferred_element_type=jnp.float32) + bkv2_ref[...]
    x2 = mha(q2, kv[:, :hdk], kv[:, hdk:],
             smask, wo2_ref[...], bo2_ref[...], g2_ref[...], be2_ref[...],
             x1, s_tgt, s_src)

    # ---- position-wise FFN: relu(W1 x) -> relu(W2 .) -> LN(out + x) ----
    h = jnp.maximum(jnp.dot(cdt(x2), w1_ref[...],
                            preferred_element_type=jnp.float32) + b1_ref[...], 0.0)
    h = jnp.maximum(jnp.dot(cdt(h), w2_ref[...],
                            preferred_element_type=jnp.float32) + b2_ref[...], 0.0)
    # TODO(synk): nn.Dropout in the FFN is identity in eval mode.
    y = layer_norm(h + x2, g3_ref[...], be3_ref[...])

    o_ref[...] = y.reshape(bt, s_tgt, d_model).astype(o_ref.dtype)


def decoder_cell(src, tgt, src_mask, tgt_mask, params, *, heads, d_k, d_v,
                 compute_dtype=jnp.float32, batch_tile=None):
    """Pallas DecoderCell forward. Masks are float arrays; >0.5 means 'masked'."""
    B, S_t, Dm = tgt.shape
    _, S_s, _ = src.shape
    bt = batch_tile or B
    assert B % bt == 0

    sa, xa, ff = params["self_attn"], params["src_attn"], params["pos_ff"]
    scale = 1.0 / math.sqrt(d_k)
    wd = compute_dtype

    # Fused / pre-scaled weights (host-side packing).
    w_qkv1 = jnp.concatenate([sa["wq"] * scale, sa["wk"], sa["wv"]], axis=1).astype(wd)
    b_qkv1 = jnp.concatenate([sa["bq"] * scale, sa["bk"], sa["bv"]], axis=1).astype(jnp.float32)
    wo1, bo1 = sa["wo"].astype(wd), sa["bo"].astype(jnp.float32)
    g1, be1 = sa["gamma"], sa["beta"]

    wq2 = (xa["wq"] * scale).astype(wd)
    bq2 = (xa["bq"] * scale).astype(jnp.float32)
    wkv2 = jnp.concatenate([xa["wk"], xa["wv"]], axis=1).astype(wd)
    bkv2 = jnp.concatenate([xa["bk"], xa["bv"]], axis=1).astype(jnp.float32)
    wo2, bo2 = xa["wo"].astype(wd), xa["bo"].astype(jnp.float32)
    g2, be2 = xa["gamma"], xa["beta"]

    w1c, b1c = ff["w1"].astype(wd), ff["b1"].astype(jnp.float32)
    w2c, b2c = ff["w2"].astype(wd), ff["b2"].astype(jnp.float32)
    g3, be3 = ff["gamma"], ff["beta"]

    weights = [w_qkv1, b_qkv1, wo1, bo1, g1, be1,
               wq2, bq2, wkv2, bkv2, wo2, bo2, g2, be2,
               w1c, b1c, w2c, b2c, g3, be3]

    kernel = functools.partial(
        decoder_cell_kernel, heads=heads, d_k=d_k, d_v=d_v,
        bt=bt, s_tgt=S_t, s_src=S_s, d_model=Dm, compute_dtype=compute_dtype)

    def full_spec(a):
        return pl.BlockSpec(a.shape, lambda b, _n=a.ndim: (0,) * _n)

    in_specs = ([pl.BlockSpec((bt, S_t, Dm), lambda b: (b, 0, 0)),
                 pl.BlockSpec((bt, S_s, Dm), lambda b: (b, 0, 0)),
                 pl.BlockSpec((bt, S_t, S_t), lambda b: (b, 0, 0)),
                 pl.BlockSpec((bt, S_t, S_s), lambda b: (b, 0, 0))]
                + [full_spec(w) for w in weights])

    return pl.pallas_call(
        kernel,
        out_shape=jax.ShapeDtypeStruct((B, S_t, Dm), jnp.float32),
        grid_spec=pltpu.PrefetchScalarGridSpec(
            num_scalar_prefetch=0,
            grid=(B // bt,),
            in_specs=in_specs,
            out_specs=pl.BlockSpec((bt, S_t, Dm), lambda b: (b, 0, 0)),
        ),
        compiler_params=pltpu.CompilerParams(
            dimension_semantics=("parallel",),
            vmem_limit_bytes=32 * 1024 * 1024),
    )(tgt.astype(jnp.float32), src.astype(jnp.float32),
      tgt_mask.astype(jnp.float32), src_mask.astype(jnp.float32), *weights)


def init_decoder_params(key, model_dim, heads, d_k, d_v, ff_dim):
    """Deterministic nn.Linear / nn.LayerNorm-style initialization."""
    def linear(k, fan_in, fan_out):
        kw, kb = jax.random.split(k)
        bound = 1.0 / math.sqrt(fan_in)
        w = jax.random.uniform(kw, (fan_in, fan_out), jnp.float32, -bound, bound)
        b = jax.random.uniform(kb, (1, fan_out), jnp.float32, -bound, bound)
        return w, b

    def mha_params(k):
        k1, k2, k3, k4 = jax.random.split(k, 4)
        wq, bq = linear(k1, model_dim, heads * d_k)
        wk, bk = linear(k2, model_dim, heads * d_k)
        wv, bv = linear(k3, model_dim, heads * d_v)
        wo, bo = linear(k4, heads * d_v, model_dim)
        return dict(wq=wq, bq=bq, wk=wk, bk=bk, wv=wv, bv=bv, wo=wo, bo=bo,
                    gamma=jnp.ones((1, model_dim), jnp.float32),
                    beta=jnp.zeros((1, model_dim), jnp.float32))

    ks = jax.random.split(key, 4)
    w1, b1 = linear(ks[2], model_dim, ff_dim)
    w2, b2 = linear(ks[3], ff_dim, model_dim)
    return dict(
        self_attn=mha_params(ks[0]),
        src_attn=mha_params(ks[1]),
        pos_ff=dict(w1=w1, b1=b1, w2=w2, b2=b2,
                    gamma=jnp.ones((1, model_dim), jnp.float32),
                    beta=jnp.zeros((1, model_dim), jnp.float32)))


def reference_decoder_cell(src, tgt, src_mask, tgt_mask, params, *, heads, d_k, d_v):
    """Pure-JAX reference mirroring the PyTorch DecoderCell forward (eval mode)."""
    def mha_ref(q, k, v, mask, p):
        B, Sq, _ = q.shape
        Sk = k.shape[1]
        residual = q
        Q = (q @ p["wq"] + p["bq"]).reshape(B, Sq, heads, d_k).transpose(0, 2, 1, 3)
        K = (k @ p["wk"] + p["bk"]).reshape(B, Sk, heads, d_k).transpose(0, 2, 1, 3)
        V = (v @ p["wv"] + p["bv"]).reshape(B, Sk, heads, d_v).transpose(0, 2, 1, 3)
        score = jnp.einsum("bhqd,bhkd->bhqk", Q, K) / math.sqrt(d_k)
        score = jnp.where(mask[:, None, :, :] > 0.5, -1e30, score)   # masked_fill(-inf)
        w = jax.nn.softmax(score, axis=-1)
        attn = jnp.einsum("bhqk,bhkd->bhqd", w, V)
        attn = attn.transpose(0, 2, 1, 3).reshape(B, Sq, heads * d_v)
        attn = attn @ p["wo"] + p["bo"]
        x = residual + attn
        mean = x.mean(-1, keepdims=True)
        var = ((x - mean) ** 2).mean(-1, keepdims=True)
        return (x - mean) / jnp.sqrt(var + 1e-6) * p["gamma"] + p["beta"]

    x1 = mha_ref(tgt, tgt, tgt, tgt_mask, params["self_attn"])
    x2 = mha_ref(x1, src, src, src_mask, params["src_attn"])
    ff = params["pos_ff"]
    h = jax.nn.relu(x2 @ ff["w1"] + ff["b1"])
    h = jax.nn.relu(h @ ff["w2"] + ff["b2"])
    x = h + x2
    mean = x.mean(-1, keepdims=True)
    var = ((x - mean) ** 2).mean(-1, keepdims=True)
    return (x - mean) / jnp.sqrt(var + 1e-6) * ff["gamma"] + ff["beta"]


if __name__ == "__main__":
    # Small shapes consistent with the module's forward.
    batch, seq, model_dim = 2, 8, 32
    heads, d_k, d_v, ff_dim = 2, 16, 16, 64

    key = jax.random.PRNGKey(0)
    kp, ks, kt = jax.random.split(key, 3)
    params = init_decoder_params(kp, model_dim, heads, d_k, d_v, ff_dim)
    src = jax.random.normal(ks, (batch, seq, model_dim), jnp.float32)
    tgt = jax.random.normal(kt, (batch, seq, model_dim), jnp.float32)

    # Causal mask for decoder self-attention, no masking for cross-attention (1.0 == masked).
    causal = jnp.triu(jnp.ones((seq, seq), jnp.float32), k=1)
    tgt_mask = jnp.broadcast_to(causal, (batch, seq, seq))
    src_mask = jnp.zeros((batch, seq, seq), jnp.float32)

    ref = reference_decoder_cell(src, tgt, src_mask, tgt_mask, params,
                                 heads=heads, d_k=d_k, d_v=d_v)

    # f32 path (exact check).
    out = decoder_cell(src, tgt, src_mask, tgt_mask, params,
                       heads=heads, d_k=d_k, d_v=d_v, compute_dtype=jnp.float32)
    out = jax.block_until_ready(out)
    assert out.shape == (batch, seq, model_dim)
    err = float(jnp.max(jnp.abs(out - ref)))
    assert jnp.allclose(out, ref, atol=1e-3, rtol=1e-3), f"f32 max err {err}"

    # bf16 MXU path (v6e / v7x): bf16 weights & matmul inputs, f32 accumulation.
    out_bf16 = decoder_cell(src, tgt, src_mask, tgt_mask, params,
                            heads=heads, d_k=d_k, d_v=d_v, compute_dtype=jnp.bfloat16)
    out_bf16 = jax.block_until_ready(out_bf16)
    err_bf16 = float(jnp.max(jnp.abs(out_bf16 - ref)))
    assert jnp.allclose(out_bf16, ref, atol=5e-2, rtol=5e-2), f"bf16 max err {err_bf16}"

    print("KERNEL_OK")
</pallas_src>

<mosaic_0001>
module attributes {stable_mosaic.version = 11 : i64} {
  func.func @decoder_cell_kernel(%arg0: i32, %arg1: memref<2x8x32xf32, #tpu.memory_space<vmem>>, %arg2: memref<2x8x32xf32, #tpu.memory_space<vmem>>, %arg3: memref<2x8x8xf32, #tpu.memory_space<vmem>>, %arg4: memref<2x8x8xf32, #tpu.memory_space<vmem>>, %arg5: memref<32x96xf32, #tpu.memory_space<vmem>>, %arg6: memref<1x96xf32, #tpu.memory_space<vmem>>, %arg7: memref<32x32xf32, #tpu.memory_space<vmem>>, %arg8: memref<1x32xf32, #tpu.memory_space<vmem>>, %arg9: memref<1x32xf32, #tpu.memory_space<vmem>>, %arg10: memref<1x32xf32, #tpu.memory_space<vmem>>, %arg11: memref<32x32xf32, #tpu.memory_space<vmem>>, %arg12: memref<1x32xf32, #tpu.memory_space<vmem>>, %arg13: memref<32x64xf32, #tpu.memory_space<vmem>>, %arg14: memref<1x64xf32, #tpu.memory_space<vmem>>, %arg15: memref<32x32xf32, #tpu.memory_space<vmem>>, %arg16: memref<1x32xf32, #tpu.memory_space<vmem>>, %arg17: memref<1x32xf32, #tpu.memory_space<vmem>>, %arg18: memref<1x32xf32, #tpu.memory_space<vmem>>, %arg19: memref<32x64xf32, #tpu.memory_space<vmem>>, %arg20: memref<1x64xf32, #tpu.memory_space<vmem>>, %arg21: memref<64x32xf32, #tpu.memory_space<vmem>>, %arg22: memref<1x32xf32, #tpu.memory_space<vmem>>, %arg23: memref<1x32xf32, #tpu.memory_space<vmem>>, %arg24: memref<1x32xf32, #tpu.memory_space<vmem>>, %arg25: memref<2x8x32xf32, #tpu.memory_space<vmem>>) attributes {dimension_semantics = [#tpu.dimension_semantics<parallel>], iteration_bounds = array<i64: 1>, scalar_prefetch = 0 : i64, scratch_operands = 0 : i64, tpu.core_type = #tpu.core_type<tc>, window_params = [{transform_indices = @transform_0, window_bounds = array<i64: 2, 8, 32>}, {transform_indices = @transform_1, window_bounds = array<i64: 2, 8, 32>}, {transform_indices = @transform_2, window_bounds = array<i64: 2, 8, 8>}, {transform_indices = @transform_3, window_bounds = array<i64: 2, 8, 8>}, {pipeline_mode = #tpu.pipeline_mode<synchronous>, transform_indices = @transform_4, window_bounds = array<i64: 32, 96>}, {pipeline_mode = #tpu.pipeline_mode<synchronous>, transform_indices = @transform_5, window_bounds = array<i64: 1, 96>}, {pipeline_mode = #tpu.pipeline_mode<synchronous>, transform_indices = @transform_6, window_bounds = array<i64: 32, 32>}, {pipeline_mode = #tpu.pipeline_mode<synchronous>, transform_indices = @transform_7, window_bounds = array<i64: 1, 32>}, {pipeline_mode = #tpu.pipeline_mode<synchronous>, transform_indices = @transform_8, window_bounds = array<i64: 1, 32>}, {pipeline_mode = #tpu.pipeline_mode<synchronous>, transform_indices = @transform_9, window_bounds = array<i64: 1, 32>}, {pipeline_mode = #tpu.pipeline_mode<synchronous>, transform_indices = @transform_10, window_bounds = array<i64: 32, 32>}, {pipeline_mode = #tpu.pipeline_mode<synchronous>, transform_indices = @transform_11, window_bounds = array<i64: 1, 32>}, {pipeline_mode = #tpu.pipeline_mode<synchronous>, transform_indices = @transform_12, window_bounds = array<i64: 32, 64>}, {pipeline_mode = #tpu.pipeline_mode<synchronous>, transform_indices = @transform_13, window_bounds = array<i64: 1, 64>}, {pipeline_mode = #tpu.pipeline_mode<synchronous>, transform_indices = @transform_14, window_bounds = array<i64: 32, 32>}, {pipeline_mode = #tpu.pipeline_mode<synchronous>, transform_indices = @transform_15, window_bounds = array<i64: 1, 32>}, {pipeline_mode = #tpu.pipeline_mode<synchronous>, transform_indices = @transform_16, window_bounds = array<i64: 1, 32>}, {pipeline_mode = #tpu.pipeline_mode<synchronous>, transform_indices = @transform_17, window_bounds = array<i64: 1, 32>}, {pipeline_mode = #tpu.pipeline_mode<synchronous>, transform_indices = @transform_18, window_bounds = array<i64: 32, 64>}, {pipeline_mode = #tpu.pipeline_mode<synchronous>, transform_indices = @transform_19, window_bounds = array<i64: 1, 64>}, {pipeline_mode = #tpu.pipeline_mode<synchronous>, transform_indices = @transform_20, window_bounds = array<i64: 64, 32>}, {pipeline_mode = #tpu.pipeline_mode<synchronous>, transform_indices = @transform_21, window_bounds = array<i64: 1, 32>}, {pipeline_mode = #tpu.pipeline_mode<synchronous>, transform_indices = @transform_22, window_bounds = array<i64: 1, 32>}, {pipeline_mode = #tpu.pipeline_mode<synchronous>, transform_indices = @transform_23, window_bounds = array<i64: 1, 32>}, {transform_indices = @transform_24, window_bounds = array<i64: 2, 8, 32>}]} {
    %c0 = arith.constant 0 : index
    %c0_0 = arith.constant 0 : index
    %c0_1 = arith.constant 0 : index
    %0 = vector.load %arg1[%c0, %c0_0, %c0_1] : memref<2x8x32xf32, #tpu.memory_space<vmem>>, vector<2x8x32xf32>
    %1 = vector.shape_cast %0 : vector<2x8x32xf32> to vector<16x32xf32>
    %c0_2 = arith.constant 0 : index
    %c0_3 = arith.constant 0 : index
    %c0_4 = arith.constant 0 : index
    %2 = vector.load %arg2[%c0_2, %c0_3, %c0_4] : memref<2x8x32xf32, #tpu.memory_space<vmem>>, vector<2x8x32xf32>
    %3 = vector.shape_cast %2 : vector<2x8x32xf32> to vector<16x32xf32>
    %c0_5 = arith.constant 0 : index
    %c0_6 = arith.constant 0 : index
    %c0_7 = arith.constant 0 : index
    %4 = vector.load %arg3[%c0_5, %c0_6, %c0_7] : memref<2x8x8xf32, #tpu.memory_space<vmem>>, vector<2x8x8xf32>
    %c0_8 = arith.constant 0 : index
    %c0_9 = arith.constant 0 : index
    %c0_10 = arith.constant 0 : index
    %5 = vector.load %arg4[%c0_8, %c0_9, %c0_10] : memref<2x8x8xf32, #tpu.memory_space<vmem>>, vector<2x8x8xf32>
    %c0_11 = arith.constant 0 : index
    %c0_12 = arith.constant 0 : index
    %6 = vector.load %arg5[%c0_11, %c0_12] : memref<32x96xf32, #tpu.memory_space<vmem>>, vector<32x96xf32>
    %cst = arith.constant dense<0.000000e+00> : vector<16x96xf32>
    %7 = tpu.matmul %1, %6, %cst {dimension_numbers = #tpu.dot_dimension_numbers<[1], [0], [0], [1], [0, 0, 1, 1], [], []>} : vector<16x32xf32>, vector<32x96xf32>, vector<16x96xf32> -> vector<16x96xf32>
    %c0_13 = arith.constant 0 : index
    %c0_14 = arith.constant 0 : index
    %8 = vector.load %arg6[%c0_13, %c0_14] : memref<1x96xf32, #tpu.memory_space<vmem>>, vector<1x96xf32>
    %9 = vector.broadcast %8 : vector<1x96xf32> to vector<16x96xf32>
    %10 = arith.addf %7, %9 : vector<16x96xf32>
    %11 = vector.extract_strided_slice %10 {offsets = [0, 0], sizes = [16, 32], strides = [1, 1]} : vector<16x96xf32> to vector<16x32xf32>
    %12 = vector.extract_strided_slice %10 {offsets = [0, 32], sizes = [16, 32], strides = [1, 1]} : vector<16x96xf32> to vector<16x32xf32>
    %13 = vector.extract_strided_slice %10 {offsets = [0, 64], sizes = [16, 32], strides = [1, 1]} : vector<16x96xf32> to vector<16x32xf32>
    %c0_15 = arith.constant 0 : index
    %c0_16 = arith.constant 0 : index
    %14 = vector.load %arg7[%c0_15, %c0_16] : memref<32x32xf32, #tpu.memory_space<vmem>>, vector<32x32xf32>
    %c0_17 = arith.constant 0 : index
    %c0_18 = arith.constant 0 : index
    %15 = vector.load %arg8[%c0_17, %c0_18] : memref<1x32xf32, #tpu.memory_space<vmem>>, vector<1x32xf32>
    %c0_19 = arith.constant 0 : index
    %c0_20 = arith.constant 0 : index
    %16 = vector.load %arg9[%c0_19, %c0_20] : memref<1x32xf32, #tpu.memory_space<vmem>>, vector<1x32xf32>
    %c0_21 = arith.constant 0 : index
    %c0_22 = arith.constant 0 : index
    %17 = vector.load %arg10[%c0_21, %c0_22] : memref<1x32xf32, #tpu.memory_space<vmem>>, vector<1x32xf32>
    %18 = vector.extract_strided_slice %11 {offsets = [0, 0], sizes = [8, 32], strides = [1, 1]} : vector<16x32xf32> to vector<8x32xf32>
    %19 = vector.extract_strided_slice %18 {offsets = [0, 0], sizes = [8, 16], strides = [1, 1]} : vector<8x32xf32> to vector<8x16xf32>
    %20 = vector.extract_strided_slice %18 {offsets = [0, 16], sizes = [8, 16], strides = [1, 1]} : vector<8x32xf32> to vector<8x16xf32>
    %21 = vector.shape_cast %19 : vector<8x16xf32> to vector<1x8x16xf32>
    %22 = vector.shape_cast %20 : vector<8x16xf32> to vector<1x8x16xf32>
    %23 = tpu.concatenate %21, %22 in 0 : vector<1x8x16xf32>, vector<1x8x16xf32> -> vector<2x8x16xf32>
    %24 = vector.extract_strided_slice %12 {offsets = [0, 0], sizes = [8, 32], strides = [1, 1]} : vector<16x32xf32> to vector<8x32xf32>
    %25 = vector.extract_strided_slice %24 {offsets = [0, 0], sizes = [8, 16], strides = [1, 1]} : vector<8x32xf32> to vector<8x16xf32>
    %26 = vector.extract_strided_slice %24 {offsets = [0, 16], sizes = [8, 16], strides = [1, 1]} : vector<8x32xf32> to vector<8x16xf32>
    %27 = vector.shape_cast %25 : vector<8x16xf32> to vector<1x8x16xf32>
    %28 = vector.shape_cast %26 : vector<8x16xf32> to vector<1x8x16xf32>
    %29 = tpu.concatenate %27, %28 in 0 : vector<1x8x16xf32>, vector<1x8x16xf32> -> vector<2x8x16xf32>
    %30 = vector.extract_strided_slice %13 {offsets = [0, 0], sizes = [8, 32], strides = [1, 1]} : vector<16x32xf32> to vector<8x32xf32>
    %31 = vector.extract_strided_slice %30 {offsets = [0, 0], sizes = [8, 16], strides = [1, 1]} : vector<8x32xf32> to vector<8x16xf32>
    %32 = vector.extract_strided_slice %30 {offsets = [0, 16], sizes = [8, 16], strides = [1, 1]} : vector<8x32xf32> to vector<8x16xf32>
    %33 = vector.shape_cast %31 : vector<8x16xf32> to vector<1x8x16xf32>
    %34 = vector.shape_cast %32 : vector<8x16xf32> to vector<1x8x16xf32>
    %35 = tpu.concatenate %33, %34 in 0 : vector<1x8x16xf32>, vector<1x8x16xf32> -> vector<2x8x16xf32>
    "tpu.trace_start"() <{level = 10 : i32, message = "hqd,hkd->hqk"}> : () -> ()
    %cst_23 = arith.constant dense<0.000000e+00> : vector<2x8x8xf32>
    %36 = tpu.matmul %23, %29, %cst_23 {dimension_numbers = #tpu.dot_dimension_numbers<[2], [2], [1], [1], [0, 0, 0, 1, 1, 1], [0], [0]>} : vector<2x8x16xf32>, vector<2x8x16xf32>, vector<2x8x8xf32> -> vector<2x8x8xf32>
    "tpu.trace_stop"() : () -> ()
    %37 = vector.extract_strided_slice %4 {offsets = [0, 0, 0], sizes = [1, 8, 8], strides = [1, 1, 1]} : vector<2x8x8xf32> to vector<1x8x8xf32>
    %38 = vector.shape_cast %37 : vector<1x8x8xf32> to vector<8x8xf32>
    %39 = vector.shape_cast %38 : vector<8x8xf32> to vector<1x8x8xf32>
    %cst_24 = arith.constant 5.000000e-01 : f32
    %40 = vector.broadcast %cst_24 : f32 to vector<1x8x8xf32>
    %41 = arith.cmpf ogt, %39, %40 : vector<1x8x8xf32>
    %cst_25 = arith.constant -1.000000e+30 : f32
    %42 = vector.shape_cast %41 : vector<1x8x8xi1> to vector<1x8x8xi1>
    %43 = vector.broadcast %42 : vector<1x8x8xi1> to vector<2x8x8xi1>
    %44 = vector.broadcast %cst_25 : f32 to vector<2x8x8xf32>
    %45 = arith.select %43, %44, %36 : vector<2x8x8xi1>, vector<2x8x8xf32>
    %cst_26 = arith.constant dense<0xFF800000> : vector<2x8xf32>
    %46 = vector.multi_reduction <maximumf>, %45, %cst_26 [2] : vector<2x8x8xf32> to vector<2x8xf32>
    %47 = vector.shape_cast %46 : vector<2x8xf32> to vector<2x8x1xf32>
    %48 = vector.broadcast %47 : vector<2x8x1xf32> to vector<2x8x8xf32>
    %49 = arith.subf %45, %48 : vector<2x8x8xf32>
    %50 = math.exp %49 : vector<2x8x8xf32>
    %cst_27 = arith.constant dense<0.000000e+00> : vector<2x8xf32>
    %51 = vector.multi_reduction <add>, %50, %cst_27 [2] : vector<2x8x8xf32> to vector<2x8xf32>
    %52 = vector.shape_cast %51 : vector<2x8xf32> to vector<2x8x1xf32>
    %53 = tpu.reciprocal %52 : vector<2x8x1xf32> -> vector<2x8x1xf32>
    %54 = vector.broadcast %53 : vector<2x8x1xf32> to vector<2x8x8xf32>
    %55 = arith.mulf %50, %54 : vector<2x8x8xf32>
    "tpu.trace_start"() <{level = 10 : i32, message = "hqk,hkd->hqd"}> : () -> ()
    %cst_28 = arith.constant dense<0.000000e+00> : vector<2x8x16xf32>
    %56 = tpu.matmul %55, %35, %cst_28 {dimension_numbers = #tpu.dot_dimension_numbers<[2], [1], [1], [2], [0, 0, 0, 1, 1, 2], [0], [0]>} : vector<2x8x8xf32>, vector<2x8x16xf32>, vector<2x8x16xf32> -> vector<2x8x16xf32>
    "tpu.trace_stop"() : () -> ()
    %57 = vector.extract_strided_slice %56 {offsets = [0, 0, 0], sizes = [1, 8, 16], strides = [1, 1, 1]} : vector<2x8x16xf32> to vector<1x8x16xf32>
    %58 = vector.shape_cast %57 : vector<1x8x16xf32> to vector<8x16xf32>
    %59 = vector.extract_strided_slice %56 {offsets = [1, 0, 0], sizes = [1, 8, 16], strides = [1, 1, 1]} : vector<2x8x16xf32> to vector<1x8x16xf32>
    %60 = vector.shape_cast %59 : vector<1x8x16xf32> to vector<8x16xf32>
    %61 = tpu.concatenate %58, %60 in 1 : vector<8x16xf32>, vector<8x16xf32> -> vector<8x32xf32>
    %62 = vector.extract_strided_slice %11 {offsets = [8, 0], sizes = [8, 32], strides = [1, 1]} : vector<16x32xf32> to vector<8x32xf32>
    %63 = vector.extract_strided_slice %62 {offsets = [0, 0], sizes = [8, 16], strides = [1, 1]} : vector<8x32xf32> to vector<8x16xf32>
    %64 = vector.extract_strided_slice %62 {offsets = [0, 16], sizes = [8, 16], strides = [1, 1]} : vector<8x32xf32> to vector<8x16xf32>
    %65 = vector.shape_cast %63 : vector<8x16xf32> to vector<1x8x16xf32>
    %66 = vector.shape_cast %64 : vector<8x16xf32> to vector<1x8x16xf32>
    %67 = tpu.concatenate %65, %66 in 0 : vector<1x8x16xf32>, vector<1x8x16xf32> -> vector<2x8x16xf32>
    %68 = vector.extract_strided_slice %12 {offsets = [8, 0], sizes = [8, 32], strides = [1, 1]} : vector<16x32xf32> to vector<8x32xf32>
    %69 = vector.extract_strided_slice %68 {offsets = [0, 0], sizes = [8, 16], strides = [1, 1]} : vector<8x32xf32> to vector<8x16xf32>
    %70 = vector.extract_strided_slice %68 {offsets = [0, 16], sizes = [8, 16], strides = [1, 1]} : vector<8x32xf32> to vector<8x16xf32>
    %71 = vector.shape_cast %69 : vector<8x16xf32> to vector<1x8x16xf32>
    %72 = vector.shape_cast %70 : vector<8x16xf32> to vector<1x8x16xf32>
    %73 = tpu.concatenate %71, %72 in 0 : vector<1x8x16xf32>, vector<1x8x16xf32> -> vector<2x8x16xf32>
    %74 = vector.extract_strided_slice %13 {offsets = [8, 0], sizes = [8, 32], strides = [1, 1]} : vector<16x32xf32> to vector<8x32xf32>
    %75 = vector.extract_strided_slice %74 {offsets = [0, 0], sizes = [8, 16], strides = [1, 1]} : vector<8x32xf32> to vector<8x16xf32>
    %76 = vector.extract_strided_slice %74 {offsets = [0, 16], sizes = [8, 16], strides = [1, 1]} : vector<8x32xf32> to vector<8x16xf32>
    %77 = vector.shape_cast %75 : vector<8x16xf32> to vector<1x8x16xf32>
    %78 = vector.shape_cast %76 : vector<8x16xf32> to vector<1x8x16xf32>
    %79 = tpu.concatenate %77, %78 in 0 : vector<1x8x16xf32>, vector<1x8x16xf32> -> vector<2x8x16xf32>
    "tpu.trace_start"() <{level = 10 : i32, message = "hqd,hkd->hqk"}> : () -> ()
    %cst_29 = arith.constant dense<0.000000e+00> : vector<2x8x8xf32>
    %80 = tpu.matmul %67, %73, %cst_29 {dimension_numbers = #tpu.dot_dimension_numbers<[2], [2], [1], [1], [0, 0, 0, 1, 1, 1], [0], [0]>} : vector<2x8x16xf32>, vector<2x8x16xf32>, vector<2x8x8xf32> -> vector<2x8x8xf32>
    "tpu.trace_stop"() : () -> ()
    %81 = vector.extract_strided_slice %4 {offsets = [1, 0, 0], sizes = [1, 8, 8], strides = [1, 1, 1]} : vector<2x8x8xf32> to vector<1x8x8xf32>
    %82 = vector.shape_cast %81 : vector<1x8x8xf32> to vector<8x8xf32>
    %83 = vector.shape_cast %82 : vector<8x8xf32> to vector<1x8x8xf32>
    %cst_30 = arith.constant 5.000000e-01 : f32
    %84 = vector.broadcast %cst_30 : f32 to vector<1x8x8xf32>
    %85 = arith.cmpf ogt, %83, %84 : vector<1x8x8xf32>
    %cst_31 = arith.constant -1.000000e+30 : f32
    %86 = vector.shape_cast %85 : vector<1x8x8xi1> to vector<1x8x8xi1>
    %87 = vector.broadcast %86 : vector<1x8x8xi1> to vector<2x8x8xi1>
    %88 = vector.broadcast %cst_31 : f32 to vector<2x8x8xf32>
    %89 = arith.select %87, %88, %80 : vector<2x8x8xi1>, vector<2x8x8xf32>
    %cst_32 = arith.constant dense<0xFF800000> : vector<2x8xf32>
    %90 = vector.multi_reduction <maximumf>, %89, %cst_32 [2] : vector<2x8x8xf32> to vector<2x8xf32>
    %91 = vector.shape_cast %90 : vector<2x8xf32> to vector<2x8x1xf32>
    %92 = vector.broadcast %91 : vector<2x8x1xf32> to vector<2x8x8xf32>
    %93 = arith.subf %89, %92 : vector<2x8x8xf32>
    %94 = math.exp %93 : vector<2x8x8xf32>
    %cst_33 = arith.constant dense<0.000000e+00> : vector<2x8xf32>
    %95 = vector.multi_reduction <add>, %94, %cst_33 [2] : vector<2x8x8xf32> to vector<2x8xf32>
    %96 = vector.shape_cast %95 : vector<2x8xf32> to vector<2x8x1xf32>
    %97 = tpu.reciprocal %96 : vector<2x8x1xf32> -> vector<2x8x1xf32>
    %98 = vector.broadcast %97 : vector<2x8x1xf32> to vector<2x8x8xf32>
    %99 = arith.mulf %94, %98 : vector<2x8x8xf32>
    "tpu.trace_start"() <{level = 10 : i32, message = "hqk,hkd->hqd"}> : () -> ()
    %cst_34 = arith.constant dense<0.000000e+00> : vector<2x8x16xf32>
    %100 = tpu.matmul %99, %79, %cst_34 {dimension_numbers = #tpu.dot_dimension_numbers<[2], [1], [1], [2], [0, 0, 0, 1, 1, 2], [0], [0]>} : vector<2x8x8xf32>, vector<2x8x16xf32>, vector<2x8x16xf32> -> vector<2x8x16xf32>
    "tpu.trace_stop"() : () -> ()
    %101 = vector.extract_strided_slice %100 {offsets = [0, 0, 0], sizes = [1, 8, 16], strides = [1, 1, 1]} : vector<2x8x16xf32> to vector<1x8x16xf32>
    %102 = vector.shape_cast %101 : vector<1x8x16xf32> to vector<8x16xf32>
    %103 = vector.extract_strided_slice %100 {offsets = [1, 0, 0], sizes = [1, 8, 16], strides = [1, 1, 1]} : vector<2x8x16xf32> to vector<1x8x16xf32>
    %104 = vector.shape_cast %103 : vector<1x8x16xf32> to vector<8x16xf32>
    %105 = tpu.concatenate %102, %104 in 1 : vector<8x16xf32>, vector<8x16xf32> -> vector<8x32xf32>
    %106 = tpu.concatenate %61, %105 in 0 : vector<8x32xf32>, vector<8x32xf32> -> vector<16x32xf32>
    %cst_35 = arith.constant dense<0.000000e+00> : vector<16x32xf32>
    %107 = tpu.matmul %106, %14, %cst_35 {dimension_numbers = #tpu.dot_dimension_numbers<[1], [0], [0], [1], [0, 0, 1, 1], [], []>} : vector<16x32xf32>, vector<32x32xf32>, vector<16x32xf32> -> vector<16x32xf32>
    %108 = vector.broadcast %15 : vector<1x32xf32> to vector<16x32xf32>
    %109 = arith.addf %107, %108 : vector<16x32xf32>
    %110 = arith.addf %1, %109 : vector<16x32xf32>
    %cst_36 = arith.constant dense<0.000000e+00> : vector<16xf32>
    %111 = vector.multi_reduction <add>, %110, %cst_36 [1] : vector<16x32xf32> to vector<16xf32>
    %112 = vector.shape_cast %111 : vector<16xf32> to vector<16x1xf32>
    %cst_37 = arith.constant 3.200000e+01 : f32
    %113 = vector.broadcast %cst_37 : f32 to vector<16x1xf32>
    %114 = arith.divf %112, %113 : vector<16x1xf32>
    %115 = vector.broadcast %114 : vector<16x1xf32> to vector<16x32xf32>
    %116 = arith.subf %110, %115 : vector<16x32xf32>
    %117 = arith.mulf %116, %116 : vector<16x32xf32>
    %cst_38 = arith.constant dense<0.000000e+00> : vector<16xf32>
    %118 = vector.multi_reduction <add>, %117, %cst_38 [1] : vector<16x32xf32> to vector<16xf32>
    %119 = vector.shape_cast %118 : vector<16xf32> to vector<16x1xf32>
    %cst_39 = arith.constant 3.200000e+01 : f32
    %120 = vector.broadcast %cst_39 : f32 to vector<16x1xf32>
    %121 = arith.divf %119, %120 : vector<16x1xf32>
    %122 = vector.broadcast %114 : vector<16x1xf32> to vector<16x32xf32>
    %123 = arith.subf %110, %122 : vector<16x32xf32>
    %cst_40 = arith.constant 9.99999997E-7 : f32
    %124 = vector.broadcast %cst_40 : f32 to vector<16x1xf32>
    %125 = arith.addf %121, %124 : vector<16x1xf32>
    %126 = math.rsqrt %125 : vector<16x1xf32>
    %127 = vector.broadcast %126 : vector<16x1xf32> to vector<16x32xf32>
    %128 = arith.mulf %123, %127 : vector<16x32xf32>
    %129 = vector.broadcast %16 : vector<1x32xf32> to vector<16x32xf32>
    %130 = arith.mulf %128, %129 : vector<16x32xf32>
    %131 = vector.broadcast %17 : vector<1x32xf32> to vector<16x32xf32>
    %132 = arith.addf %130, %131 : vector<16x32xf32>
    %c0_41 = arith.constant 0 : index
    %c0_42 = arith.constant 0 : index
    %133 = vector.load %arg11[%c0_41, %c0_42] : memref<32x32xf32, #tpu.memory_space<vmem>>, vector<32x32xf32>
    %cst_43 = arith.constant dense<0.000000e+00> : vector<16x32xf32>
    %134 = tpu.matmul %132, %133, %cst_43 {dimension_numbers = #tpu.dot_dimension_numbers<[1], [0], [0], [1], [0, 0, 1, 1], [], []>} : vector<16x32xf32>, vector<32x32xf32>, vector<16x32xf32> -> vector<16x32xf32>
    %c0_44 = arith.constant 0 : index
    %c0_45 = arith.constant 0 : index
    %135 = vector.load %arg12[%c0_44, %c0_45] : memref<1x32xf32, #tpu.memory_space<vmem>>, vector<1x32xf32>
    %136 = vector.broadcast %135 : vector<1x32xf32> to vector<16x32xf32>
    %137 = arith.addf %134, %136 : vector<16x32xf32>
    %c0_46 = arith.constant 0 : index
    %c0_47 = arith.constant 0 : index
    %138 = vector.load %arg13[%c0_46, %c0_47] : memref<32x64xf32, #tpu.memory_space<vmem>>, vector<32x64xf32>
    %cst_48 = arith.constant dense<0.000000e+00> : vector<16x64xf32>
    %139 = tpu.matmul %3, %138, %cst_48 {dimension_numbers = #tpu.dot_dimension_numbers<[1], [0], [0], [1], [0, 0, 1, 1], [], []>} : vector<16x32xf32>, vector<32x64xf32>, vector<16x64xf32> -> vector<16x64xf32>
    %c0_49 = arith.constant 0 : index
    %c0_50 = arith.constant 0 : index
    %140 = vector.load %arg14[%c0_49, %c0_50] : memref<1x64xf32, #tpu.memory_space<vmem>>, vector<1x64xf32>
    %141 = vector.broadcast %140 : vector<1x64xf32> to vector<16x64xf32>
    %142 = arith.addf %139, %141 : vector<16x64xf32>
    %143 = vector.extract_strided_slice %142 {offsets = [0, 0], sizes = [16, 32], strides = [1, 1]} : vector<16x64xf32> to vector<16x32xf32>
    %144 = vector.extract_strided_slice %142 {offsets = [0, 32], sizes = [16, 32], strides = [1, 1]} : vector<16x64xf32> to vector<16x32xf32>
    %c0_51 = arith.constant 0 : index
    %c0_52 = arith.constant 0 : index
    %145 = vector.load %arg15[%c0_51, %c0_52] : memref<32x32xf32, #tpu.memory_space<vmem>>, vector<32x32xf32>
    %c0_53 = arith.constant 0 : index
    %c0_54 = arith.constant 0 : index
    %146 = vector.load %arg16[%c0_53, %c0_54] : memref<1x32xf32, #tpu.memory_space<vmem>>, vector<1x32xf32>
    %c0_55 = arith.constant 0 : index
    %c0_56 = arith.constant 0 : index
    %147 = vector.load %arg17[%c0_55, %c0_56] : memref<1x32xf32, #tpu.memory_space<vmem>>, vector<1x32xf32>
    %c0_57 = arith.constant 0 : index
    %c0_58 = arith.constant 0 : index
    %148 = vector.load %arg18[%c0_57, %c0_58] : memref<1x32xf32, #tpu.memory_space<vmem>>, vector<1x32xf32>
    %149 = vector.extract_strided_slice %137 {offsets = [0, 0], sizes = [8, 32], strides = [1, 1]} : vector<16x32xf32> to vector<8x32xf32>
    %150 = vector.extract_strided_slice %149 {offsets = [0, 0], sizes = [8, 16], strides = [1, 1]} : vector<8x32xf32> to vector<8x16xf32>
    %151 = vector.extract_strided_slice %149 {offsets = [0, 16], sizes = [8, 16], strides = [1, 1]} : vector<8x32xf32> to vector<8x16xf32>
    %152 = vector.shape_cast %150 : vector<8x16xf32> to vector<1x8x16xf32>
    %153 = vector.shape_cast %151 : vector<8x16xf32> to vector<1x8x16xf32>
    %154 = tpu.concatenate %152, %153 in 0 : vector<1x8x16xf32>, vector<1x8x16xf32> -> vector<2x8x16xf32>
    %155 = vector.extract_strided_slice %143 {offsets = [0, 0], sizes = [8, 32], strides = [1, 1]} : vector<16x32xf32> to vector<8x32xf32>
    %156 = vector.extract_strided_slice %155 {offsets = [0, 0], sizes = [8, 16], strides = [1, 1]} : vector<8x32xf32> to vector<8x16xf32>
    %157 = vector.extract_strided_slice %155 {offsets = [0, 16], sizes = [8, 16], strides = [1, 1]} : vector<8x32xf32> to vector<8x16xf32>
    %158 = vector.shape_cast %156 : vector<8x16xf32> to vector<1x8x16xf32>
    %159 = vector.shape_cast %157 : vector<8x16xf32> to vector<1x8x16xf32>
    %160 = tpu.concatenate %158, %159 in 0 : vector<1x8x16xf32>, vector<1x8x16xf32> -> vector<2x8x16xf32>
    %161 = vector.extract_strided_slice %144 {offsets = [0, 0], sizes = [8, 32], strides = [1, 1]} : vector<16x32xf32> to vector<8x32xf32>
    %162 = vector.extract_strided_slice %161 {offsets = [0, 0], sizes = [8, 16], strides = [1, 1]} : vector<8x32xf32> to vector<8x16xf32>
    %163 = vector.extract_strided_slice %161 {offsets = [0, 16], sizes = [8, 16], strides = [1, 1]} : vector<8x32xf32> to vector<8x16xf32>
    %164 = vector.shape_cast %162 : vector<8x16xf32> to vector<1x8x16xf32>
    %165 = vector.shape_cast %163 : vector<8x16xf32> to vector<1x8x16xf32>
    %166 = tpu.concatenate %164, %165 in 0 : vector<1x8x16xf32>, vector<1x8x16xf32> -> vector<2x8x16xf32>
    "tpu.trace_start"() <{level = 10 : i32, message = "hqd,hkd->hqk"}> : () -> ()
    %cst_59 = arith.constant dense<0.000000e+00> : vector<2x8x8xf32>
    %167 = tpu.matmul %154, %160, %cst_59 {dimension_numbers = #tpu.dot_dimension_numbers<[2], [2], [1], [1], [0, 0, 0, 1, 1, 1], [0], [0]>} : vector<2x8x16xf32>, vector<2x8x16xf32>, vector<2x8x8xf32> -> vector<2x8x8xf32>
    "tpu.trace_stop"() : () -> ()
    %168 = vector.extract_strided_slice %5 {offsets = [0, 0, 0], sizes = [1, 8, 8], strides = [1, 1, 1]} : vector<2x8x8xf32> to vector<1x8x8xf32>
    %169 = vector.shape_cast %168 : vector<1x8x8xf32> to vector<8x8xf32>
    %170 = vector.shape_cast %169 : vector<8x8xf32> to vector<1x8x8xf32>
    %cst_60 = arith.constant 5.000000e-01 : f32
    %171 = vector.broadcast %cst_60 : f32 to vector<1x8x8xf32>
    %172 = arith.cmpf ogt, %170, %171 : vector<1x8x8xf32>
    %cst_61 = arith.constant -1.000000e+30 : f32
    %173 = vector.shape_cast %172 : vector<1x8x8xi1> to vector<1x8x8xi1>
    %174 = vector.broadcast %173 : vector<1x8x8xi1> to vector<2x8x8xi1>
    %175 = vector.broadcast %cst_61 : f32 to vector<2x8x8xf32>
    %176 = arith.select %174, %175, %167 : vector<2x8x8xi1>, vector<2x8x8xf32>
    %cst_62 = arith.constant dense<0xFF800000> : vector<2x8xf32>
    %177 = vector.multi_reduction <maximumf>, %176, %cst_62 [2] : vector<2x8x8xf32> to vector<2x8xf32>
    %178 = vector.shape_cast %177 : vector<2x8xf32> to vector<2x8x1xf32>
    %179 = vector.broadcast %178 : vector<2x8x1xf32> to vector<2x8x8xf32>
    %180 = arith.subf %176, %179 : vector<2x8x8xf32>
    %181 = math.exp %180 : vector<2x8x8xf32>
    %cst_63 = arith.constant dense<0.000000e+00> : vector<2x8xf32>
    %182 = vector.multi_reduction <add>, %181, %cst_63 [2] : vector<2x8x8xf32> to vector<2x8xf32>
    %183 = vector.shape_cast %182 : vector<2x8xf32> to vector<2x8x1xf32>
    %184 = tpu.reciprocal %183 : vector<2x8x1xf32> -> vector<2x8x1xf32>
    %185 = vector.broadcast %184 : vector<2x8x1xf32> to vector<2x8x8xf32>
    %186 = arith.mulf %181, %185 : vector<2x8x8xf32>
    "tpu.trace_start"() <{level = 10 : i32, message = "hqk,hkd->hqd"}> : () -> ()
    %cst_64 = arith.constant dense<0.000000e+00> : vector<2x8x16xf32>
    %187 = tpu.matmul %186, %166, %cst_64 {dimension_numbers = #tpu.dot_dimension_numbers<[2], [1], [1], [2], [0, 0, 0, 1, 1, 2], [0], [0]>} : vector<2x8x8xf32>, vector<2x8x16xf32>, vector<2x8x16xf32> -> vector<2x8x16xf32>
    "tpu.trace_stop"() : () -> ()
    %188 = vector.extract_strided_slice %187 {offsets = [0, 0, 0], sizes = [1, 8, 16], strides = [1, 1, 1]} : vector<2x8x16xf32> to vector<1x8x16xf32>
    %189 = vector.shape_cast %188 : vector<1x8x16xf32> to vector<8x16xf32>
    %190 = vector.extract_strided_slice %187 {offsets = [1, 0, 0], sizes = [1, 8, 16], strides = [1, 1, 1]} : vector<2x8x16xf32> to vector<1x8x16xf32>
    %191 = vector.shape_cast %190 : vector<1x8x16xf32> to vector<8x16xf32>
    %192 = tpu.concatenate %189, %191 in 1 : vector<8x16xf32>, vector<8x16xf32> -> vector<8x32xf32>
    %193 = vector.extract_strided_slice %137 {offsets = [8, 0], sizes = [8, 32], strides = [1, 1]} : vector<16x32xf32> to vector<8x32xf32>
    %194 = vector.extract_strided_slice %193 {offsets = [0, 0], sizes = [8, 16], strides = [1, 1]} : vector<8x32xf32> to vector<8x16xf32>
    %195 = vector.extract_strided_slice %193 {offsets = [0, 16], sizes = [8, 16], strides = [1, 1]} : vector<8x32xf32> to vector<8x16xf32>
    %196 = vector.shape_cast %194 : vector<8x16xf32> to vector<1x8x16xf32>
    %197 = vector.shape_cast %195 : vector<8x16xf32> to vector<1x8x16xf32>
    %198 = tpu.concatenate %196, %197 in 0 : vector<1x8x16xf32>, vector<1x8x16xf32> -> vector<2x8x16xf32>
    %199 = vector.extract_strided_slice %143 {offsets = [8, 0], sizes = [8, 32], strides = [1, 1]} : vector<16x32xf32> to vector<8x32xf32>
    %200 = vector.extract_strided_slice %199 {offsets = [0, 0], sizes = [8, 16], strides = [1, 1]} : vector<8x32xf32> to vector<8x16xf32>
    %201 = vector.extract_strided_slice %199 {offsets = [0, 16], sizes = [8, 16], strides = [1, 1]} : vector<8x32xf32> to vector<8x16xf32>
    %202 = vector.shape_cast %200 : vector<8x16xf32> to vector<1x8x16xf32>
    %203 = vector.shape_cast %201 : vector<8x16xf32> to vector<1x8x16xf32>
    %204 = tpu.concatenate %202, %203 in 0 : vector<1x8x16xf32>, vector<1x8x16xf32> -> vector<2x8x16xf32>
    %205 = vector.extract_strided_slice %144 {offsets = [8, 0], sizes = [8, 32], strides = [1, 1]} : vector<16x32xf32> to vector<8x32xf32>
    %206 = vector.extract_strided_slice %205 {offsets = [0, 0], sizes = [8, 16], strides = [1, 1]} : vector<8x32xf32> to vector<8x16xf32>
    %207 = vector.extract_strided_slice %205 {offsets = [0, 16], sizes = [8, 16], strides = [1, 1]} : vector<8x32xf32> to vector<8x16xf32>
    %208 = vector.shape_cast %206 : vector<8x16xf32> to vector<1x8x16xf32>
    %209 = vector.shape_cast %207 : vector<8x16xf32> to vector<1x8x16xf32>
    %210 = tpu.concatenate %208, %209 in 0 : vector<1x8x16xf32>, vector<1x8x16xf32> -> vector<2x8x16xf32>
    "tpu.trace_start"() <{level = 10 : i32, message = "hqd,hkd->hqk"}> : () -> ()
    %cst_65 = arith.constant dense<0.000000e+00> : vector<2x8x8xf32>
    %211 = tpu.matmul %198, %204, %cst_65 {dimension_numbers = #tpu.dot_dimension_numbers<[2], [2], [1], [1], [0, 0, 0, 1, 1, 1], [0], [0]>} : vector<2x8x16xf32>, vector<2x8x16xf32>, vector<2x8x8xf32> -> vector<2x8x8xf32>
    "tpu.trace_stop"() : () -> ()
    %212 = vector.extract_strided_slice %5 {offsets = [1, 0, 0], sizes = [1, 8, 8], strides = [1, 1, 1]} : vector<2x8x8xf32> to vector<1x8x8xf32>
    %213 = vector.shape_cast %212 : vector<1x8x8xf32> to vector<8x8xf32>
    %214 = vector.shape_cast %213 : vector<8x8xf32> to vector<1x8x8xf32>
    %cst_66 = arith.constant 5.000000e-01 : f32
    %215 = vector.broadcast %cst_66 : f32 to vector<1x8x8xf32>
    %216 = arith.cmpf ogt, %214, %215 : vector<1x8x8xf32>
    %cst_67 = arith.constant -1.000000e+30 : f32
    %217 = vector.shape_cast %216 : vector<1x8x8xi1> to vector<1x8x8xi1>
    %218 = vector.broadcast %217 : vector<1x8x8xi1> to vector<2x8x8xi1>
    %219 = vector.broadcast %cst_67 : f32 to vector<2x8x8xf32>
    %220 = arith.select %218, %219, %211 : vector<2x8x8xi1>, vector<2x8x8xf32>
    %cst_68 = arith.constant dense<0xFF800000> : vector<2x8xf32>
    %221 = vector.multi_reduction <maximumf>, %220, %cst_68 [2] : vector<2x8x8xf32> to vector<2x8xf32>
    %222 = vector.shape_cast %221 : vector<2x8xf32> to vector<2x8x1xf32>
    %223 = vector.broadcast %222 : vector<2x8x1xf32> to vector<2x8x8xf32>
    %224 = arith.subf %220, %223 : vector<2x8x8xf32>
    %225 = math.exp %224 : vector<2x8x8xf32>
    %cst_69 = arith.constant dense<0.000000e+00> : vector<2x8xf32>
    %226 = vector.multi_reduction <add>, %225, %cst_69 [2] : vector<2x8x8xf32> to vector<2x8xf32>
    %227 = vector.shape_cast %226 : vector<2x8xf32> to vector<2x8x1xf32>
    %228 = tpu.reciprocal %227 : vector<2x8x1xf32> -> vector<2x8x1xf32>
    %229 = vector.broadcast %228 : vector<2x8x1xf32> to vector<2x8x8xf32>
    %230 = arith.mulf %225, %229 : vector<2x8x8xf32>
    "tpu.trace_start"() <{level = 10 : i32, message = "hqk,hkd->hqd"}> : () -> ()
    %cst_70 = arith.constant dense<0.000000e+00> : vector<2x8x16xf32>
    %231 = tpu.matmul %230, %210, %cst_70 {dimension_numbers = #tpu.dot_dimension_numbers<[2], [1], [1], [2], [0, 0, 0, 1, 1, 2], [0], [0]>} : vector<2x8x8xf32>, vector<2x8x16xf32>, vector<2x8x16xf32> -> vector<2x8x16xf32>
    "tpu.trace_stop"() : () -> ()
    %232 = vector.extract_strided_slice %231 {offsets = [0, 0, 0], sizes = [1, 8, 16], strides = [1, 1, 1]} : vector<2x8x16xf32> to vector<1x8x16xf32>
    %233 = vector.shape_cast %232 : vector<1x8x16xf32> to vector<8x16xf32>
    %234 = vector.extract_strided_slice %231 {offsets = [1, 0, 0], sizes = [1, 8, 16], strides = [1, 1, 1]} : vector<2x8x16xf32> to vector<1x8x16xf32>
    %235 = vector.shape_cast %234 : vector<1x8x16xf32> to vector<8x16xf32>
    %236 = tpu.concatenate %233, %235 in 1 : vector<8x16xf32>, vector<8x16xf32> -> vector<8x32xf32>
    %237 = tpu.concatenate %192, %236 in 0 : vector<8x32xf32>, vector<8x32xf32> -> vector<16x32xf32>
    %cst_71 = arith.constant dense<0.000000e+00> : vector<16x32xf32>
    %238 = tpu.matmul %237, %145, %cst_71 {dimension_numbers = #tpu.dot_dimension_numbers<[1], [0], [0], [1], [0, 0, 1, 1], [], []>} : vector<16x32xf32>, vector<32x32xf32>, vector<16x32xf32> -> vector<16x32xf32>
    %239 = vector.broadcast %146 : vector<1x32xf32> to vector<16x32xf32>
    %240 = arith.addf %238, %239 : vector<16x32xf32>
    %241 = arith.addf %132, %240 : vector<16x32xf32>
    %cst_72 = arith.constant dense<0.000000e+00> : vector<16xf32>
    %242 = vector.multi_reduction <add>, %241, %cst_72 [1] : vector<16x32xf32> to vector<16xf32>
    %243 = vector.shape_cast %242 : vector<16xf32> to vector<16x1xf32>
    %cst_73 = arith.constant 3.200000e+01 : f32
    %244 = vector.broadcast %cst_73 : f32 to vector<16x1xf32>
    %245 = arith.divf %243, %244 : vector<16x1xf32>
    %246 = vector.broadcast %245 : vector<16x1xf32> to vector<16x32xf32>
    %247 = arith.subf %241, %246 : vector<16x32xf32>
    %248 = arith.mulf %247, %247 : vector<16x32xf32>
    %cst_74 = arith.constant dense<0.000000e+00> : vector<16xf32>
    %249 = vector.multi_reduction <add>, %248, %cst_74 [1] : vector<16x32xf32> to vector<16xf32>
    %250 = vector.shape_cast %249 : vector<16xf32> to vector<16x1xf32>
    %cst_75 = arith.constant 3.200000e+01 : f32
    %251 = vector.broadcast %cst_75 : f32 to vector<16x1xf32>
    %252 = arith.divf %250, %251 : vector<16x1xf32>
    %253 = vector.broadcast %245 : vector<16x1xf32> to vector<16x32xf32>
    %254 = arith.subf %241, %253 : vector<16x32xf32>
    %cst_76 = arith.constant 9.99999997E-7 : f32
    %255 = vector.broadcast %cst_76 : f32 to vector<16x1xf32>
    %256 = arith.addf %252, %255 : vector<16x1xf32>
    %257 = math.rsqrt %256 : vector<16x1xf32>
    %258 = vector.broadcast %257 : vector<16x1xf32> to vector<16x32xf32>
    %259 = arith.mulf %254, %258 : vector<16x32xf32>
    %260 = vector.broadcast %147 : vector<1x32xf32> to vector<16x32xf32>
    %261 = arith.mulf %259, %260 : vector<16x32xf32>
    %262 = vector.broadcast %148 : vector<1x32xf32> to vector<16x32xf32>
    %263 = arith.addf %261, %262 : vector<16x32xf32>
    %c0_77 = arith.constant 0 : index
    %c0_78 = arith.constant 0 : index
    %264 = vector.load %arg19[%c0_77, %c0_78] : memref<32x64xf32, #tpu.memory_space<vmem>>, vector<32x64xf32>
    %cst_79 = arith.constant dense<0.000000e+00> : vector<16x64xf32>
    %265 = tpu.matmul %263, %264, %cst_79 {dimension_numbers = #tpu.dot_dimension_numbers<[1], [0], [0], [1], [0, 0, 1, 1], [], []>} : vector<16x32xf32>, vector<32x64xf32>, vector<16x64xf32> -> vector<16x64xf32>
    %c0_80 = arith.constant 0 : index
    %c0_81 = arith.constant 0 : index
    %266 = vector.load %arg20[%c0_80, %c0_81] : memref<1x64xf32, #tpu.memory_space<vmem>>, vector<1x64xf32>
    %267 = vector.broadcast %266 : vector<1x64xf32> to vector<16x64xf32>
    %268 = arith.addf %265, %267 : vector<16x64xf32>
    %cst_82 = arith.constant 0.000000e+00 : f32
    %269 = vector.broadcast %cst_82 : f32 to vector<16x64xf32>
    %270 = arith.maximumf %268, %269 : vector<16x64xf32>
    %c0_83 = arith.constant 0 : index
    %c0_84 = arith.constant 0 : index
    %271 = vector.load %arg21[%c0_83, %c0_84] : memref<64x32xf32, #tpu.memory_space<vmem>>, vector<64x32xf32>
    %cst_85 = arith.constant dense<0.000000e+00> : vector<16x32xf32>
    %272 = tpu.matmul %270, %271, %cst_85 {dimension_numbers = #tpu.dot_dimension_numbers<[1], [0], [0], [1], [0, 0, 1, 1], [], []>} : vector<16x64xf32>, vector<64x32xf32>, vector<16x32xf32> -> vector<16x32xf32>
    %c0_86 = arith.constant 0 : index
    %c0_87 = arith.constant 0 : index
    %273 = vector.load %arg22[%c0_86, %c0_87] : memref<1x32xf32, #tpu.memory_space<vmem>>, vector<1x32xf32>
    %274 = vector.broadcast %273 : vector<1x32xf32> to vector<16x32xf32>
    %275 = arith.addf %272, %274 : vector<16x32xf32>
    %cst_88 = arith.constant 0.000000e+00 : f32
    %276 = vector.broadcast %cst_88 : f32 to vector<16x32xf32>
    %277 = arith.maximumf %275, %276 : vector<16x32xf32>
    %278 = arith.addf %277, %263 : vector<16x32xf32>
    %c0_89 = arith.constant 0 : index
    %c0_90 = arith.constant 0 : index
    %279 = vector.load %arg23[%c0_89, %c0_90] : memref<1x32xf32, #tpu.memory_space<vmem>>, vector<1x32xf32>
    %c0_91 = arith.constant 0 : index
    %c0_92 = arith.constant 0 : index
    %280 = vector.load %arg24[%c0_91, %c0_92] : memref<1x32xf32, #tpu.memory_space<vmem>>, vector<1x32xf32>
    %cst_93 = arith.constant dense<0.000000e+00> : vector<16xf32>
    %281 = vector.multi_reduction <add>, %278, %cst_93 [1] : vector<16x32xf32> to vector<16xf32>
    %282 = vector.shape_cast %281 : vector<16xf32> to vector<16x1xf32>
    %cst_94 = arith.constant 3.200000e+01 : f32
    %283 = vector.broadcast %cst_94 : f32 to vector<16x1xf32>
    %284 = arith.divf %282, %283 : vector<16x1xf32>
    %285 = vector.broadcast %284 : vector<16x1xf32> to vector<16x32xf32>
    %286 = arith.subf %278, %285 : vector<16x32xf32>
    %287 = arith.mulf %286, %286 : vector<16x32xf32>
    %cst_95 = arith.constant dense<0.000000e+00> : vector<16xf32>
    %288 = vector.multi_reduction <add>, %287, %cst_95 [1] : vector<16x32xf32> to vector<16xf32>
    %289 = vector.shape_cast %288 : vector<16xf32> to vector<16x1xf32>
    %cst_96 = arith.constant 3.200000e+01 : f32
    %290 = vector.broadcast %cst_96 : f32 to vector<16x1xf32>
    %291 = arith.divf %289, %290 : vector<16x1xf32>
    %292 = vector.broadcast %284 : vector<16x1xf32> to vector<16x32xf32>
    %293 = arith.subf %278, %292 : vector<16x32xf32>
    %cst_97 = arith.constant 9.99999997E-7 : f32
    %294 = vector.broadcast %cst_97 : f32 to vector<16x1xf32>
    %295 = arith.addf %291, %294 : vector<16x1xf32>
    %296 = math.rsqrt %295 : vector<16x1xf32>
    %297 = vector.broadcast %296 : vector<16x1xf32> to vector<16x32xf32>
    %298 = arith.mulf %293, %297 : vector<16x32xf32>
    %299 = vector.broadcast %279 : vector<1x32xf32> to vector<16x32xf32>
    %300 = arith.mulf %298, %299 : vector<16x32xf32>
    %301 = vector.broadcast %280 : vector<1x32xf32> to vector<16x32xf32>
    %302 = arith.addf %300, %301 : vector<16x32xf32>
    %303 = vector.shape_cast %302 : vector<16x32xf32> to vector<2x8x32xf32>
    %c0_98 = arith.constant 0 : index
    %c0_99 = arith.constant 0 : index
    %c0_100 = arith.constant 0 : index
    %304 = vector.load %arg25[%c0_98, %c0_99, %c0_100] : memref<2x8x32xf32, #tpu.memory_space<vmem>>, vector<2x8x32xf32>
    tpu.vector_store %arg25[%c0_98, %c0_99, %c0_100], %303 {strides = array<i32>} : memref<2x8x32xf32, #tpu.memory_space<vmem>>, vector<2x8x32xf32>,
    return
  }
  func.func @transform_0(%arg0: i32) -> (i32, i32, i32) {
    %c0_i32 = arith.constant 0 : i32
    %c0_i32_0 = arith.constant 0 : i32
    %c0_i32_1 = arith.constant 0 : i32
    return %arg0, %c0_i32, %c0_i32_0 : i32, i32, i32
  }
  func.func @transform_1(%arg0: i32) -> (i32, i32, i32) {
    %c0_i32 = arith.constant 0 : i32
    %c0_i32_0 = arith.constant 0 : i32
    %c0_i32_1 = arith.constant 0 : i32
    return %arg0, %c0_i32, %c0_i32_0 : i32, i32, i32
  }
  func.func @transform_2(%arg0: i32) -> (i32, i32, i32) {
    %c0_i32 = arith.constant 0 : i32
    %c0_i32_0 = arith.constant 0 : i32
    %c0_i32_1 = arith.constant 0 : i32
    return %arg0, %c0_i32, %c0_i32_0 : i32, i32, i32
  }
  func.func @transform_3(%arg0: i32) -> (i32, i32, i32) {
    %c0_i32 = arith.constant 0 : i32
    %c0_i32_0 = arith.constant 0 : i32
    %c0_i32_1 = arith.constant 0 : i32
    return %arg0, %c0_i32, %c0_i32_0 : i32, i32, i32
  }
  func.func @transform_4(%arg0: i32) -> (i32, i32) {
    %c0_i32 = arith.constant 0 : i32
    %c0_i32_0 = arith.constant 0 : i32
    %c0_i32_1 = arith.constant 0 : i32
    return %c0_i32, %c0_i32_0 : i32, i32
  }
  func.func @transform_5(%arg0: i32) -> (i32, i32) {
    %c0_i32 = arith.constant 0 : i32
    %c0_i32_0 = arith.constant 0 : i32
    %c0_i32_1 = arith.constant 0 : i32
    return %c0_i32, %c0_i32_0 : i32, i32
  }
  func.func @transform_6(%arg0: i32) -> (i32, i32) {
    %c0_i32 = arith.constant 0 : i32
    %c0_i32_0 = arith.constant 0 : i32
    %c0_i32_1 = arith.constant 0 : i32
    return %c0_i32, %c0_i32_0 : i32, i32
  }
  func.func @transform_7(%arg0: i32) -> (i32, i32) {
    %c0_i32 = arith.constant 0 : i32
    %c0_i32_0 = arith.constant 0 : i32
    %c0_i32_1 = arith.constant 0 : i32
    return %c0_i32, %c0_i32_0 : i32, i32
  }
  func.func @transform_8(%arg0: i32) -> (i32, i32) {
    %c0_i32 = arith.constant 0 : i32
    %c0_i32_0 = arith.constant 0 : i32
    %c0_i32_1 = arith.constant 0 : i32
    return %c0_i32, %c0_i32_0 : i32, i32
  }
  func.func @transform_9(%arg0: i32) -> (i32, i32) {
    %c0_i32 = arith.constant 0 : i32
    %c0_i32_0 = arith.constant 0 : i32
    %c0_i32_1 = arith.constant 0 : i32
    return %c0_i32, %c0_i32_0 : i32, i32
  }
  func.func @transform_10(%arg0: i32) -> (i32, i32) {
    %c0_i32 = arith.constant 0 : i32
    %c0_i32_0 = arith.constant 0 : i32
    %c0_i32_1 = arith.constant 0 : i32
    return %c0_i32, %c0_i32_0 : i32, i32
  }
  func.func @transform_11(%arg0: i32) -> (i32, i32) {
    %c0_i32 = arith.constant 0 : i32
    %c0_i32_0 = arith.constant 0 : i32
    %c0_i32_1 = arith.constant 0 : i32
    return %c0_i32, %c0_i32_0 : i32, i32
  }
  func.func @transform_12(%arg0: i32) -> (i32, i32) {
    %c0_i32 = arith.constant 0 : i32
    %c0_i32_0 = arith.constant 0 : i32
    %c0_i32_1 = arith.constant 0 : i32
    return %c0_i32, %c0_i32_0 : i32, i32
  }
  func.func @transform_13(%arg0: i32) -> (i32, i32) {
    %c0_i32 = arith.constant 0 : i32
    %c0_i32_0 = arith.constant 0 : i32
    %c0_i32_1 = arith.constant 0 : i32
    return %c0_i32, %c0_i32_0 : i32, i32
  }
  func.func @transform_14(%arg0: i32) -> (i32, i32) {
    %c0_i32 = arith.constant 0 : i32
    %c0_i32_0 = arith.constant 0 : i32
    %c0_i32_1 = arith.constant 0 : i32
    return %c0_i32, %c0_i32_0 : i32, i32
  }
  func.func @transform_15(%arg0: i32) -> (i32, i32) {
    %c0_i32 = arith.constant 0 : i32
    %c0_i32_0 = arith.constant 0 : i32
    %c0_i32_1 = arith.constant 0 : i32
    return %c0_i32, %c0_i32_0 : i32, i32
  }
  func.func @transform_16(%arg0: i32) -> (i32, i32) {
    %c0_i32 = arith.constant 0 : i32
    %c0_i32_0 = arith.constant 0 : i32
    %c0_i32_1 = arith.constant 0 : i32
    return %c0_i32, %c0_i32_0 : i32, i32
  }
  func.func @transform_17(%arg0: i32) -> (i32, i32) {
    %c0_i32 = arith.constant 0 : i32
    %c0_i32_0 = arith.constant 0 : i32
    %c0_i32_1 = arith.constant 0 : i32
    return %c0_i32, %c0_i32_0 : i32, i32
  }
  func.func @transform_18(%arg0: i32) -> (i32, i32) {
    %c0_i32 = arith.constant 0 : i32
    %c0_i32_0 = arith.constant 0 : i32
    %c0_i32_1 = arith.constant 0 : i32
    return %c0_i32, %c0_i32_0 : i32, i32
  }
  func.func @transform_19(%arg0: i32) -> (i32, i32) {
    %c0_i32 = arith.constant 0 : i32
    %c0_i32_0 = arith.constant 0 : i32
    %c0_i32_1 = arith.constant 0 : i32
    return %c0_i32, %c0_i32_0 : i32, i32
  }
  func.func @transform_20(%arg0: i32) -> (i32, i32) {
    %c0_i32 = arith.constant 0 : i32
    %c0_i32_0 = arith.constant 0 : i32
    %c0_i32_1 = arith.constant 0 : i32
    return %c0_i32, %c0_i32_0 : i32, i32
  }
  func.func @transform_21(%arg0: i32) -> (i32, i32) {
    %c0_i32 = arith.constant 0 : i32
    %c0_i32_0 = arith.constant 0 : i32
    %c0_i32_1 = arith.constant 0 : i32
    return %c0_i32, %c0_i32_0 : i32, i32
  }
  func.func @transform_22(%arg0: i32) -> (i32, i32) {
    %c0_i32 = arith.constant 0 : i32
    %c0_i32_0 = arith.constant 0 : i32
    %c0_i32_1 = arith.constant 0 : i32
    return %c0_i32, %c0_i32_0 : i32, i32
  }
  func.func @transform_23(%arg0: i32) -> (i32, i32) {
    %c0_i32 = arith.constant 0 : i32
    %c0_i32_0 = arith.constant 0 : i32
    %c0_i32_1 = arith.constant 0 : i32
    return %c0_i32, %c0_i32_0 : i32, i32
  }
  func.func @transform_24(%arg0: i32) -> (i32, i32, i32) {
    %c0_i32 = arith.constant 0 : i32
    %c0_i32_0 = arith.constant 0 : i32
    %c0_i32_1 = arith.constant 0 : i32
    return %arg0, %c0_i32, %c0_i32_0 : i32, i32, i32
  }
}

</mosaic_0001>

<llo_original>
// kernel: tpu_custom_call.1
$region0: #{tpu_custom_call.1}
  #allocation0 [shape = 'u32[]', space=smem, size = 0x4, offset = 0x4, fixed_abs, tag = 'smem constant byte address 0x4 - core index']
  #allocation1 [shape = 'u32[144,128]{1,0:T(1,128)}', space=vmem, size = 0x12000, scoped, tag = 'internal scratch']
  %s0 = inlined_call_operand.hbm [shape: f32[2,8,32], index: 0, kind: input, shape index: {}]
  %s1 = inlined_call_operand.hbm [shape: f32[2,8,32], index: 1, kind: input, shape index: {}]
  %s2 = inlined_call_operand.hbm [shape: f32[2,8,8], index: 2, kind: input, shape index: {}]
  %s3 = inlined_call_operand.hbm [shape: f32[2,8,8], index: 3, kind: input, shape index: {}]
  %s4 = inlined_call_operand.vmem [shape: f32[32,96], index: 4, kind: input, shape index: {}]
  %s5 = inlined_call_operand.hbm [shape: f32[1,96], index: 5, kind: input, shape index: {}]
  %s6 = inlined_call_operand.vmem [shape: f32[32,32], index: 6, kind: input, shape index: {}]
  %s7 = inlined_call_operand.hbm [shape: f32[1,32], index: 7, kind: input, shape index: {}]
  %s8 = inlined_call_operand.hbm [shape: f32[1,32], index: 8, kind: input, shape index: {}]
  %s9 = inlined_call_operand.hbm [shape: f32[1,32], index: 9, kind: input, shape index: {}]
  %s10 = inlined_call_operand.vmem [shape: f32[32,32], index: 10, kind: input, shape index: {}]
  %s11 = inlined_call_operand.hbm [shape: f32[1,32], index: 11, kind: input, shape index: {}]
  %s12 = inlined_call_operand.vmem [shape: f32[32,64], index: 12, kind: input, shape index: {}]
  %s13 = inlined_call_operand.hbm [shape: f32[1,64], index: 13, kind: input, shape index: {}]
  %s14 = inlined_call_operand.hbm [shape: f32[32,32], index: 14, kind: input, shape index: {}]
  %s15 = inlined_call_operand.hbm [shape: f32[1,32], index: 15, kind: input, shape index: {}]
  %s16 = inlined_call_operand.hbm [shape: f32[1,32], index: 16, kind: input, shape index: {}]
  %s17 = inlined_call_operand.hbm [shape: f32[1,32], index: 17, kind: input, shape index: {}]
  %s18 = inlined_call_operand.hbm [shape: f32[32,64], index: 18, kind: input, shape index: {}]
  %s19 = inlined_call_operand.vmem [shape: f32[1,64], index: 19, kind: input, shape index: {}]
  %s20 = inlined_call_operand.vmem [shape: f32[64,32], index: 20, kind: input, shape index: {}]
  %s21 = inlined_call_operand.vmem [shape: f32[1,32], index: 21, kind: input, shape index: {}]
  %s22 = inlined_call_operand.vmem [shape: f32[1,32], index: 22, kind: input, shape index: {}]
  %s23 = inlined_call_operand.vmem [shape: f32[1,32], index: 23, kind: input, shape index: {}]
  %s24 = inlined_call_operand.hbm [shape: f32[2,8,32], index: 24, kind: output, shape index: {}]
  %s25 = sld [smem:[#allocation0]]
  $region166: #{tpu_custom_call.1} parent=0
    _
  %s27 = ssub.s32 1, %s25
  %s28 = scalar_select 0, %s27, %s25
  $region1: #{tpu_custom_call.1} parent=0
    #allocation2 [shape = 'u8[8192]{0}', space=vmem, size = 0x2000, scoped, tag = 'input window, operand 0, single buffered']
    #allocation3 [shape = 's32[1]{0}', space=sflag, size = 0x4, scoped, tag = 'scoped memory for tpu_custom_call.1']
    #allocation4 [shape = 's32[1]{0}', space=sflag, size = 0x4, scoped, tag = 'scoped memory for tpu_custom_call.1']
    #allocation5 [shape = 'u8[8192]{0}', space=vmem, size = 0x2000, scoped, tag = 'input window, operand 1, single buffered']
    #allocation6 [shape = 's32[1]{0}', space=sflag, size = 0x4, scoped, tag = 'scoped memory for tpu_custom_call.1']
    #allocation7 [shape = 'u8[8192]{0}', space=vmem, size = 0x2000, scoped, tag = 'input window, operand 2, single buffered']
    #allocation8 [shape = 'u8[8192]{0}', space=vmem, size = 0x2000, scoped, tag = 'input window, operand 3, single buffered']
    #allocation9 [shape = 's32[1]{0}', space=sflag, size = 0x4, scoped, tag = 'scoped memory for tpu_custom_call.1']
    #allocation10 [shape = 'u8[512]{0}', space=vmem, size = 0x400, scoped, tag = 'input window, operand 5, single buffered']
    #allocation11 [shape = 'u8[512]{0}', space=vmem, size = 0x400, scoped, tag = 'input window, operand 7, single buffered']
    #allocation12 [shape = 's32[1]{0}', space=sflag, size = 0x4, scoped, tag = 'scoped memory for tpu_custom_call.1']
    #allocation13 [shape = 'u8[512]{0}', space=vmem, size = 0x400, scoped, tag = 'input window, operand 8, single buffered']
    #allocation14 [shape = 'u8[512]{0}', space=vmem, size = 0x400, scoped, tag = 'input window, operand 9, single buffered']
    #allocation15 [shape = 's32[1]{0}', space=sflag, size = 0x4, scoped, tag = 'scoped memory for tpu_custom_call.1']
    #allocation16 [shape = 'u8[512]{0}', space=vmem, size = 0x400, scoped, tag = 'input window, operand 11, single buffered']
    #allocation17 [shape = 'u8[512]{0}', space=vmem, size = 0x400, scoped, tag = 'input window, operand 13, single buffered']
    #allocation18 [shape = 's32[1]{0}', space=sflag, size = 0x4, scoped, tag = 'scoped memory for tpu_custom_call.1']
    #allocation19 [shape = 'u8[16384]{0}', space=vmem, size = 0x4000, scoped, tag = 'input window, operand 14, single buffered']
    #allocation20 [shape = 'u8[512]{0}', space=vmem, size = 0x400, scoped, tag = 'input window, operand 15, single buffered']
    #allocation21 [shape = 's32[1]{0}', space=sflag, size = 0x4, scoped, tag = 'scoped memory for tpu_custom_call.1']
    #allocation22 [shape = 'u8[512]{0}', space=vmem, size = 0x400, scoped, tag = 'input window, operand 16, single buffered']
    #allocation23 [shape = 'u8[512]{0}', space=vmem, size = 0x400, scoped, tag = 'input window, operand 17, single buffered']
    #allocation24 [shape = 's32[1]{0}', space=sflag, size = 0x4, scoped, tag = 'scoped memory for tpu_custom_call.1']
    #allocation25 [shape = 'u8[16384]{0}', space=vmem, size = 0x4000, scoped, tag = 'input window, operand 18, single buffered']
    #allocation26 [shape = 'u8[8192]{0}', space=vmem, size = 0x2000, scoped, tag = 'output window, operand 0, single buffered']
    %29 = vsyncpa [#allocation3], 0
    %30 = vsyncpa [#allocation6], 0
    %31 = vsyncpa [#allocation9], 0
    %32 = vsyncpa [#allocation12], 0
    %33 = vsyncpa [#allocation15], 0
    %34 = vsyncpa [#allocation18], 0
    %35 = vsyncpa [#allocation21], 0
    %36 = vsyncpa [#allocation24], 0
    %37 = vsyncpa [#allocation4], 0
    // Predicated region
    $region2: #{tpu_custom_call.1} parent=1 // pred_check
      _
    $region3: #{tpu_custom_call.1} parent=1 // pred_check_branch
      %39 = sbr.rel (0) target = $region5
    $region4: #{tpu_custom_call.1} parent=1 // pred_region
      %s41 = ssub.s32 256, 256
      %42 = vsyncadd [#allocation3], %s41
      %s43 = sshll.u32 [#allocation2], 4
      %s44 = int_to_ptr.vmem [resolvable:$true] %s43
      %49 = dma.hbm_to_vmem [thread:$0]  %s0, 256, %s44, [#allocation3], 128, 128, 8
    $region5: #{tpu_custom_call.1} parent=1 // pred_fallthru
      _
    // Predicated region
    $region6: #{tpu_custom_call.1} parent=1 // pred_check
      _
    $region7: #{tpu_custom_call.1} parent=1 // pred_check_branch
      %51 = sbr.rel (0) target = $region9
    $region8: #{tpu_custom_call.1} parent=1 // pred_region
      %s53 = ssub.s32 256, 256
      %54 = vsyncadd [#allocation6], %s53
      %s55 = sshll.u32 [#allocation5], 4
      %s56 = int_to_ptr.vmem [resolvable:$true] %s55
      %61 = dma.hbm_to_vmem [thread:$0]  %s1, 256, %s56, [#allocation6], 128, 128, 8
    $region9: #{tpu_custom_call.1} parent=1 // pred_fallthru
      _
    // Predicated region
    $region10: #{tpu_custom_call.1} parent=1 // pred_check
      _
    $region11: #{tpu_custom_call.1} parent=1 // pred_check_branch
      %63 = sbr.rel (0) target = $region13
    $region12: #{tpu_custom_call.1} parent=1 // pred_region
      %s65 = ssub.s32 256, 256
      %66 = vsyncadd [#allocation6], %s65
      %s67 = sshll.u32 [#allocation7], 4
      %s68 = int_to_ptr.vmem [resolvable:$true] %s67
      %73 = dma.hbm_to_vmem [thread:$0]  %s2, 256, %s68, [#allocation6], 128, 128, 8
    $region13: #{tpu_custom_call.1} parent=1 // pred_fallthru
      _
    // Predicated region
    $region14: #{tpu_custom_call.1} parent=1 // pred_check
      _
    $region15: #{tpu_custom_call.1} parent=1 // pred_check_branch
      %75 = sbr.rel (0) target = $region17
    $region16: #{tpu_custom_call.1} parent=1 // pred_region
      %s77 = ssub.s32 256, 256
      %78 = vsyncadd [#allocation9], %s77
      %s79 = sshll.u32 [#allocation8], 4
      %s80 = int_to_ptr.vmem [resolvable:$true] %s79
      %85 = dma.hbm_to_vmem [thread:$0]  %s3, 256, %s80, [#allocation9], 128, 128, 8
    $region17: #{tpu_custom_call.1} parent=1 // pred_fallthru
      _
    // Predicated region
    $region18: #{tpu_custom_call.1} parent=1 // pred_check
      _
    $region19: #{tpu_custom_call.1} parent=1 // pred_check_branch
      %87 = sbr.rel (0) target = $region21
    $region20: #{tpu_custom_call.1} parent=1 // pred_region
      _
    $region21: #{tpu_custom_call.1} parent=1 // pred_fallthru
      _
    // Predicated region
    $region22: #{tpu_custom_call.1} parent=1 // pred_check
      _
    $region23: #{tpu_custom_call.1} parent=1 // pred_check_branch
      %89 = sbr.rel (0) target = $region25
    $region24: #{tpu_custom_call.1} parent=1 // pred_region
      %s91 = ssub.s32 16, 16
      %92 = vsyncadd [#allocation9], %s91
      %s94 = sshll.u32 [#allocation10], 4
      %s95 = int_to_ptr.vmem [resolvable:$true] %s94
      %97 = dma.hbm_to_vmem [thread:$0]  %s5, 16, %s95, [#allocation9]
    $region25: #{tpu_custom_call.1} parent=1 // pred_fallthru
      _
    // Predicated region
    $region26: #{tpu_custom_call.1} parent=1 // pred_check
      _
    $region27: #{tpu_custom_call.1} parent=1 // pred_check_branch
      %99 = sbr.rel (0) target = $region29
    $region28: #{tpu_custom_call.1} parent=1 // pred_region
      _
    $region29: #{tpu_custom_call.1} parent=1 // pred_fallthru
      _
    // Predicated region
    $region30: #{tpu_custom_call.1} parent=1 // pred_check
      _
    $region31: #{tpu_custom_call.1} parent=1 // pred_check_branch
      %101 = sbr.rel (0) target = $region33
    $region32: #{tpu_custom_call.1} parent=1 // pred_region
      %s103 = ssub.s32 16, 16
      %104 = vsyncadd [#allocation12], %s103
      %s106 = sshll.u32 [#allocation11], 4
      %s107 = int_to_ptr.vmem [resolvable:$true] %s106
      %109 = dma.hbm_to_vmem [thread:$0]  %s7, 16, %s107, [#allocation12]
    $region33: #{tpu_custom_call.1} parent=1 // pred_fallthru
      _
    // Predicated region
    $region34: #{tpu_custom_call.1} parent=1 // pred_check
      _
    $region35: #{tpu_custom_call.1} parent=1 // pred_check_branch
      %111 = sbr.rel (0) target = $region37
    $region36: #{tpu_custom_call.1} parent=1 // pred_region
      %s113 = ssub.s32 16, 16
      %114 = vsyncadd [#allocation12], %s113
      %s116 = sshll.u32 [#allocation13], 4
      %s117 = int_to_ptr.vmem [resolvable:$true] %s116
      %119 = dma.hbm_to_vmem [thread:$0]  %s8, 16, %s117, [#allocation12]
    $region37: #{tpu_custom_call.1} parent=1 // pred_fallthru
      _
    // Predicated region
    $region38: #{tpu_custom_call.1} parent=1 // pred_check
      _
    $region39: #{tpu_custom_call.1} parent=1 // pred_check_branch
      %121 = sbr.rel (0) target = $region41
    $region40: #{tpu_custom_call.1} parent=1 // pred_region
      %s123 = ssub.s32 16, 16
      %124 = vsyncadd [#allocation15], %s123
      %s126 = sshll.u32 [#allocation14], 4
      %s127 = int_to_ptr.vmem [resolvable:$true] %s126
      %129 = dma.hbm_to_vmem [thread:$0]  %s9, 16, %s127, [#allocation15]
    $region41: #{tpu_custom_call.1} parent=1 // pred_fallthru
      _
    // Predicated region
    $region42: #{tpu_custom_call.1} parent=1 // pred_check
      _
    $region43: #{tpu_custom_call.1} parent=1 // pred_check_branch
      %131 = sbr.rel (0) target = $region45
    $region44: #{tpu_custom_call.1} parent=1 // pred_region
      _
    $region45: #{tpu_custom_call.1} parent=1 // pred_fallthru
      _
    // Predicated region
    $region46: #{tpu_custom_call.1} parent=1 // pred_check
      _
    $region47: #{tpu_custom_call.1} parent=1 // pred_check_branch
      %133 = sbr.rel (0) target = $region49
    $region48: #{tpu_custom_call.1} parent=1 // pred_region
      %s135 = ssub.s32 16, 16
      %136 = vsyncadd [#allocation15], %s135
      %s138 = sshll.u32 [#allocation16], 4
      %s139 = int_to_ptr.vmem [resolvable:$true] %s138
      %141 = dma.hbm_to_vmem [thread:$0]  %s11, 16, %s139, [#allocation15]
    $region49: #{tpu_custom_call.1} parent=1 // pred_fallthru
      _
    // Predicated region
    $region50: #{tpu_custom_call.1} parent=1 // pred_check
      _
    $region51: #{tpu_custom_call.1} parent=1 // pred_check_branch
      %143 = sbr.rel (0) target = $region53
    $region52: #{tpu_custom_call.1} parent=1 // pred_region
      _
    $region53: #{tpu_custom_call.1} parent=1 // pred_fallthru
      _
    // Predicated region
    $region54: #{tpu_custom_call.1} parent=1 // pred_check
      _
    $region55: #{tpu_custom_call.1} parent=1 // pred_check_branch
      %145 = sbr.rel (0) target = $region57
    $region56: #{tpu_custom_call.1} parent=1 // pred_region
      %s147 = ssub.s32 16, 16
      %148 = vsyncadd [#allocation18], %s147
      %s150 = sshll.u32 [#allocation17], 4
      %s151 = int_to_ptr.vmem [resolvable:$true] %s150
      %153 = dma.hbm_to_vmem [thread:$0]  %s13, 16, %s151, [#allocation18]
    $region57: #{tpu_custom_call.1} parent=1 // pred_fallthru
      _
    // Predicated region
    $region58: #{tpu_custom_call.1} parent=1 // pred_check
      _
    $region59: #{tpu_custom_call.1} parent=1 // pred_check_branch
      %155 = sbr.rel (0) target = $region61
    $region60: #{tpu_custom_call.1} parent=1 // pred_region
      %s157 = ssub.s32 512, 512
      %158 = vsyncadd [#allocation18], %s157
      %s159 = sshll.u32 [#allocation19], 4
      %s160 = int_to_ptr.vmem [resolvable:$true] %s159
      %165 = dma.hbm_to_vmem [thread:$0]  %s14, 512, %s160, [#allocation18], 128, 128, 8
    $region61: #{tpu_custom_call.1} parent=1 // pred_fallthru
      _
    // Predicated region
    $region62: #{tpu_custom_call.1} parent=1 // pred_check
      _
    $region63: #{tpu_custom_call.1} parent=1 // pred_check_branch
      %167 = sbr.rel (0) target = $region65
    $region64: #{tpu_custom_call.1} parent=1 // pred_region
      %s169 = ssub.s32 16, 16
      %170 = vsyncadd [#allocation21], %s169
      %s172 = sshll.u32 [#allocation20], 4
      %s173 = int_to_ptr.vmem [resolvable:$true] %s172
      %175 = dma.hbm_to_vmem [thread:$0]  %s15, 16, %s173, [#allocation21]
    $region65: #{tpu_custom_call.1} parent=1 // pred_fallthru
      _
    // Predicated region
    $region66: #{tpu_custom_call.1} parent=1 // pred_check
      _
    $region67: #{tpu_custom_call.1} parent=1 // pred_check_branch
      %177 = sbr.rel (0) target = $region69
    $region68: #{tpu_custom_call.1} parent=1 // pred_region
      %s179 = ssub.s32 16, 16
      %180 = vsyncadd [#allocation21], %s179
      %s182 = sshll.u32 [#allocation22], 4
      %s183 = int_to_ptr.vmem [resolvable:$true] %s182
      %185 = dma.hbm_to_vmem [thread:$0]  %s16, 16, %s183, [#allocation21]
    $region69: #{tpu_custom_call.1} parent=1 // pred_fallthru
      _
    // Predicated region
    $region70: #{tpu_custom_call.1} parent=1 // pred_check
      _
    $region71: #{tpu_custom_call.1} parent=1 // pred_check_branch
      %187 = sbr.rel (0) target = $region73
    $region72: #{tpu_custom_call.1} parent=1 // pred_region
      %s189 = ssub.s32 16, 16
      %190 = vsyncadd [#allocation24], %s189
      %s192 = sshll.u32 [#allocation23], 4
      %s193 = int_to_ptr.vmem [resolvable:$true] %s192
      %195 = dma.hbm_to_vmem [thread:$0]  %s17, 16, %s193, [#allocation24]
    $region73: #{tpu_custom_call.1} parent=1 // pred_fallthru
      _
    // Predicated region
    $region74: #{tpu_custom_call.1} parent=1 // pred_check
      _
    $region75: #{tpu_custom_call.1} parent=1 // pred_check_branch
      %197 = sbr.rel (0) target = $region77
    $region76: #{tpu_custom_call.1} parent=1 // pred_region
      %s199 = ssub.s32 512, 512
      %200 = vsyncadd [#allocation24], %s199
      %s201 = sshll.u32 [#allocation25], 4
      %s202 = int_to_ptr.vmem [resolvable:$true] %s201
      %207 = dma.hbm_to_vmem [thread:$0]  %s18, 512, %s202, [#allocation24], 128, 128, 8
    $region77: #{tpu_custom_call.1} parent=1 // pred_fallthru
      _
    // Predicated region
    $region78: #{tpu_custom_call.1} parent=1 // pred_check
      _
    $region79: #{tpu_custom_call.1} parent=1 // pred_check_branch
      %209 = sbr.rel (0) target = $region81
    $region80: #{tpu_custom_call.1} parent=1 // pred_region
      _
    $region81: #{tpu_custom_call.1} parent=1 // pred_fallthru
      _
    // Predicated region
    $region82: #{tpu_custom_call.1} parent=1 // pred_check
      _
    $region83: #{tpu_custom_call.1} parent=1 // pred_check_branch
      %211 = sbr.rel (0) target = $region85
    $region84: #{tpu_custom_call.1} parent=1 // pred_region
      _
    $region85: #{tpu_custom_call.1} parent=1 // pred_fallthru
      _
    // Predicated region
    $region86: #{tpu_custom_call.1} parent=1 // pred_check
      _
    $region87: #{tpu_custom_call.1} parent=1 // pred_check_branch
      %213 = sbr.rel (0) target = $region89
    $region88: #{tpu_custom_call.1} parent=1 // pred_region
      _
    $region89: #{tpu_custom_call.1} parent=1 // pred_fallthru
      _
    // Predicated region
    $region90: #{tpu_custom_call.1} parent=1 // pred_check
      _
    $region91: #{tpu_custom_call.1} parent=1 // pred_check_branch
      %215 = sbr.rel (0) target = $region93
    $region92: #{tpu_custom_call.1} parent=1 // pred_region
      _
    $region93: #{tpu_custom_call.1} parent=1 // pred_fallthru
      _
    // Predicated region
    $region94: #{tpu_custom_call.1} parent=1 // pred_check
      _
    $region95: #{tpu_custom_call.1} parent=1 // pred_check_branch
      %217 = sbr.rel (0) target = $region97
    $region96: #{tpu_custom_call.1} parent=1 // pred_region
      _
    $region97: #{tpu_custom_call.1} parent=1 // pred_fallthru
      _
    // Predicated region
    $region98: #{tpu_custom_call.1} parent=1 // pred_check
      _
    $region99: #{tpu_custom_call.1} parent=1 // pred_check_branch
      %219 = sbr.rel (0) target = $region101
    $region100: #{tpu_custom_call.1} parent=1 // pred_region
      %220 = dma.done [#allocation3], 256
    $region101: #{tpu_custom_call.1} parent=1 // pred_fallthru
      _
    // Predicated region
    $region102: #{tpu_custom_call.1} parent=1 // pred_check
      _
    $region103: #{tpu_custom_call.1} parent=1 // pred_check_branch
      %222 = sbr.rel (0) target = $region105
    $region104: #{tpu_custom_call.1} parent=1 // pred_region
      %223 = dma.done [#allocation6], 256
    $region105: #{tpu_custom_call.1} parent=1 // pred_fallthru
      _
    // Predicated region
    $region106: #{tpu_custom_call.1} parent=1 // pred_check
      _
    $region107: #{tpu_custom_call.1} parent=1 // pred_check_branch
      %225 = sbr.rel (0) target = $region109
    $region108: #{tpu_custom_call.1} parent=1 // pred_region
      %226 = dma.done [#allocation6], 256
    $region109: #{tpu_custom_call.1} parent=1 // pred_fallthru
      _
    // Predicated region
    $region110: #{tpu_custom_call.1} parent=1 // pred_check
      _
    $region111: #{tpu_custom_call.1} parent=1 // pred_check_branch
      %228 = sbr.rel (0) target = $region113
    $region112: #{tpu_custom_call.1} parent=1 // pred_region
      %229 = dma.done [#allocation9], 256
    $region113: #{tpu_custom_call.1} parent=1 // pred_fallthru
      _
    // Predicated region
    $region114: #{tpu_custom_call.1} parent=1 // pred_check
      _
    $region115: #{tpu_custom_call.1} parent=1 // pred_check_branch
      %231 = sbr.rel (0) target = $region117
    $region116: #{tpu_custom_call.1} parent=1 // pred_region
      %232 = dma.done [#allocation9], 16
    $region117: #{tpu_custom_call.1} parent=1 // pred_fallthru
      _
    // Predicated region
    $region118: #{tpu_custom_call.1} parent=1 // pred_check
      _
    $region119: #{tpu_custom_call.1} parent=1 // pred_check_branch
      %234 = sbr.rel (0) target = $region121
    $region120: #{tpu_custom_call.1} parent=1 // pred_region
      %235 = dma.done [#allocation12], 16
    $region121: #{tpu_custom_call.1} parent=1 // pred_fallthru
      _
    // Predicated region
    $region122: #{tpu_custom_call.1} parent=1 // pred_check
      _
    $region123: #{tpu_custom_call.1} parent=1 // pred_check_branch
      %237 = sbr.rel (0) target = $region125
    $region124: #{tpu_custom_call.1} parent=1 // pred_region
      %238 = dma.done [#allocation12], 16
    $region125: #{tpu_custom_call.1} parent=1 // pred_fallthru
      _
    // Predicated region
    $region126: #{tpu_custom_call.1} parent=1 // pred_check
      _
    $region127: #{tpu_custom_call.1} parent=1 // pred_check_branch
      %240 = sbr.rel (0) target = $region129
    $region128: #{tpu_custom_call.1} parent=1 // pred_region
      %241 = dma.done [#allocation15], 16
    $region129: #{tpu_custom_call.1} parent=1 // pred_fallthru
      _
    // Predicated region
    $region130: #{tpu_custom_call.1} parent=1 // pred_check
      _
    $region131: #{tpu_custom_call.1} parent=1 // pred_check_branch
      %243 = sbr.rel (0) target = $region133
    $region132: #{tpu_custom_call.1} parent=1 // pred_region
      %244 = dma.done [#allocation15], 16
    $region133: #{tpu_custom_call.1} parent=1 // pred_fallthru
      _
    // Predicated region
    $region134: #{tpu_custom_call.1} parent=1 // pred_check
      _
    $region135: #{tpu_custom_call.1} parent=1 // pred_check_branch
      %246 = sbr.rel (0) target = $region137
    $region136: #{tpu_custom_call.1} parent=1 // pred_region
      %247 = dma.done [#allocation18], 16
    $region137: #{tpu_custom_call.1} parent=1 // pred_fallthru
      _
    // Predicated region
    $region138: #{tpu_custom_call.1} parent=1 // pred_check
      _
    $region139: #{tpu_custom_call.1} parent=1 // pred_check_branch
      %249 = sbr.rel (0) target = $region141
    $region140: #{tpu_custom_call.1} parent=1 // pred_region
      %250 = dma.done [#allocation18], 512
    $region141: #{tpu_custom_call.1} parent=1 // pred_fallthru
      _
    // Predicated region
    $region142: #{tpu_custom_call.1} parent=1 // pred_check
      _
    $region143: #{tpu_custom_call.1} parent=1 // pred_check_branch
      %252 = sbr.rel (0) target = $region145
    $region144: #{tpu_custom_call.1} parent=1 // pred_region
      %253 = dma.done [#allocation21], 16
    $region145: #{tpu_custom_call.1} parent=1 // pred_fallthru
      _
    // Predicated region
    $region146: #{tpu_custom_call.1} parent=1 // pred_check
      _
    $region147: #{tpu_custom_call.1} parent=1 // pred_check_branch
      %255 = sbr.rel (0) target = $region149
    $region148: #{tpu_custom_call.1} parent=1 // pred_region
      %256 = dma.done [#allocation21], 16
    $region149: #{tpu_custom_call.1} parent=1 // pred_fallthru
      _
    // Predicated region
    $region150: #{tpu_custom_call.1} parent=1 // pred_check
      _
    $region151: #{tpu_custom_call.1} parent=1 // pred_check_branch
      %258 = sbr.rel (0) target = $region153
    $region152: #{tpu_custom_call.1} parent=1 // pred_region
      %259 = dma.done [#allocation24], 16
    $region153: #{tpu_custom_call.1} parent=1 // pred_fallthru
      _
    // Predicated region
    $region154: #{tpu_custom_call.1} parent=1 // pred_check
      _
    $region155: #{tpu_custom_call.1} parent=1 // pred_check_branch
      %261 = sbr.rel (0) target = $region157
    $region156: #{tpu_custom_call.1} parent=1 // pred_region
      %262 = dma.done [#allocation24], 512
    $region157: #{tpu_custom_call.1} parent=1 // pred_fallthru
      _
    %v263 = vld [vmem:[#allocation2] sm:$0xff]
    %v264 = vld [vmem:[#allocation2 + $0x8] sm:$0xff]
    %v265 = vld [vmem:[#allocation5] sm:$0xff]
    %v266 = vld [vmem:[#allocation5 + $0x8] sm:$0xff]
    %v267 = vld [vmem:[#allocation7] sm:$0xff]
    %v268 = vld [vmem:[#allocation7 + $0x8] sm:$0xff]
    %v269 = vld [vmem:[#allocation8] sm:$0xff]
    %v270 = vld [vmem:[#allocation8 + $0x8] sm:$0xff]
    %v271 = vld [vmem:[%s4] sm:$0xff]
    %v272 = vld [vmem:[%s4 + $0x8] sm:$0xff]
    %v273 = vld [vmem:[%s4 + $0x10] sm:$0xff]
    %v274 = vld [vmem:[%s4 + $0x18] sm:$0xff]
    %v275 = vld [vmem:[#allocation10] sm:$0x1]
    %v277 = vlaneseq
    %v278 = vshrl.u32 %v277, 7
    %v279 = vsub.s32 0, %v278
    %v280 = vrot.slane %v275, %v279
    %vm282 = vcmask 261120
    %v284 = vsel %vm282, %v263, 0
    %v287 = vsel %vm282, %v264, 0
    %289 = vmatprep.subr.mxu0 0.0
    %290 = vmatpush1.msra.mxu0 %v271
    %291 = vmatprep.subr.mxu0 0.0
    %292 = vmatpush1.msra.mxu0 %v272
    %293 = vmatprep.subr.mxu0 0.0
    %294 = vmatpush1.msra.mxu0 %v273
    %295 = vmatprep.subr.mxu0 0.0
    %296 = vmatpush1.msra.mxu0 %v274
    %297 = vmatprep.subr.mxu0 0.0
    %298 = vmatpush1.msra.mxu0 0.0
    %299 = vmatprep.subr.mxu0 0.0
    %300 = vmatpush1.msra.mxu0 0.0
    %301 = vmatprep.subr.mxu0 0.0
    %302 = vmatpush1.msra.mxu0 0.0
    %303 = vmatprep.subr.mxu0 0.0
    %304 = vmatpush1.msra.mxu0 0.0
    %305 = vmatprep.subr.mxu0 0.0
    %306 = vmatpush1.msra.mxu0 0.0
    %307 = vmatprep.subr.mxu0 0.0
    %308 = vmatpush1.msra.mxu0 0.0
    %309 = vmatprep.subr.mxu0 0.0
    %310 = vmatpush1.msra.mxu0 0.0
    %311 = vmatprep.subr.mxu0 0.0
    %312 = vmatpush1.msra.mxu0 0.0
    %313 = vmatprep.subr.mxu0 0.0
    %314 = vmatpush1.msra.mxu0 0.0
    %315 = vmatprep.subr.mxu0 0.0
    %316 = vmatpush1.msra.mxu0 0.0
    %317 = vmatprep.subr.mxu0 0.0
    %318 = vmatpush1.msra.mxu0 0.0
    %319 = vmatprep.subr.mxu0 0.0
    %320 = vmatpush1.msra.mxu0 0.0
    %321 = vmatprep.subr.mxu0 0.0
    %322 = vmatpush1.msra.mxu0 0.0
    %323 = vmatprep.subr.mxu0 0.0
    %324 = vmatpush1.msra.mxu0 0.0
    %325 = vmatprep.subr.mxu0 0.0
    %326 = vmatpush1.msra.mxu0 0.0
    %327 = vmatprep.subr.mxu0 0.0
    %328 = vmatpush1.msra.mxu0 0.0
    %329 = vmatprep.subr.mxu0 0.0
    %330 = vmatpush1.msra.mxu0 0.0
    %331 = vmatprep.subr.mxu0 0.0
    %332 = vmatpush1.msra.mxu0 0.0
    %333 = vmatprep.subr.mxu0 0.0
    %334 = vmatpush1.msra.mxu0 0.0
    %335 = vmatprep.subr.mxu0 0.0
    %336 = vmatpush1.msra.mxu0 0.0
    %337 = vmatprep.subr.mxu0 0.0
    %338 = vmatpush1.msra.mxu0 0.0
    %339 = vmatprep.subr.mxu0 0.0
    %340 = vmatpush1.msra.mxu0 0.0
    %341 = vmatprep.subr.mxu0 0.0
    %342 = vmatpush1.msra.mxu0 0.0
    %343 = vmatprep.subr.mxu0 0.0
    %344 = vmatpush1.msra.mxu0 0.0
    %345 = vmatprep.subr.mxu0 0.0
    %346 = vmatpush1.msra.mxu0 0.0
    %347 = vmatprep.subr.mxu0 0.0
    %348 = vmatpush1.msra.mxu0 0.0
    %349 = vmatprep.subr.mxu0 0.0
    %350 = vmatpush1.msra.mxu0 0.0
    %351 = vmatprep.subr.mxu0 0.0
    %352 = vmatpush1.msra.mxu0 0.0
    %353 = vmatprep.mubr.f32.mxu0 0.0
    %354 = vmatmul.mubr.f32.gmra.mrb[0].mxu0 %v284
    %v355 = vpop.f32.mrb[0].mxu0
    %v356 = vadd.f32 %v280, %v355
    %v357 = vpop.f32.mrb[0].mxu0
    %358 = vmatprep.mubr.f32.mxu0 0.0
    %359 = vmatmul.mubr.f32.gmra.mrb[0].mxu0 %v287
    %v360 = vpop.f32.mrb[0].mxu0
    %v361 = vadd.f32 %v280, %v360
    %v362 = vpop.f32.mrb[0].mxu0
    %363 = vdwg.mxu0
    %v364 = vld [vmem:[%s6] sm:$0xff]
    %v365 = vld [vmem:[%s6 + $0x8] sm:$0xff]
    %v366 = vld [vmem:[%s6 + $0x10] sm:$0xff]
    %v367 = vld [vmem:[%s6 + $0x18] sm:$0xff]
    %v368 = vld [vmem:[#allocation11] sm:$0x1]
    %v369 = vld [vmem:[#allocation13] sm:$0x1]
    %v370 = vld [vmem:[#allocation14] sm:$0x1]
    %372 = vrot.lane.b32.xlu0 %v356, 112
    %v373 = vpop.permute.xlu0 %372
    %374 = vrot.lane.b32.xlu0 %v356, 96
    %v375 = vpop.permute.xlu0 %374
    %vm376 = vcmask 130048
    %v377 = vsel %vm376, %v356, 0
    %v379 = vsel %vm376, %v375, 0
    %381 = vmatprep.subr.mxu0 0.0
    %382 = vmatpush1.xpose.msra.mxu0 %v379
    %383 = vmatprep.subr.mxu0 0.0
    %384 = vmatpush1.xpose.msra.mxu0 0.0
    %385 = vmatprep.subr.mxu0 0.0
    %386 = vmatpush1.xpose.msra.mxu0 0.0
    %387 = vmatprep.subr.mxu0 0.0
    %388 = vmatpush1.xpose.msra.mxu0 0.0
    %389 = vmatprep.subr.mxu0 0.0
    %390 = vmatpush1.xpose.msra.mxu0 0.0
    %391 = vmatprep.subr.mxu0 0.0
    %392 = vmatpush1.xpose.msra.mxu0 0.0
    %393 = vmatprep.subr.mxu0 0.0
    %394 = vmatpush1.xpose.msra.mxu0 0.0
    %395 = vmatprep.subr.mxu0 0.0
    %396 = vmatpush1.xpose.msra.mxu0 0.0
    %397 = vmatprep.subr.mxu0 0.0
    %398 = vmatpush1.xpose.msra.mxu0 0.0
    %399 = vmatprep.subr.mxu0 0.0
    %400 = vmatpush1.xpose.msra.mxu0 0.0
    %401 = vmatprep.subr.mxu0 0.0
    %402 = vmatpush1.xpose.msra.mxu0 0.0
    %403 = vmatprep.subr.mxu0 0.0
    %404 = vmatpush1.xpose.msra.mxu0 0.0
    %405 = vmatprep.subr.mxu0 0.0
    %406 = vmatpush1.xpose.msra.mxu0 0.0
    %407 = vmatprep.subr.mxu0 0.0
    %408 = vmatpush1.xpose.msra.mxu0 0.0
    %409 = vmatprep.subr.mxu0 0.0
    %410 = vmatpush1.xpose.msra.mxu0 0.0
    %411 = vmatprep.subr.mxu0 0.0
    %412 = vmatpush1.xpose.msra.mxu0 0.0
    %413 = vmatprep.subr.mxu0 0.0
    %414 = vmatpush1.xpose.msra.mxu0 0.0
    %415 = vmatprep.subr.mxu0 0.0
    %416 = vmatpush1.xpose.msra.mxu0 0.0
    %417 = vmatprep.subr.mxu0 0.0
    %418 = vmatpush1.xpose.msra.mxu0 0.0
    %419 = vmatprep.subr.mxu0 0.0
    %420 = vmatpush1.xpose.msra.mxu0 0.0
    %421 = vmatprep.subr.mxu0 0.0
    %422 = vmatpush1.xpose.msra.mxu0 0.0
    %423 = vmatprep.subr.mxu0 0.0
    %424 = vmatpush1.xpose.msra.mxu0 0.0
    %425 = vmatprep.subr.mxu0 0.0
    %426 = vmatpush1.xpose.msra.mxu0 0.0
    %427 = vmatprep.subr.mxu0 0.0
    %428 = vmatpush1.xpose.msra.mxu0 0.0
    %429 = vmatprep.subr.mxu0 0.0
    %430 = vmatpush1.xpose.msra.mxu0 0.0
    %431 = vmatprep.subr.mxu0 0.0
    %432 = vmatpush1.xpose.msra.mxu0 0.0
    %433 = vmatprep.subr.mxu0 0.0
    %434 = vmatpush1.xpose.msra.mxu0 0.0
    %435 = vmatprep.subr.mxu0 0.0
    %436 = vmatpush1.xpose.msra.mxu0 0.0
    %437 = vmatprep.subr.mxu0 0.0
    %438 = vmatpush1.xpose.msra.mxu0 0.0
    %439 = vmatprep.subr.mxu0 0.0
    %440 = vmatpush1.xpose.msra.mxu0 0.0
    %441 = vmatprep.subr.mxu0 0.0
    %442 = vmatpush1.xpose.msra.mxu0 0.0
    %443 = vmatprep.subr.mxu0 0.0
    %444 = vmatpush1.xpose.msra.mxu0 0.0
    %445 = vmatprep.mubr.f32.mxu0 0.0
    %446 = vmatmul.mubr.f32.gmra.mrb[0].mxu0 %v377
    %v447 = vpop.f32.mrb[0].mxu0
    %v448 = vadd.f32 0.0, %v447
    %v449 = vpop.f32.mrb[0].mxu0
    %450 = vdwg.mxu0
    %451 = vrot.lane.b32.xlu0 %v373, 96
    %v452 = vpop.permute.xlu0 %451
    %v453 = vsel %vm376, %v373, 0
    %v455 = vsel %vm376, %v452, 0
    %457 = vmatprep.subr.mxu0 0.0
    %458 = vmatpush1.xpose.msra.mxu0 %v455
    %459 = vmatprep.subr.mxu0 0.0
    %460 = vmatpush1.xpose.msra.mxu0 0.0
    %461 = vmatprep.subr.mxu0 0.0
    %462 = vmatpush1.xpose.msra.mxu0 0.0
    %463 = vmatprep.subr.mxu0 0.0
    %464 = vmatpush1.xpose.msra.mxu0 0.0
    %465 = vmatprep.subr.mxu0 0.0
    %466 = vmatpush1.xpose.msra.mxu0 0.0
    %467 = vmatprep.subr.mxu0 0.0
    %468 = vmatpush1.xpose.msra.mxu0 0.0
    %469 = vmatprep.subr.mxu0 0.0
    %470 = vmatpush1.xpose.msra.mxu0 0.0
    %471 = vmatprep.subr.mxu0 0.0
    %472 = vmatpush1.xpose.msra.mxu0 0.0
    %473 = vmatprep.subr.mxu0 0.0
    %474 = vmatpush1.xpose.msra.mxu0 0.0
    %475 = vmatprep.subr.mxu0 0.0
    %476 = vmatpush1.xpose.msra.mxu0 0.0
    %477 = vmatprep.subr.mxu0 0.0
    %478 = vmatpush1.xpose.msra.mxu0 0.0
    %479 = vmatprep.subr.mxu0 0.0
    %480 = vmatpush1.xpose.msra.mxu0 0.0
    %481 = vmatprep.subr.mxu0 0.0
    %482 = vmatpush1.xpose.msra.mxu0 0.0
    %483 = vmatprep.subr.mxu0 0.0
    %484 = vmatpush1.xpose.msra.mxu0 0.0
    %485 = vmatprep.subr.mxu0 0.0
    %486 = vmatpush1.xpose.msra.mxu0 0.0
    %487 = vmatprep.subr.mxu0 0.0
    %488 = vmatpush1.xpose.msra.mxu0 0.0
    %489 = vmatprep.subr.mxu0 0.0
    %490 = vmatpush1.xpose.msra.mxu0 0.0
    %491 = vmatprep.subr.mxu0 0.0
    %492 = vmatpush1.xpose.msra.mxu0 0.0
    %493 = vmatprep.subr.mxu0 0.0
    %494 = vmatpush1.xpose.msra.mxu0 0.0
    %495 = vmatprep.subr.mxu0 0.0
    %496 = vmatpush1.xpose.msra.mxu0 0.0
    %497 = vmatprep.subr.mxu0 0.0
    %498 = vmatpush1.xpose.msra.mxu0 0.0
    %499 = vmatprep.subr.mxu0 0.0
    %500 = vmatpush1.xpose.msra.mxu0 0.0
    %501 = vmatprep.subr.mxu0 0.0
    %502 = vmatpush1.xpose.msra.mxu0 0.0
    %503 = vmatprep.subr.mxu0 0.0
    %504 = vmatpush1.xpose.msra.mxu0 0.0
    %505 = vmatprep.subr.mxu0 0.0
    %506 = vmatpush1.xpose.msra.mxu0 0.0
    %507 = vmatprep.subr.mxu0 0.0
    %508 = vmatpush1.xpose.msra.mxu0 0.0
    %509 = vmatprep.subr.mxu0 0.0
    %510 = vmatpush1.xpose.msra.mxu0 0.0
    %511 = vmatprep.subr.mxu0 0.0
    %512 = vmatpush1.xpose.msra.mxu0 0.0
    %513 = vmatprep.subr.mxu0 0.0
    %514 = vmatpush1.xpose.msra.mxu0 0.0
    %515 = vmatprep.subr.mxu0 0.0
    %516 = vmatpush1.xpose.msra.mxu0 0.0
    %517 = vmatprep.subr.mxu0 0.0
    %518 = vmatpush1.xpose.msra.mxu0 0.0
    %519 = vmatprep.subr.mxu0 0.0
    %520 = vmatpush1.xpose.msra.mxu0 0.0
    %521 = vmatprep.mubr.f32.mxu0 0.0
    %522 = vmatmul.mubr.f32.gmra.mrb[0].mxu0 %v453
    %v523 = vpop.f32.mrb[0].mxu0
    %v524 = vadd.f32 0.0, %v523
    %v525 = vpop.f32.mrb[0].mxu0
    %526 = vdwg.mxu0
    %vm527 = vcmp.gt.f32.partialorder %v267, 0.5
    %v528 = vsel %vm527, 1, 0
    %vm529 = vcmp.eq.s32.totalorder %v528, 1
    %v530 = vsel %vm529, -1e+30, %v448
    %v531 = vsel %vm529, -1e+30, %v524
    %vm532 = vcmask 64512
    %v533 = vsel %vm532, %v530, -inf
    %534 = vmax.xlane.f32.xlu0 %v533
    %v535 = vpop.xlane.xlu0 %534
    %v536 = vsel %vm532, %v531, -inf
    %537 = vmax.xlane.f32.xlu0 %v536
    %v538 = vpop.xlane.xlu0 %537
    %v539 = vsub.f32 %v530, %v535
    %v540 = vsub.f32 %v531, %v538
    %v541 = vmul.f32 %v539, 1.442695
    %v542 = vpow.pop %v541
    %v543 = vmul.f32 %v540, 1.442695
    %v544 = vpow.pop %v543
    %v545 = vsel %vm532, %v542, 0.0
    %546 = vadd.xlane.f32.xlu0 %v545
    %v547 = vpop.xlane.xlu0 %546
    %v548 = vsel %vm532, %v544, 0.0
    %549 = vadd.xlane.f32.xlu0 %v548
    %v550 = vpop.xlane.xlu0 %549
    %v551 = vrcp.pop %v547
    %v552 = vrcp.pop %v550
    %v553 = vmul.f32 %v542, %v551
    %v554 = vmul.f32 %v544, %v552
    %555 = vrot.lane.b32.xlu0 %v356, 64
    %v556 = vpop.permute.xlu0 %555
    %v559 = vsel %vm532, %v553, 0
    %561 = vmatprep.subr.mxu0 0.0
    %562 = vmatpush1.msra.mxu0 %v556
    %563 = vmatprep.subr.mxu0 0.0
    %564 = vmatpush1.msra.mxu0 0.0
    %565 = vmatprep.subr.mxu0 0.0
    %566 = vmatpush1.msra.mxu0 0.0
    %567 = vmatprep.subr.mxu0 0.0
    %568 = vmatpush1.msra.mxu0 0.0
    %569 = vmatprep.subr.mxu0 0.0
    %570 = vmatpush1.msra.mxu0 0.0
    %571 = vmatprep.subr.mxu0 0.0
    %572 = vmatpush1.msra.mxu0 0.0
    %573 = vmatprep.subr.mxu0 0.0
    %574 = vmatpush1.msra.mxu0 0.0
    %575 = vmatprep.subr.mxu0 0.0
    %576 = vmatpush1.msra.mxu0 0.0
    %577 = vmatprep.subr.mxu0 0.0
    %578 = vmatpush1.msra.mxu0 0.0
    %579 = vmatprep.subr.mxu0 0.0
    %580 = vmatpush1.msra.mxu0 0.0
    %581 = vmatprep.subr.mxu0 0.0
    %582 = vmatpush1.msra.mxu0 0.0
    %583 = vmatprep.subr.mxu0 0.0
    %584 = vmatpush1.msra.mxu0 0.0
    %585 = vmatprep.subr.mxu0 0.0
    %586 = vmatpush1.msra.mxu0 0.0
    %587 = vmatprep.subr.mxu0 0.0
    %588 = vmatpush1.msra.mxu0 0.0
    %589 = vmatprep.subr.mxu0 0.0
    %590 = vmatpush1.msra.mxu0 0.0
    %591 = vmatprep.subr.mxu0 0.0
    %592 = vmatpush1.msra.mxu0 0.0
    %593 = vmatprep.subr.mxu0 0.0
    %594 = vmatpush1.msra.mxu0 0.0
    %595 = vmatprep.subr.mxu0 0.0
    %596 = vmatpush1.msra.mxu0 0.0
    %597 = vmatprep.subr.mxu0 0.0
    %598 = vmatpush1.msra.mxu0 0.0
    %599 = vmatprep.subr.mxu0 0.0
    %600 = vmatpush1.msra.mxu0 0.0
    %601 = vmatprep.subr.mxu0 0.0
    %602 = vmatpush1.msra.mxu0 0.0
    %603 = vmatprep.subr.mxu0 0.0
    %604 = vmatpush1.msra.mxu0 0.0
    %605 = vmatprep.subr.mxu0 0.0
    %606 = vmatpush1.msra.mxu0 0.0
    %607 = vmatprep.subr.mxu0 0.0
    %608 = vmatpush1.msra.mxu0 0.0
    %609 = vmatprep.subr.mxu0 0.0
    %610 = vmatpush1.msra.mxu0 0.0
    %611 = vmatprep.subr.mxu0 0.0
    %612 = vmatpush1.msra.mxu0 0.0
    %613 = vmatprep.subr.mxu0 0.0
    %614 = vmatpush1.msra.mxu0 0.0
    %615 = vmatprep.subr.mxu0 0.0
    %616 = vmatpush1.msra.mxu0 0.0
    %617 = vmatprep.subr.mxu0 0.0
    %618 = vmatpush1.msra.mxu0 0.0
    %619 = vmatprep.subr.mxu0 0.0
    %620 = vmatpush1.msra.mxu0 0.0
    %621 = vmatprep.subr.mxu0 0.0
    %622 = vmatpush1.msra.mxu0 0.0
    %623 = vmatprep.subr.mxu0 0.0
    %624 = vmatpush1.msra.mxu0 0.0
    %625 = vmatprep.mubr.f32.mxu0 0.0
    %626 = vmatmul.mubr.f32.gmra.mrb[0].mxu0 %v559
    %v627 = vpop.f32.mrb[0].mxu0
    %v628 = vadd.f32 0.0, %v627
    %v629 = vpop.f32.mrb[0].mxu0
    %630 = vdwg.mxu0
    %631 = vrot.lane.b32.xlu0 %v373, 64
    %v632 = vpop.permute.xlu0 %631
    %v635 = vsel %vm532, %v554, 0
    %637 = vmatprep.subr.mxu0 0.0
    %638 = vmatpush1.msra.mxu0 %v632
    %639 = vmatprep.subr.mxu0 0.0
    %640 = vmatpush1.msra.mxu0 0.0
    %641 = vmatprep.subr.mxu0 0.0
    %642 = vmatpush1.msra.mxu0 0.0
    %643 = vmatprep.subr.mxu0 0.0
    %644 = vmatpush1.msra.mxu0 0.0
    %645 = vmatprep.subr.mxu0 0.0
    %646 = vmatpush1.msra.mxu0 0.0
    %647 = vmatprep.subr.mxu0 0.0
    %648 = vmatpush1.msra.mxu0 0.0
    %649 = vmatprep.subr.mxu0 0.0
    %650 = vmatpush1.msra.mxu0 0.0
    %651 = vmatprep.subr.mxu0 0.0
    %652 = vmatpush1.msra.mxu0 0.0
    %653 = vmatprep.subr.mxu0 0.0
    %654 = vmatpush1.msra.mxu0 0.0
    %655 = vmatprep.subr.mxu0 0.0
    %656 = vmatpush1.msra.mxu0 0.0
    %657 = vmatprep.subr.mxu0 0.0
    %658 = vmatpush1.msra.mxu0 0.0
    %659 = vmatprep.subr.mxu0 0.0
    %660 = vmatpush1.msra.mxu0 0.0
    %661 = vmatprep.subr.mxu0 0.0
    %662 = vmatpush1.msra.mxu0 0.0
    %663 = vmatprep.subr.mxu0 0.0
    %664 = vmatpush1.msra.mxu0 0.0
    %665 = vmatprep.subr.mxu0 0.0
    %666 = vmatpush1.msra.mxu0 0.0
    %667 = vmatprep.subr.mxu0 0.0
    %668 = vmatpush1.msra.mxu0 0.0
    %669 = vmatprep.subr.mxu0 0.0
    %670 = vmatpush1.msra.mxu0 0.0
    %671 = vmatprep.subr.mxu0 0.0
    %672 = vmatpush1.msra.mxu0 0.0
    %673 = vmatprep.subr.mxu0 0.0
    %674 = vmatpush1.msra.mxu0 0.0
    %675 = vmatprep.subr.mxu0 0.0
    %676 = vmatpush1.msra.mxu0 0.0
    %677 = vmatprep.subr.mxu0 0.0
    %678 = vmatpush1.msra.mxu0 0.0
    %679 = vmatprep.subr.mxu0 0.0
    %680 = vmatpush1.msra.mxu0 0.0
    %681 = vmatprep.subr.mxu0 0.0
    %682 = vmatpush1.msra.mxu0 0.0
    %683 = vmatprep.subr.mxu0 0.0
    %684 = vmatpush1.msra.mxu0 0.0
    %685 = vmatprep.subr.mxu0 0.0
    %686 = vmatpush1.msra.mxu0 0.0
    %687 = vmatprep.subr.mxu0 0.0
    %688 = vmatpush1.msra.mxu0 0.0
    %689 = vmatprep.subr.mxu0 0.0
    %690 = vmatpush1.msra.mxu0 0.0
    %691 = vmatprep.subr.mxu0 0.0
    %692 = vmatpush1.msra.mxu0 0.0
    %693 = vmatprep.subr.mxu0 0.0
    %694 = vmatpush1.msra.mxu0 0.0
    %695 = vmatprep.subr.mxu0 0.0
    %696 = vmatpush1.msra.mxu0 0.0
    %697 = vmatprep.subr.mxu0 0.0
    %698 = vmatpush1.msra.mxu0 0.0
    %699 = vmatprep.subr.mxu0 0.0
    %700 = vmatpush1.msra.mxu0 0.0
    %701 = vmatprep.mubr.f32.mxu0 0.0
    %702 = vmatmul.mubr.f32.gmra.mrb[0].mxu0 %v635
    %v703 = vpop.f32.mrb[0].mxu0
    %v704 = vadd.f32 0.0, %v703
    %v705 = vpop.f32.mrb[0].mxu0
    %706 = vdwg.mxu0
    %708 = vrot.lane.b32.xlu0 %v704, 16
    %v709 = vpop.permute.xlu0 %708
    %v711 = vsel %vm376, %v628, %v709
    %713 = vrot.lane.b32.xlu0 %v361, 112
    %v714 = vpop.permute.xlu0 %713
    %715 = vrot.lane.b32.xlu0 %v361, 96
    %v716 = vpop.permute.xlu0 %715
    %v717 = vsel %vm376, %v361, 0
    %v719 = vsel %vm376, %v716, 0
    %721 = vmatprep.subr.mxu0 0.0
    %722 = vmatpush1.xpose.msra.mxu0 %v719
    %723 = vmatprep.subr.mxu0 0.0
    %724 = vmatpush1.xpose.msra.mxu0 0.0
    %725 = vmatprep.subr.mxu0 0.0
    %726 = vmatpush1.xpose.msra.mxu0 0.0
    %727 = vmatprep.subr.mxu0 0.0
    %728 = vmatpush1.xpose.msra.mxu0 0.0
    %729 = vmatprep.subr.mxu0 0.0
    %730 = vmatpush1.xpose.msra.mxu0 0.0
    %731 = vmatprep.subr.mxu0 0.0
    %732 = vmatpush1.xpose.msra.mxu0 0.0
    %733 = vmatprep.subr.mxu0 0.0
    %734 = vmatpush1.xpose.msra.mxu0 0.0
    %735 = vmatprep.subr.mxu0 0.0
    %736 = vmatpush1.xpose.msra.mxu0 0.0
    %737 = vmatprep.subr.mxu0 0.0
    %738 = vmatpush1.xpose.msra.mxu0 0.0
    %739 = vmatprep.subr.mxu0 0.0
    %740 = vmatpush1.xpose.msra.mxu0 0.0
    %741 = vmatprep.subr.mxu0 0.0
    %742 = vmatpush1.xpose.msra.mxu0 0.0
    %743 = vmatprep.subr.mxu0 0.0
    %744 = vmatpush1.xpose.msra.mxu0 0.0
    %745 = vmatprep.subr.mxu0 0.0
    %746 = vmatpush1.xpose.msra.mxu0 0.0
    %747 = vmatprep.subr.mxu0 0.0
    %748 = vmatpush1.xpose.msra.mxu0 0.0
    %749 = vmatprep.subr.mxu0 0.0
    %750 = vmatpush1.xpose.msra.mxu0 0.0
    %751 = vmatprep.subr.mxu0 0.0
    %752 = vmatpush1.xpose.msra.mxu0 0.0
    %753 = vmatprep.subr.mxu0 0.0
    %754 = vmatpush1.xpose.msra.mxu0 0.0
    %755 = vmatprep.subr.mxu0 0.0
    %756 = vmatpush1.xpose.msra.mxu0 0.0
    %757 = vmatprep.subr.mxu0 0.0
    %758 = vmatpush1.xpose.msra.mxu0 0.0
    %759 = vmatprep.subr.mxu0 0.0
    %760 = vmatpush1.xpose.msra.mxu0 0.0
    %761 = vmatprep.subr.mxu0 0.0
    %762 = vmatpush1.xpose.msra.mxu0 0.0
    %763 = vmatprep.subr.mxu0 0.0
    %764 = vmatpush1.xpose.msra.mxu0 0.0
    %765 = vmatprep.subr.mxu0 0.0
    %766 = vmatpush1.xpose.msra.mxu0 0.0
    %767 = vmatprep.subr.mxu0 0.0
    %768 = vmatpush1.xpose.msra.mxu0 0.0
    %769 = vmatprep.subr.mxu0 0.0
    %770 = vmatpush1.xpose.msra.mxu0 0.0
    %771 = vmatprep.subr.mxu0 0.0
    %772 = vmatpush1.xpose.msra.mxu0 0.0
    %773 = vmatprep.subr.mxu0 0.0
    %774 = vmatpush1.xpose.msra.mxu0 0.0
    %775 = vmatprep.subr.mxu0 0.0
    %776 = vmatpush1.xpose.msra.mxu0 0.0
    %777 = vmatprep.subr.mxu0 0.0
    %778 = vmatpush1.xpose.msra.mxu0 0.0
    %779 = vmatprep.subr.mxu0 0.0
    %780 = vmatpush1.xpose.msra.mxu0 0.0
    %781 = vmatprep.subr.mxu0 0.0
    %782 = vmatpush1.xpose.msra.mxu0 0.0
    %783 = vmatprep.subr.mxu0 0.0
    %784 = vmatpush1.xpose.msra.mxu0 0.0
    %785 = vmatprep.mubr.f32.mxu0 0.0
    %786 = vmatmul.mubr.f32.gmra.mrb[0].mxu0 %v717
    %v787 = vpop.f32.mrb[0].mxu0
    %v788 = vadd.f32 0.0, %v787
    %v789 = vpop.f32.mrb[0].mxu0
    %790 = vdwg.mxu0
    %791 = vrot.lane.b32.xlu0 %v714, 96
    %v792 = vpop.permute.xlu0 %791
    %v793 = vsel %vm376, %v714, 0
    %v795 = vsel %vm376, %v792, 0
    %797 = vmatprep.subr.mxu0 0.0
    %798 = vmatpush1.xpose.msra.mxu0 %v795
    %799 = vmatprep.subr.mxu0 0.0
    %800 = vmatpush1.xpose.msra.mxu0 0.0
    %801 = vmatprep.subr.mxu0 0.0
    %802 = vmatpush1.xpose.msra.mxu0 0.0
    %803 = vmatprep.subr.mxu0 0.0
    %804 = vmatpush1.xpose.msra.mxu0 0.0
    %805 = vmatprep.subr.mxu0 0.0
    %806 = vmatpush1.xpose.msra.mxu0 0.0
    %807 = vmatprep.subr.mxu0 0.0
    %808 = vmatpush1.xpose.msra.mxu0 0.0
    %809 = vmatprep.subr.mxu0 0.0
    %810 = vmatpush1.xpose.msra.mxu0 0.0
    %811 = vmatprep.subr.mxu0 0.0
    %812 = vmatpush1.xpose.msra.mxu0 0.0
    %813 = vmatprep.subr.mxu0 0.0
    %814 = vmatpush1.xpose.msra.mxu0 0.0
    %815 = vmatprep.subr.mxu0 0.0
    %816 = vmatpush1.xpose.msra.mxu0 0.0
    %817 = vmatprep.subr.mxu0 0.0
    %818 = vmatpush1.xpose.msra.mxu0 0.0
    %819 = vmatprep.subr.mxu0 0.0
    %820 = vmatpush1.xpose.msra.mxu0 0.0
    %821 = vmatprep.subr.mxu0 0.0
    %822 = vmatpush1.xpose.msra.mxu0 0.0
    %823 = vmatprep.subr.mxu0 0.0
    %824 = vmatpush1.xpose.msra.mxu0 0.0
    %825 = vmatprep.subr.mxu0 0.0
    %826 = vmatpush1.xpose.msra.mxu0 0.0
    %827 = vmatprep.subr.mxu0 0.0
    %828 = vmatpush1.xpose.msra.mxu0 0.0
    %829 = vmatprep.subr.mxu0 0.0
    %830 = vmatpush1.xpose.msra.mxu0 0.0
    %831 = vmatprep.subr.mxu0 0.0
    %832 = vmatpush1.xpose.msra.mxu0 0.0
    %833 = vmatprep.subr.mxu0 0.0
    %834 = vmatpush1.xpose.msra.mxu0 0.0
    %835 = vmatprep.subr.mxu0 0.0
    %836 = vmatpush1.xpose.msra.mxu0 0.0
    %837 = vmatprep.subr.mxu0 0.0
    %838 = vmatpush1.xpose.msra.mxu0 0.0
    %839 = vmatprep.subr.mxu0 0.0
    %840 = vmatpush1.xpose.msra.mxu0 0.0
    %841 = vmatprep.subr.mxu0 0.0
    %842 = vmatpush1.xpose.msra.mxu0 0.0
    %843 = vmatprep.subr.mxu0 0.0
    %844 = vmatpush1.xpose.msra.mxu0 0.0
    %845 = vmatprep.subr.mxu0 0.0
    %846 = vmatpush1.xpose.msra.mxu0 0.0
    %847 = vmatprep.subr.mxu0 0.0
    %848 = vmatpush1.xpose.msra.mxu0 0.0
    %849 = vmatprep.subr.mxu0 0.0
    %850 = vmatpush1.xpose.msra.mxu0 0.0
    %851 = vmatprep.subr.mxu0 0.0
    %852 = vmatpush1.xpose.msra.mxu0 0.0
    %853 = vmatprep.subr.mxu0 0.0
    %854 = vmatpush1.xpose.msra.mxu0 0.0
    %855 = vmatprep.subr.mxu0 0.0
    %856 = vmatpush1.xpose.msra.mxu0 0.0
    %857 = vmatprep.subr.mxu0 0.0
    %858 = vmatpush1.xpose.msra.mxu0 0.0
    %859 = vmatprep.subr.mxu0 0.0
    %860 = vmatpush1.xpose.msra.mxu0 0.0
    %861 = vmatprep.mubr.f32.mxu0 0.0
    %862 = vmatmul.mubr.f32.gmra.mrb[0].mxu0 %v793
    %v863 = vpop.f32.mrb[0].mxu0
    %v864 = vadd.f32 0.0, %v863
    %v865 = vpop.f32.mrb[0].mxu0
    %866 = vdwg.mxu0
    %vm867 = vcmp.gt.f32.partialorder %v268, 0.5
    %v868 = vsel %vm867, 1, 0
    %vm869 = vcmp.eq.s32.totalorder %v868, 1
    %v870 = vsel %vm869, -1e+30, %v788
    %v871 = vsel %vm869, -1e+30, %v864
    %v872 = vsel %vm532, %v870, -inf
    %873 = vmax.xlane.f32.xlu0 %v872
    %v874 = vpop.xlane.xlu0 %873
    %v875 = vsel %vm532, %v871, -inf
    %876 = vmax.xlane.f32.xlu0 %v875
    %v877 = vpop.xlane.xlu0 %876
    %v878 = vsub.f32 %v870, %v874
    %v879 = vsub.f32 %v871, %v877
    %v880 = vmul.f32 %v878, 1.442695
    %v881 = vpow.pop %v880
    %v882 = vmul.f32 %v879, 1.442695
    %v883 = vpow.pop %v882
    %v884 = vsel %vm532, %v881, 0.0
    %885 = vadd.xlane.f32.xlu0 %v884
    %v886 = vpop.xlane.xlu0 %885
    %v887 = vsel %vm532, %v883, 0.0
    %888 = vadd.xlane.f32.xlu0 %v887
    %v889 = vpop.xlane.xlu0 %888
    %v890 = vrcp.pop %v886
    %v891 = vrcp.pop %v889
    %v892 = vmul.f32 %v881, %v890
    %v893 = vmul.f32 %v883, %v891
    %894 = vrot.lane.b32.xlu0 %v361, 64
    %v895 = vpop.permute.xlu0 %894
    %v898 = vsel %vm532, %v892, 0
    %900 = vmatprep.subr.mxu0 0.0
    %901 = vmatpush1.msra.mxu0 %v895
    %902 = vmatprep.subr.mxu0 0.0
    %903 = vmatpush1.msra.mxu0 0.0
    %904 = vmatprep.subr.mxu0 0.0
    %905 = vmatpush1.msra.mxu0 0.0
    %906 = vmatprep.subr.mxu0 0.0
    %907 = vmatpush1.msra.mxu0 0.0
    %908 = vmatprep.subr.mxu0 0.0
    %909 = vmatpush1.msra.mxu0 0.0
    %910 = vmatprep.subr.mxu0 0.0
    %911 = vmatpush1.msra.mxu0 0.0
    %912 = vmatprep.subr.mxu0 0.0
    %913 = vmatpush1.msra.mxu0 0.0
    %914 = vmatprep.subr.mxu0 0.0
    %915 = vmatpush1.msra.mxu0 0.0
    %916 = vmatprep.subr.mxu0 0.0
    %917 = vmatpush1.msra.mxu0 0.0
    %918 = vmatprep.subr.mxu0 0.0
    %919 = vmatpush1.msra.mxu0 0.0
    %920 = vmatprep.subr.mxu0 0.0
    %921 = vmatpush1.msra.mxu0 0.0
    %922 = vmatprep.subr.mxu0 0.0
    %923 = vmatpush1.msra.mxu0 0.0
    %924 = vmatprep.subr.mxu0 0.0
    %925 = vmatpush1.msra.mxu0 0.0
    %926 = vmatprep.subr.mxu0 0.0
    %927 = vmatpush1.msra.mxu0 0.0
    %928 = vmatprep.subr.mxu0 0.0
    %929 = vmatpush1.msra.mxu0 0.0
    %930 = vmatprep.subr.mxu0 0.0
    %931 = vmatpush1.msra.mxu0 0.0
    %932 = vmatprep.subr.mxu0 0.0
    %933 = vmatpush1.msra.mxu0 0.0
    %934 = vmatprep.subr.mxu0 0.0
    %935 = vmatpush1.msra.mxu0 0.0
    %936 = vmatprep.subr.mxu0 0.0
    %937 = vmatpush1.msra.mxu0 0.0
    %938 = vmatprep.subr.mxu0 0.0
    %939 = vmatpush1.msra.mxu0 0.0
    %940 = vmatprep.subr.mxu0 0.0
    %941 = vmatpush1.msra.mxu0 0.0
    %942 = vmatprep.subr.mxu0 0.0
    %943 = vmatpush1.msra.mxu0 0.0
    %944 = vmatprep.subr.mxu0 0.0
    %945 = vmatpush1.msra.mxu0 0.0
    %946 = vmatprep.subr.mxu0 0.0
    %947 = vmatpush1.msra.mxu0 0.0
    %948 = vmatprep.subr.mxu0 0.0
    %949 = vmatpush1.msra.mxu0 0.0
    %950 = vmatprep.subr.mxu0 0.0
    %951 = vmatpush1.msra.mxu0 0.0
    %952 = vmatprep.subr.mxu0 0.0
    %953 = vmatpush1.msra.mxu0 0.0
    %954 = vmatprep.subr.mxu0 0.0
    %955 = vmatpush1.msra.mxu0 0.0
    %956 = vmatprep.subr.mxu0 0.0
    %957 = vmatpush1.msra.mxu0 0.0
    %958 = vmatprep.subr.mxu0 0.0
    %959 = vmatpush1.msra.mxu0 0.0
    %960 = vmatprep.subr.mxu0 0.0
    %961 = vmatpush1.msra.mxu0 0.0
    %962 = vmatprep.subr.mxu0 0.0
    %963 = vmatpush1.msra.mxu0 0.0
    %964 = vmatprep.mubr.f32.mxu0 0.0
    %965 = vmatmul.mubr.f32.gmra.mrb[0].mxu0 %v898
    %v966 = vpop.f32.mrb[0].mxu0
    %v967 = vadd.f32 0.0, %v966
    %v968 = vpop.f32.mrb[0].mxu0
    %969 = vdwg.mxu0
    %970 = vrot.lane.b32.xlu0 %v714, 64
    %v971 = vpop.permute.xlu0 %970
    %v974 = vsel %vm532, %v893, 0
    %976 = vmatprep.subr.mxu0 0.0
    %977 = vmatpush1.msra.mxu0 %v971
    %978 = vmatprep.subr.mxu0 0.0
    %979 = vmatpush1.msra.mxu0 0.0
    %980 = vmatprep.subr.mxu0 0.0
    %981 = vmatpush1.msra.mxu0 0.0
    %982 = vmatprep.subr.mxu0 0.0
    %983 = vmatpush1.msra.mxu0 0.0
    %984 = vmatprep.subr.mxu0 0.0
    %985 = vmatpush1.msra.mxu0 0.0
    %986 = vmatprep.subr.mxu0 0.0
    %987 = vmatpush1.msra.mxu0 0.0
    %988 = vmatprep.subr.mxu0 0.0
    %989 = vmatpush1.msra.mxu0 0.0
    %990 = vmatprep.subr.mxu0 0.0
    %991 = vmatpush1.msra.mxu0 0.0
    %992 = vmatprep.subr.mxu0 0.0
    %993 = vmatpush1.msra.mxu0 0.0
    %994 = vmatprep.subr.mxu0 0.0
    %995 = vmatpush1.msra.mxu0 0.0
    %996 = vmatprep.subr.mxu0 0.0
    %997 = vmatpush1.msra.mxu0 0.0
    %998 = vmatprep.subr.mxu0 0.0
    %999 = vmatpush1.msra.mxu0 0.0
    %1000 = vmatprep.subr.mxu0 0.0
    %1001 = vmatpush1.msra.mxu0 0.0
    %1002 = vmatprep.subr.mxu0 0.0
    %1003 = vmatpush1.msra.mxu0 0.0
    %1004 = vmatprep.subr.mxu0 0.0
    %1005 = vmatpush1.msra.mxu0 0.0
    %1006 = vmatprep.subr.mxu0 0.0
    %1007 = vmatpush1.msra.mxu0 0.0
    %1008 = vmatprep.subr.mxu0 0.0
    %1009 = vmatpush1.msra.mxu0 0.0
    %1010 = vmatprep.subr.mxu0 0.0
    %1011 = vmatpush1.msra.mxu0 0.0
    %1012 = vmatprep.subr.mxu0 0.0
    %1013 = vmatpush1.msra.mxu0 0.0
    %1014 = vmatprep.subr.mxu0 0.0
    %1015 = vmatpush1.msra.mxu0 0.0
    %1016 = vmatprep.subr.mxu0 0.0
    %1017 = vmatpush1.msra.mxu0 0.0
    %1018 = vmatprep.subr.mxu0 0.0
    %1019 = vmatpush1.msra.mxu0 0.0
    %1020 = vmatprep.subr.mxu0 0.0
    %1021 = vmatpush1.msra.mxu0 0.0
    %1022 = vmatprep.subr.mxu0 0.0
    %1023 = vmatpush1.msra.mxu0 0.0
    %1024 = vmatprep.subr.mxu0 0.0
    %1025 = vmatpush1.msra.mxu0 0.0
    %1026 = vmatprep.subr.mxu0 0.0
    %1027 = vmatpush1.msra.mxu0 0.0
    %1028 = vmatprep.subr.mxu0 0.0
    %1029 = vmatpush1.msra.mxu0 0.0
    %1030 = vmatprep.subr.mxu0 0.0
    %1031 = vmatpush1.msra.mxu0 0.0
    %1032 = vmatprep.subr.mxu0 0.0
    %1033 = vmatpush1.msra.mxu0 0.0
    %1034 = vmatprep.subr.mxu0 0.0
    %1035 = vmatpush1.msra.mxu0 0.0
    %1036 = vmatprep.subr.mxu0 0.0
    %1037 = vmatpush1.msra.mxu0 0.0
    %1038 = vmatprep.subr.mxu0 0.0
    %1039 = vmatpush1.msra.mxu0 0.0
    %1040 = vmatprep.mubr.f32.mxu0 0.0
    %1041 = vmatmul.mubr.f32.gmra.mrb[0].mxu0 %v974
    %v1042 = vpop.f32.mrb[0].mxu0
    %v1043 = vadd.f32 0.0, %v1042
    %v1044 = vpop.f32.mrb[0].mxu0
    %1045 = vdwg.mxu0
    %1047 = vrot.lane.b32.xlu0 %v1043, 16
    %v1048 = vpop.permute.xlu0 %1047
    %v1050 = vsel %vm376, %v967, %v1048
    %v1052 = vlaneseq
    %v1053 = vshrl.u32 %v1052, 7
    %v1054 = vsub.s32 0, %v1053
    %v1055 = vrot.slane %v368, %v1054
    %v1058 = vsel %vm282, %v711, 0
    %v1061 = vsel %vm282, %v1050, 0
    %1063 = vmatprep.subr.mxu0 0.0
    %1064 = vmatpush1.msra.mxu0 %v364
    %1065 = vmatprep.subr.mxu0 0.0
    %1066 = vmatpush1.msra.mxu0 %v365
    %1067 = vmatprep.subr.mxu0 0.0
    %1068 = vmatpush1.msra.mxu0 %v366
    %1069 = vmatprep.subr.mxu0 0.0
    %1070 = vmatpush1.msra.mxu0 %v367
    %1071 = vmatprep.subr.mxu0 0.0
    %1072 = vmatpush1.msra.mxu0 0.0
    %1073 = vmatprep.subr.mxu0 0.0
    %1074 = vmatpush1.msra.mxu0 0.0
    %1075 = vmatprep.subr.mxu0 0.0
    %1076 = vmatpush1.msra.mxu0 0.0
    %1077 = vmatprep.subr.mxu0 0.0
    %1078 = vmatpush1.msra.mxu0 0.0
    %1079 = vmatprep.subr.mxu0 0.0
    %1080 = vmatpush1.msra.mxu0 0.0
    %1081 = vmatprep.subr.mxu0 0.0
    %1082 = vmatpush1.msra.mxu0 0.0
    %1083 = vmatprep.subr.mxu0 0.0
    %1084 = vmatpush1.msra.mxu0 0.0
    %1085 = vmatprep.subr.mxu0 0.0
    %1086 = vmatpush1.msra.mxu0 0.0
    %1087 = vmatprep.subr.mxu0 0.0
    %1088 = vmatpush1.msra.mxu0 0.0
    %1089 = vmatprep.subr.mxu0 0.0
    %1090 = vmatpush1.msra.mxu0 0.0
    %1091 = vmatprep.subr.mxu0 0.0
    %1092 = vmatpush1.msra.mxu0 0.0
    %1093 = vmatprep.subr.mxu0 0.0
    %1094 = vmatpush1.msra.mxu0 0.0
    %1095 = vmatprep.subr.mxu0 0.0
    %1096 = vmatpush1.msra.mxu0 0.0
    %1097 = vmatprep.subr.mxu0 0.0
    %1098 = vmatpush1.msra.mxu0 0.0
    %1099 = vmatprep.subr.mxu0 0.0
    %1100 = vmatpush1.msra.mxu0 0.0
    %1101 = vmatprep.subr.mxu0 0.0
    %1102 = vmatpush1.msra.mxu0 0.0
    %1103 = vmatprep.subr.mxu0 0.0
    %1104 = vmatpush1.msra.mxu0 0.0
    %1105 = vmatprep.subr.mxu0 0.0
    %1106 = vmatpush1.msra.mxu0 0.0
    %1107 = vmatprep.subr.mxu0 0.0
    %1108 = vmatpush1.msra.mxu0 0.0
    %1109 = vmatprep.subr.mxu0 0.0
    %1110 = vmatpush1.msra.mxu0 0.0
    %1111 = vmatprep.subr.mxu0 0.0
    %1112 = vmatpush1.msra.mxu0 0.0
    %1113 = vmatprep.subr.mxu0 0.0
    %1114 = vmatpush1.msra.mxu0 0.0
    %1115 = vmatprep.subr.mxu0 0.0
    %1116 = vmatpush1.msra.mxu0 0.0
    %1117 = vmatprep.subr.mxu0 0.0
    %1118 = vmatpush1.msra.mxu0 0.0
    %1119 = vmatprep.subr.mxu0 0.0
    %1120 = vmatpush1.msra.mxu0 0.0
    %1121 = vmatprep.subr.mxu0 0.0
    %1122 = vmatpush1.msra.mxu0 0.0
    %1123 = vmatprep.subr.mxu0 0.0
    %1124 = vmatpush1.msra.mxu0 0.0
    %1125 = vmatprep.subr.mxu0 0.0
    %1126 = vmatpush1.msra.mxu0 0.0
    %1127 = vmatprep.mubr.f32.mxu0 0.0
    %1128 = vmatmul.mubr.f32.gmra.mrb[0].mxu0 %v1058
    %v1129 = vpop.f32.mrb[0].mxu0
    %v1130 = vadd.f32 %v1055, %v1129
    %v1131 = vpop.f32.mrb[0].mxu0
    %1132 = vmatprep.mubr.f32.mxu0 0.0
    %1133 = vmatmul.mubr.f32.gmra.mrb[0].mxu0 %v1061
    %v1134 = vpop.f32.mrb[0].mxu0
    %v1135 = vadd.f32 %v1055, %v1134
    %v1136 = vpop.f32.mrb[0].mxu0
    %1137 = vdwg.mxu0
    %v1138 = vadd.f32 %v263, %v1130
    %v1139 = vadd.f32 %v264, %v1135
    %v1140 = vsel %vm282, %v1138, 0.0
    %1141 = vadd.xlane.f32.xlu0 %v1140
    %v1142 = vpop.xlane.xlu0 %1141
    %v1143 = vsel %vm282, %v1139, 0.0
    %1144 = vadd.xlane.f32.xlu0 %v1143
    %v1145 = vpop.xlane.xlu0 %1144
    %v1146 = vrcp.pop 32.0
    %v1147 = vmul.f32 %v1142, %v1146
    %v1148 = vmul.f32 %v1145, %v1146
    %v1149 = vsub.f32 %v1138, %v1147
    %v1150 = vsub.f32 %v1139, %v1148
    %v1151 = vmul.f32 %v1149, %v1149
    %v1152 = vmul.f32 %v1150, %v1150
    %v1153 = vsel %vm282, %v1151, 0.0
    %1154 = vadd.xlane.f32.xlu0 %v1153
    %v1155 = vpop.xlane.xlu0 %1154
    %v1156 = vsel %vm282, %v1152, 0.0
    %1157 = vadd.xlane.f32.xlu0 %v1156
    %v1158 = vpop.xlane.xlu0 %1157
    %v1159 = vmul.f32 %v1155, %v1146
    %v1160 = vmul.f32 %v1158, %v1146
    %v1161 = vadd.f32 %v1159, 1e-06
    %v1162 = vadd.f32 %v1160, 1e-06
    %v1163 = vrsqrt.pop %v1161
    %v1164 = vrsqrt.pop %v1162
    %v1165 = vmul.f32 %v1149, %v1163
    %v1166 = vmul.f32 %v1150, %v1164
    %v1168 = vlaneseq
    %v1169 = vshrl.u32 %v1168, 7
    %v1170 = vsub.s32 0, %v1169
    %v1171 = vrot.slane %v369, %v1170
    %v1173 = vmul.f32 %v1165, %v1171
    %v1174 = vmul.f32 %v1166, %v1171
    %v1176 = vlaneseq
    %v1177 = vshrl.u32 %v1176, 7
    %v1178 = vsub.s32 0, %v1177
    %v1179 = vrot.slane %v370, %v1178
    %v1181 = vadd.f32 %v1173, %v1179
    %v1182 = vadd.f32 %v1174, %v1179
    %v1183 = vld [vmem:[%s10] sm:$0xff]
    %v1184 = vld [vmem:[%s10 + $0x8] sm:$0xff]
    %v1185 = vld [vmem:[%s10 + $0x10] sm:$0xff]
    %v1186 = vld [vmem:[%s10 + $0x18] sm:$0xff]
    %v1187 = vld [vmem:[#allocation16] sm:$0x1]
    %v1189 = vlaneseq
    %v1190 = vshrl.u32 %v1189, 7
    %v1191 = vsub.s32 0, %v1190
    %v1192 = vrot.slane %v1187, %v1191
    %v1195 = vsel %vm282, %v1181, 0
    %v1198 = vsel %vm282, %v1182, 0
    %1200 = vmatprep.subr.mxu0 0.0
    %1201 = vmatpush1.msra.mxu0 %v1183
    %1202 = vmatprep.subr.mxu0 0.0
    %1203 = vmatpush1.msra.mxu0 %v1184
    %1204 = vmatprep.subr.mxu0 0.0
    %1205 = vmatpush1.msra.mxu0 %v1185
    %1206 = vmatprep.subr.mxu0 0.0
    %1207 = vmatpush1.msra.mxu0 %v1186
    %1208 = vmatprep.subr.mxu0 0.0
    %1209 = vmatpush1.msra.mxu0 0.0
    %1210 = vmatprep.subr.mxu0 0.0
    %1211 = vmatpush1.msra.mxu0 0.0
    %1212 = vmatprep.subr.mxu0 0.0
    %1213 = vmatpush1.msra.mxu0 0.0
    %1214 = vmatprep.subr.mxu0 0.0
    %1215 = vmatpush1.msra.mxu0 0.0
    %1216 = vmatprep.subr.mxu0 0.0
    %1217 = vmatpush1.msra.mxu0 0.0
    %1218 = vmatprep.subr.mxu0 0.0
    %1219 = vmatpush1.msra.mxu0 0.0
    %1220 = vmatprep.subr.mxu0 0.0
    %1221 = vmatpush1.msra.mxu0 0.0
    %1222 = vmatprep.subr.mxu0 0.0
    %1223 = vmatpush1.msra.mxu0 0.0
    %1224 = vmatprep.subr.mxu0 0.0
    %1225 = vmatpush1.msra.mxu0 0.0
    %1226 = vmatprep.subr.mxu0 0.0
    %1227 = vmatpush1.msra.mxu0 0.0
    %1228 = vmatprep.subr.mxu0 0.0
    %1229 = vmatpush1.msra.mxu0 0.0
    %1230 = vmatprep.subr.mxu0 0.0
    %1231 = vmatpush1.msra.mxu0 0.0
    %1232 = vmatprep.subr.mxu0 0.0
    %1233 = vmatpush1.msra.mxu0 0.0
    %1234 = vmatprep.subr.mxu0 0.0
    %1235 = vmatpush1.msra.mxu0 0.0
    %1236 = vmatprep.subr.mxu0 0.0
    %1237 = vmatpush1.msra.mxu0 0.0
    %1238 = vmatprep.subr.mxu0 0.0
    %1239 = vmatpush1.msra.mxu0 0.0
    %1240 = vmatprep.subr.mxu0 0.0
    %1241 = vmatpush1.msra.mxu0 0.0
    %1242 = vmatprep.subr.mxu0 0.0
    %1243 = vmatpush1.msra.mxu0 0.0
    %1244 = vmatprep.subr.mxu0 0.0
    %1245 = vmatpush1.msra.mxu0 0.0
    %1246 = vmatprep.subr.mxu0 0.0
    %1247 = vmatpush1.msra.mxu0 0.0
    %1248 = vmatprep.subr.mxu0 0.0
    %1249 = vmatpush1.msra.mxu0 0.0
    %1250 = vmatprep.subr.mxu0 0.0
    %1251 = vmatpush1.msra.mxu0 0.0
    %1252 = vmatprep.subr.mxu0 0.0
    %1253 = vmatpush1.msra.mxu0 0.0
    %1254 = vmatprep.subr.mxu0 0.0
    %1255 = vmatpush1.msra.mxu0 0.0
    %1256 = vmatprep.subr.mxu0 0.0
    %1257 = vmatpush1.msra.mxu0 0.0
    %1258 = vmatprep.subr.mxu0 0.0
    %1259 = vmatpush1.msra.mxu0 0.0
    %1260 = vmatprep.subr.mxu0 0.0
    %1261 = vmatpush1.msra.mxu0 0.0
    %1262 = vmatprep.subr.mxu0 0.0
    %1263 = vmatpush1.msra.mxu0 0.0
    %1264 = vmatprep.mubr.f32.mxu0 0.0
    %1265 = vmatmul.mubr.f32.gmra.mrb[0].mxu0 %v1195
    %v1266 = vpop.f32.mrb[0].mxu0
    %v1267 = vadd.f32 %v1192, %v1266
    %v1268 = vpop.f32.mrb[0].mxu0
    %1269 = vmatprep.mubr.f32.mxu0 0.0
    %1270 = vmatmul.mubr.f32.gmra.mrb[0].mxu0 %v1198
    %v1271 = vpop.f32.mrb[0].mxu0
    %v1272 = vadd.f32 %v1192, %v1271
    %v1273 = vpop.f32.mrb[0].mxu0
    %1274 = vdwg.mxu0
    %v1275 = vld [vmem:[%s12] sm:$0xff]
    %v1276 = vld [vmem:[%s12 + $0x8] sm:$0xff]
    %v1277 = vld [vmem:[%s12 + $0x10] sm:$0xff]
    %v1278 = vld [vmem:[%s12 + $0x18] sm:$0xff]
    %v1279 = vld [vmem:[#allocation17] sm:$0x1]
    %v1281 = vlaneseq
    %v1282 = vshrl.u32 %v1281, 7
    %v1283 = vsub.s32 0, %v1282
    %v1284 = vrot.slane %v1279, %v1283
    %v1287 = vsel %vm282, %v265, 0
    %v1290 = vsel %vm282, %v266, 0
    %1292 = vmatprep.subr.mxu0 0.0
    %1293 = vmatpush1.msra.mxu0 %v1275
    %1294 = vmatprep.subr.mxu0 0.0
    %1295 = vmatpush1.msra.mxu0 %v1276
    %1296 = vmatprep.subr.mxu0 0.0
    %1297 = vmatpush1.msra.mxu0 %v1277
    %1298 = vmatprep.subr.mxu0 0.0
    %1299 = vmatpush1.msra.mxu0 %v1278
    %1300 = vmatprep.subr.mxu0 0.0
    %1301 = vmatpush1.msra.mxu0 0.0
    %1302 = vmatprep.subr.mxu0 0.0
    %1303 = vmatpush1.msra.mxu0 0.0
    %1304 = vmatprep.subr.mxu0 0.0
    %1305 = vmatpush1.msra.mxu0 0.0
    %1306 = vmatprep.subr.mxu0 0.0
    %1307 = vmatpush1.msra.mxu0 0.0
    %1308 = vmatprep.subr.mxu0 0.0
    %1309 = vmatpush1.msra.mxu0 0.0
    %1310 = vmatprep.subr.mxu0 0.0
    %1311 = vmatpush1.msra.mxu0 0.0
    %1312 = vmatprep.subr.mxu0 0.0
    %1313 = vmatpush1.msra.mxu0 0.0
    %1314 = vmatprep.subr.mxu0 0.0
    %1315 = vmatpush1.msra.mxu0 0.0
    %1316 = vmatprep.subr.mxu0 0.0
    %1317 = vmatpush1.msra.mxu0 0.0
    %1318 = vmatprep.subr.mxu0 0.0
    %1319 = vmatpush1.msra.mxu0 0.0
    %1320 = vmatprep.subr.mxu0 0.0
    %1321 = vmatpush1.msra.mxu0 0.0
    %1322 = vmatprep.subr.mxu0 0.0
    %1323 = vmatpush1.msra.mxu0 0.0
    %1324 = vmatprep.subr.mxu0 0.0
    %1325 = vmatpush1.msra.mxu0 0.0
    %1326 = vmatprep.subr.mxu0 0.0
    %1327 = vmatpush1.msra.mxu0 0.0
    %1328 = vmatprep.subr.mxu0 0.0
    %1329 = vmatpush1.msra.mxu0 0.0
    %1330 = vmatprep.subr.mxu0 0.0
    %1331 = vmatpush1.msra.mxu0 0.0
    %1332 = vmatprep.subr.mxu0 0.0
    %1333 = vmatpush1.msra.mxu0 0.0
    %1334 = vmatprep.subr.mxu0 0.0
    %1335 = vmatpush1.msra.mxu0 0.0
    %1336 = vmatprep.subr.mxu0 0.0
    %1337 = vmatpush1.msra.mxu0 0.0
    %1338 = vmatprep.subr.mxu0 0.0
    %1339 = vmatpush1.msra.mxu0 0.0
    %1340 = vmatprep.subr.mxu0 0.0
    %1341 = vmatpush1.msra.mxu0 0.0
    %1342 = vmatprep.subr.mxu0 0.0
    %1343 = vmatpush1.msra.mxu0 0.0
    %1344 = vmatprep.subr.mxu0 0.0
    %1345 = vmatpush1.msra.mxu0 0.0
    %1346 = vmatprep.subr.mxu0 0.0
    %1347 = vmatpush1.msra.mxu0 0.0
    %1348 = vmatprep.subr.mxu0 0.0
    %1349 = vmatpush1.msra.mxu0 0.0
    %1350 = vmatprep.subr.mxu0 0.0
    %1351 = vmatpush1.msra.mxu0 0.0
    %1352 = vmatprep.subr.mxu0 0.0
    %1353 = vmatpush1.msra.mxu0 0.0
    %1354 = vmatprep.subr.mxu0 0.0
    %1355 = vmatpush1.msra.mxu0 0.0
    %1356 = vmatprep.mubr.f32.mxu0 0.0
    %1357 = vmatmul.mubr.f32.gmra.mrb[0].mxu0 %v1287
    %v1358 = vpop.f32.mrb[0].mxu0
    %v1359 = vadd.f32 %v1284, %v1358
    %v1360 = vpop.f32.mrb[0].mxu0
    %1361 = vmatprep.mubr.f32.mxu0 0.0
    %1362 = vmatmul.mubr.f32.gmra.mrb[0].mxu0 %v1290
    %v1363 = vpop.f32.mrb[0].mxu0
    %v1364 = vadd.f32 %v1284, %v1363
    %v1365 = vpop.f32.mrb[0].mxu0
    %1366 = vdwg.mxu0
    %v1367 = vld [vmem:[#allocation19] sm:$0xff]
    %v1368 = vld [vmem:[#allocation19 + $0x8] sm:$0xff]
    %v1369 = vld [vmem:[#allocation19 + $0x10] sm:$0xff]
    %v1370 = vld [vmem:[#allocation19 + $0x18] sm:$0xff]
    %v1371 = vld [vmem:[#allocation20] sm:$0x1]
    %v1372 = vld [vmem:[#allocation22] sm:$0x1]
    %v1373 = vld [vmem:[#allocation23] sm:$0x1]
    %1375 = vrot.lane.b32.xlu0 %v1267, 112
    %v1376 = vpop.permute.xlu0 %1375
    %1378 = vrot.lane.b32.xlu0 %v1359, 112
    %v1379 = vpop.permute.xlu0 %1378
    %v1380 = vsel %vm376, %v1267, 0
    %v1382 = vsel %vm376, %v1359, 0
    %1384 = vmatprep.subr.mxu0 0.0
    %1385 = vmatpush1.xpose.msra.mxu0 %v1382
    %1386 = vmatprep.subr.mxu0 0.0
    %1387 = vmatpush1.xpose.msra.mxu0 0.0
    %1388 = vmatprep.subr.mxu0 0.0
    %1389 = vmatpush1.xpose.msra.mxu0 0.0
    %1390 = vmatprep.subr.mxu0 0.0
    %1391 = vmatpush1.xpose.msra.mxu0 0.0
    %1392 = vmatprep.subr.mxu0 0.0
    %1393 = vmatpush1.xpose.msra.mxu0 0.0
    %1394 = vmatprep.subr.mxu0 0.0
    %1395 = vmatpush1.xpose.msra.mxu0 0.0
    %1396 = vmatprep.subr.mxu0 0.0
    %1397 = vmatpush1.xpose.msra.mxu0 0.0
    %1398 = vmatprep.subr.mxu0 0.0
    %1399 = vmatpush1.xpose.msra.mxu0 0.0
    %1400 = vmatprep.subr.mxu0 0.0
    %1401 = vmatpush1.xpose.msra.mxu0 0.0
    %1402 = vmatprep.subr.mxu0 0.0
    %1403 = vmatpush1.xpose.msra.mxu0 0.0
    %1404 = vmatprep.subr.mxu0 0.0
    %1405 = vmatpush1.xpose.msra.mxu0 0.0
    %1406 = vmatprep.subr.mxu0 0.0
    %1407 = vmatpush1.xpose.msra.mxu0 0.0
    %1408 = vmatprep.subr.mxu0 0.0
    %1409 = vmatpush1.xpose.msra.mxu0 0.0
    %1410 = vmatprep.subr.mxu0 0.0
    %1411 = vmatpush1.xpose.msra.mxu0 0.0
    %1412 = vmatprep.subr.mxu0 0.0
    %1413 = vmatpush1.xpose.msra.mxu0 0.0
    %1414 = vmatprep.subr.mxu0 0.0
    %1415 = vmatpush1.xpose.msra.mxu0 0.0
    %1416 = vmatprep.subr.mxu0 0.0
    %1417 = vmatpush1.xpose.msra.mxu0 0.0
    %1418 = vmatprep.subr.mxu0 0.0
    %1419 = vmatpush1.xpose.msra.mxu0 0.0
    %1420 = vmatprep.subr.mxu0 0.0
    %1421 = vmatpush1.xpose.msra.mxu0 0.0
    %1422 = vmatprep.subr.mxu0 0.0
    %1423 = vmatpush1.xpose.msra.mxu0 0.0
    %1424 = vmatprep.subr.mxu0 0.0
    %1425 = vmatpush1.xpose.msra.mxu0 0.0
    %1426 = vmatprep.subr.mxu0 0.0
    %1427 = vmatpush1.xpose.msra.mxu0 0.0
    %1428 = vmatprep.subr.mxu0 0.0
    %1429 = vmatpush1.xpose.msra.mxu0 0.0
    %1430 = vmatprep.subr.mxu0 0.0
    %1431 = vmatpush1.xpose.msra.mxu0 0.0
    %1432 = vmatprep.subr.mxu0 0.0
    %1433 = vmatpush1.xpose.msra.mxu0 0.0
    %1434 = vmatprep.subr.mxu0 0.0
    %1435 = vmatpush1.xpose.msra.mxu0 0.0
    %1436 = vmatprep.subr.mxu0 0.0
    %1437 = vmatpush1.xpose.msra.mxu0 0.0
    %1438 = vmatprep.subr.mxu0 0.0
    %1439 = vmatpush1.xpose.msra.mxu0 0.0
    %1440 = vmatprep.subr.mxu0 0.0
    %1441 = vmatpush1.xpose.msra.mxu0 0.0
    %1442 = vmatprep.subr.mxu0 0.0
    %1443 = vmatpush1.xpose.msra.mxu0 0.0
    %1444 = vmatprep.subr.mxu0 0.0
    %1445 = vmatpush1.xpose.msra.mxu0 0.0
    %1446 = vmatprep.subr.mxu0 0.0
    %1447 = vmatpush1.xpose.msra.mxu0 0.0
    %1448 = vmatprep.mubr.f32.mxu0 0.0
    %1449 = vmatmul.mubr.f32.gmra.mrb[0].mxu0 %v1380
    %v1450 = vpop.f32.mrb[0].mxu0
    %v1451 = vadd.f32 0.0, %v1450
    %v1452 = vpop.f32.mrb[0].mxu0
    %1453 = vdwg.mxu0
    %v1454 = vsel %vm376, %v1376, 0
    %v1456 = vsel %vm376, %v1379, 0
    %1458 = vmatprep.subr.mxu0 0.0
    %1459 = vmatpush1.xpose.msra.mxu0 %v1456
    %1460 = vmatprep.subr.mxu0 0.0
    %1461 = vmatpush1.xpose.msra.mxu0 0.0
    %1462 = vmatprep.subr.mxu0 0.0
    %1463 = vmatpush1.xpose.msra.mxu0 0.0
    %1464 = vmatprep.subr.mxu0 0.0
    %1465 = vmatpush1.xpose.msra.mxu0 0.0
    %1466 = vmatprep.subr.mxu0 0.0
    %1467 = vmatpush1.xpose.msra.mxu0 0.0
    %1468 = vmatprep.subr.mxu0 0.0
    %1469 = vmatpush1.xpose.msra.mxu0 0.0
    %1470 = vmatprep.subr.mxu0 0.0
    %1471 = vmatpush1.xpose.msra.mxu0 0.0
    %1472 = vmatprep.subr.mxu0 0.0
    %1473 = vmatpush1.xpose.msra.mxu0 0.0
    %1474 = vmatprep.subr.mxu0 0.0
    %1475 = vmatpush1.xpose.msra.mxu0 0.0
    %1476 = vmatprep.subr.mxu0 0.0
    %1477 = vmatpush1.xpose.msra.mxu0 0.0
    %1478 = vmatprep.subr.mxu0 0.0
    %1479 = vmatpush1.xpose.msra.mxu0 0.0
    %1480 = vmatprep.subr.mxu0 0.0
    %1481 = vmatpush1.xpose.msra.mxu0 0.0
    %1482 = vmatprep.subr.mxu0 0.0
    %1483 = vmatpush1.xpose.msra.mxu0 0.0
    %1484 = vmatprep.subr.mxu0 0.0
    %1485 = vmatpush1.xpose.msra.mxu0 0.0
    %1486 = vmatprep.subr.mxu0 0.0
    %1487 = vmatpush1.xpose.msra.mxu0 0.0
    %1488 = vmatprep.subr.mxu0 0.0
    %1489 = vmatpush1.xpose.msra.mxu0 0.0
    %1490 = vmatprep.subr.mxu0 0.0
    %1491 = vmatpush1.xpose.msra.mxu0 0.0
    %1492 = vmatprep.subr.mxu0 0.0
    %1493 = vmatpush1.xpose.msra.mxu0 0.0
    %1494 = vmatprep.subr.mxu0 0.0
    %1495 = vmatpush1.xpose.msra.mxu0 0.0
    %1496 = vmatprep.subr.mxu0 0.0
    %1497 = vmatpush1.xpose.msra.mxu0 0.0
    %1498 = vmatprep.subr.mxu0 0.0
    %1499 = vmatpush1.xpose.msra.mxu0 0.0
    %1500 = vmatprep.subr.mxu0 0.0
    %1501 = vmatpush1.xpose.msra.mxu0 0.0
    %1502 = vmatprep.subr.mxu0 0.0
    %1503 = vmatpush1.xpose.msra.mxu0 0.0
    %1504 = vmatprep.subr.mxu0 0.0
    %1505 = vmatpush1.xpose.msra.mxu0 0.0
    %1506 = vmatprep.subr.mxu0 0.0
    %1507 = vmatpush1.xpose.msra.mxu0 0.0
    %1508 = vmatprep.subr.mxu0 0.0
    %1509 = vmatpush1.xpose.msra.mxu0 0.0
    %1510 = vmatprep.subr.mxu0 0.0
    %1511 = vmatpush1.xpose.msra.mxu0 0.0
    %1512 = vmatprep.subr.mxu0 0.0
    %1513 = vmatpush1.xpose.msra.mxu0 0.0
    %1514 = vmatprep.subr.mxu0 0.0
    %1515 = vmatpush1.xpose.msra.mxu0 0.0
    %1516 = vmatprep.subr.mxu0 0.0
    %1517 = vmatpush1.xpose.msra.mxu0 0.0
    %1518 = vmatprep.subr.mxu0 0.0
    %1519 = vmatpush1.xpose.msra.mxu0 0.0
    %1520 = vmatprep.subr.mxu0 0.0
    %1521 = vmatpush1.xpose.msra.mxu0 0.0
    %1522 = vmatprep.mubr.f32.mxu0 0.0
    %1523 = vmatmul.mubr.f32.gmra.mrb[0].mxu0 %v1454
    %v1524 = vpop.f32.mrb[0].mxu0
    %v1525 = vadd.f32 0.0, %v1524
    %v1526 = vpop.f32.mrb[0].mxu0
    %1527 = vdwg.mxu0
    %vm1528 = vcmp.gt.f32.partialorder %v269, 0.5
    %v1529 = vsel %vm1528, 1, 0
    %vm1530 = vcmp.eq.s32.totalorder %v1529, 1
    %v1531 = vsel %vm1530, -1e+30, %v1451
    %v1532 = vsel %vm1530, -1e+30, %v1525
    %v1533 = vsel %vm532, %v1531, -inf
    %1534 = vmax.xlane.f32.xlu0 %v1533
    %v1535 = vpop.xlane.xlu0 %1534
    %v1536 = vsel %vm532, %v1532, -inf
    %1537 = vmax.xlane.f32.xlu0 %v1536
    %v1538 = vpop.xlane.xlu0 %1537
    %v1539 = vsub.f32 %v1531, %v1535
    %v1540 = vsub.f32 %v1532, %v1538
    %v1541 = vmul.f32 %v1539, 1.442695
    %v1542 = vpow.pop %v1541
    %v1543 = vmul.f32 %v1540, 1.442695
    %v1544 = vpow.pop %v1543
    %v1545 = vsel %vm532, %v1542, 0.0
    %1546 = vadd.xlane.f32.xlu0 %v1545
    %v1547 = vpop.xlane.xlu0 %1546
    %v1548 = vsel %vm532, %v1544, 0.0
    %1549 = vadd.xlane.f32.xlu0 %v1548
    %v1550 = vpop.xlane.xlu0 %1549
    %v1551 = vrcp.pop %v1547
    %v1552 = vrcp.pop %v1550
    %v1553 = vmul.f32 %v1542, %v1551
    %v1554 = vmul.f32 %v1544, %v1552
    %1555 = vrot.lane.b32.xlu0 %v1359, 96
    %v1556 = vpop.permute.xlu0 %1555
    %v1559 = vsel %vm532, %v1553, 0
    %1561 = vmatprep.subr.mxu0 0.0
    %1562 = vmatpush1.msra.mxu0 %v1556
    %1563 = vmatprep.subr.mxu0 0.0
    %1564 = vmatpush1.msra.mxu0 0.0
    %1565 = vmatprep.subr.mxu0 0.0
    %1566 = vmatpush1.msra.mxu0 0.0
    %1567 = vmatprep.subr.mxu0 0.0
    %1568 = vmatpush1.msra.mxu0 0.0
    %1569 = vmatprep.subr.mxu0 0.0
    %1570 = vmatpush1.msra.mxu0 0.0
    %1571 = vmatprep.subr.mxu0 0.0
    %1572 = vmatpush1.msra.mxu0 0.0
    %1573 = vmatprep.subr.mxu0 0.0
    %1574 = vmatpush1.msra.mxu0 0.0
    %1575 = vmatprep.subr.mxu0 0.0
    %1576 = vmatpush1.msra.mxu0 0.0
    %1577 = vmatprep.subr.mxu0 0.0
    %1578 = vmatpush1.msra.mxu0 0.0
    %1579 = vmatprep.subr.mxu0 0.0
    %1580 = vmatpush1.msra.mxu0 0.0
    %1581 = vmatprep.subr.mxu0 0.0
    %1582 = vmatpush1.msra.mxu0 0.0
    %1583 = vmatprep.subr.mxu0 0.0
    %1584 = vmatpush1.msra.mxu0 0.0
    %1585 = vmatprep.subr.mxu0 0.0
    %1586 = vmatpush1.msra.mxu0 0.0
    %1587 = vmatprep.subr.mxu0 0.0
    %1588 = vmatpush1.msra.mxu0 0.0
    %1589 = vmatprep.subr.mxu0 0.0
    %1590 = vmatpush1.msra.mxu0 0.0
    %1591 = vmatprep.subr.mxu0 0.0
    %1592 = vmatpush1.msra.mxu0 0.0
    %1593 = vmatprep.subr.mxu0 0.0
    %1594 = vmatpush1.msra.mxu0 0.0
    %1595 = vmatprep.subr.mxu0 0.0
    %1596 = vmatpush1.msra.mxu0 0.0
    %1597 = vmatprep.subr.mxu0 0.0
    %1598 = vmatpush1.msra.mxu0 0.0
    %1599 = vmatprep.subr.mxu0 0.0
    %1600 = vmatpush1.msra.mxu0 0.0
    %1601 = vmatprep.subr.mxu0 0.0
    %1602 = vmatpush1.msra.mxu0 0.0
    %1603 = vmatprep.subr.mxu0 0.0
    %1604 = vmatpush1.msra.mxu0 0.0
    %1605 = vmatprep.subr.mxu0 0.0
    %1606 = vmatpush1.msra.mxu0 0.0
    %1607 = vmatprep.subr.mxu0 0.0
    %1608 = vmatpush1.msra.mxu0 0.0
    %1609 = vmatprep.subr.mxu0 0.0
    %1610 = vmatpush1.msra.mxu0 0.0
    %1611 = vmatprep.subr.mxu0 0.0
    %1612 = vmatpush1.msra.mxu0 0.0
    %1613 = vmatprep.subr.mxu0 0.0
    %1614 = vmatpush1.msra.mxu0 0.0
    %1615 = vmatprep.subr.mxu0 0.0
    %1616 = vmatpush1.msra.mxu0 0.0
    %1617 = vmatprep.subr.mxu0 0.0
    %1618 = vmatpush1.msra.mxu0 0.0
    %1619 = vmatprep.subr.mxu0 0.0
    %1620 = vmatpush1.msra.mxu0 0.0
    %1621 = vmatprep.subr.mxu0 0.0
    %1622 = vmatpush1.msra.mxu0 0.0
    %1623 = vmatprep.subr.mxu0 0.0
    %1624 = vmatpush1.msra.mxu0 0.0
    %1625 = vmatprep.mubr.f32.mxu0 0.0
    %1626 = vmatmul.mubr.f32.gmra.mrb[0].mxu0 %v1559
    %v1627 = vpop.f32.mrb[0].mxu0
    %v1628 = vadd.f32 0.0, %v1627
    %v1629 = vpop.f32.mrb[0].mxu0
    %1630 = vdwg.mxu0
    %1631 = vrot.lane.b32.xlu0 %v1379, 96
    %v1632 = vpop.permute.xlu0 %1631
    %v1635 = vsel %vm532, %v1554, 0
    %1637 = vmatprep.subr.mxu0 0.0
    %1638 = vmatpush1.msra.mxu0 %v1632
    %1639 = vmatprep.subr.mxu0 0.0
    %1640 = vmatpush1.msra.mxu0 0.0
    %1641 = vmatprep.subr.mxu0 0.0
    %1642 = vmatpush1.msra.mxu0 0.0
    %1643 = vmatprep.subr.mxu0 0.0
    %1644 = vmatpush1.msra.mxu0 0.0
    %1645 = vmatprep.subr.mxu0 0.0
    %1646 = vmatpush1.msra.mxu0 0.0
    %1647 = vmatprep.subr.mxu0 0.0
    %1648 = vmatpush1.msra.mxu0 0.0
    %1649 = vmatprep.subr.mxu0 0.0
    %1650 = vmatpush1.msra.mxu0 0.0
    %1651 = vmatprep.subr.mxu0 0.0
    %1652 = vmatpush1.msra.mxu0 0.0
    %1653 = vmatprep.subr.mxu0 0.0
    %1654 = vmatpush1.msra.mxu0 0.0
    %1655 = vmatprep.subr.mxu0 0.0
    %1656 = vmatpush1.msra.mxu0 0.0
    %1657 = vmatprep.subr.mxu0 0.0
    %1658 = vmatpush1.msra.mxu0 0.0
    %1659 = vmatprep.subr.mxu0 0.0
    %1660 = vmatpush1.msra.mxu0 0.0
    %1661 = vmatprep.subr.mxu0 0.0
    %1662 = vmatpush1.msra.mxu0 0.0
    %1663 = vmatprep.subr.mxu0 0.0
    %1664 = vmatpush1.msra.mxu0 0.0
    %1665 = vmatprep.subr.mxu0 0.0
    %1666 = vmatpush1.msra.mxu0 0.0
    %1667 = vmatprep.subr.mxu0 0.0
    %1668 = vmatpush1.msra.mxu0 0.0
    %1669 = vmatprep.subr.mxu0 0.0
    %1670 = vmatpush1.msra.mxu0 0.0
    %1671 = vmatprep.subr.mxu0 0.0
    %1672 = vmatpush1.msra.mxu0 0.0
    %1673 = vmatprep.subr.mxu0 0.0
    %1674 = vmatpush1.msra.mxu0 0.0
    %1675 = vmatprep.subr.mxu0 0.0
    %1676 = vmatpush1.msra.mxu0 0.0
    %1677 = vmatprep.subr.mxu0 0.0
    %1678 = vmatpush1.msra.mxu0 0.0
    %1679 = vmatprep.subr.mxu0 0.0
    %1680 = vmatpush1.msra.mxu0 0.0
    %1681 = vmatprep.subr.mxu0 0.0
    %1682 = vmatpush1.msra.mxu0 0.0
    %1683 = vmatprep.subr.mxu0 0.0
    %1684 = vmatpush1.msra.mxu0 0.0
    %1685 = vmatprep.subr.mxu0 0.0
    %1686 = vmatpush1.msra.mxu0 0.0
    %1687 = vmatprep.subr.mxu0 0.0
    %1688 = vmatpush1.msra.mxu0 0.0
    %1689 = vmatprep.subr.mxu0 0.0
    %1690 = vmatpush1.msra.mxu0 0.0
    %1691 = vmatprep.subr.mxu0 0.0
    %1692 = vmatpush1.msra.mxu0 0.0
    %1693 = vmatprep.subr.mxu0 0.0
    %1694 = vmatpush1.msra.mxu0 0.0
    %1695 = vmatprep.subr.mxu0 0.0
    %1696 = vmatpush1.msra.mxu0 0.0
    %1697 = vmatprep.subr.mxu0 0.0
    %1698 = vmatpush1.msra.mxu0 0.0
    %1699 = vmatprep.subr.mxu0 0.0
    %1700 = vmatpush1.msra.mxu0 0.0
    %1701 = vmatprep.mubr.f32.mxu0 0.0
    %1702 = vmatmul.mubr.f32.gmra.mrb[0].mxu0 %v1635
    %v1703 = vpop.f32.mrb[0].mxu0
    %v1704 = vadd.f32 0.0, %v1703
    %v1705 = vpop.f32.mrb[0].mxu0
    %1706 = vdwg.mxu0
    %1708 = vrot.lane.b32.xlu0 %v1704, 16
    %v1709 = vpop.permute.xlu0 %1708
    %v1711 = vsel %vm376, %v1628, %v1709
    %1713 = vrot.lane.b32.xlu0 %v1272, 112
    %v1714 = vpop.permute.xlu0 %1713
    %1716 = vrot.lane.b32.xlu0 %v1364, 112
    %v1717 = vpop.permute.xlu0 %1716
    %v1718 = vsel %vm376, %v1272, 0
    %v1720 = vsel %vm376, %v1364, 0
    %1722 = vmatprep.subr.mxu0 0.0
    %1723 = vmatpush1.xpose.msra.mxu0 %v1720
    %1724 = vmatprep.subr.mxu0 0.0
    %1725 = vmatpush1.xpose.msra.mxu0 0.0
    %1726 = vmatprep.subr.mxu0 0.0
    %1727 = vmatpush1.xpose.msra.mxu0 0.0
    %1728 = vmatprep.subr.mxu0 0.0
    %1729 = vmatpush1.xpose.msra.mxu0 0.0
    %1730 = vmatprep.subr.mxu0 0.0
    %1731 = vmatpush1.xpose.msra.mxu0 0.0
    %1732 = vmatprep.subr.mxu0 0.0
    %1733 = vmatpush1.xpose.msra.mxu0 0.0
    %1734 = vmatprep.subr.mxu0 0.0
    %1735 = vmatpush1.xpose.msra.mxu0 0.0
    %1736 = vmatprep.subr.mxu0 0.0
    %1737 = vmatpush1.xpose.msra.mxu0 0.0
    %1738 = vmatprep.subr.mxu0 0.0
    %1739 = vmatpush1.xpose.msra.mxu0 0.0
    %1740 = vmatprep.subr.mxu0 0.0
    %1741 = vmatpush1.xpose.msra.mxu0 0.0
    %1742 = vmatprep.subr.mxu0 0.0
    %1743 = vmatpush1.xpose.msra.mxu0 0.0
    %1744 = vmatprep.subr.mxu0 0.0
    %1745 = vmatpush1.xpose.msra.mxu0 0.0
    %1746 = vmatprep.subr.mxu0 0.0
    %1747 = vmatpush1.xpose.msra.mxu0 0.0
    %1748 = vmatprep.subr.mxu0 0.0
    %1749 = vmatpush1.xpose.msra.mxu0 0.0
    %1750 = vmatprep.subr.mxu0 0.0
    %1751 = vmatpush1.xpose.msra.mxu0 0.0
    %1752 = vmatprep.subr.mxu0 0.0
    %1753 = vmatpush1.xpose.msra.mxu0 0.0
    %1754 = vmatprep.subr.mxu0 0.0
    %1755 = vmatpush1.xpose.msra.mxu0 0.0
    %1756 = vmatprep.subr.mxu0 0.0
    %1757 = vmatpush1.xpose.msra.mxu0 0.0
    %1758 = vmatprep.subr.mxu0 0.0
    %1759 = vmatpush1.xpose.msra.mxu0 0.0
    %1760 = vmatprep.subr.mxu0 0.0
    %1761 = vmatpush1.xpose.msra.mxu0 0.0
    %1762 = vmatprep.subr.mxu0 0.0
    %1763 = vmatpush1.xpose.msra.mxu0 0.0
    %1764 = vmatprep.subr.mxu0 0.0
    %1765 = vmatpush1.xpose.msra.mxu0 0.0
    %1766 = vmatprep.subr.mxu0 0.0
    %1767 = vmatpush1.xpose.msra.mxu0 0.0
    %1768 = vmatprep.subr.mxu0 0.0
    %1769 = vmatpush1.xpose.msra.mxu0 0.0
    %1770 = vmatprep.subr.mxu0 0.0
    %1771 = vmatpush1.xpose.msra.mxu0 0.0
    %1772 = vmatprep.subr.mxu0 0.0
    %1773 = vmatpush1.xpose.msra.mxu0 0.0
    %1774 = vmatprep.subr.mxu0 0.0
    %1775 = vmatpush1.xpose.msra.mxu0 0.0
    %1776 = vmatprep.subr.mxu0 0.0
    %1777 = vmatpush1.xpose.msra.mxu0 0.0
    %1778 = vmatprep.subr.mxu0 0.0
    %1779 = vmatpush1.xpose.msra.mxu0 0.0
    %1780 = vmatprep.subr.mxu0 0.0
    %1781 = vmatpush1.xpose.msra.mxu0 0.0
    %1782 = vmatprep.subr.mxu0 0.0
    %1783 = vmatpush1.xpose.msra.mxu0 0.0
    %1784 = vmatprep.subr.mxu0 0.0
    %1785 = vmatpush1.xpose.msra.mxu0 0.0
    %1786 = vmatprep.mubr.f32.mxu0 0.0
    %1787 = vmatmul.mubr.f32.gmra.mrb[0].mxu0 %v1718
    %v1788 = vpop.f32.mrb[0].mxu0
    %v1789 = vadd.f32 0.0, %v1788
    %v1790 = vpop.f32.mrb[0].mxu0
    %1791 = vdwg.mxu0
    %v1792 = vsel %vm376, %v1714, 0
    %v1794 = vsel %vm376, %v1717, 0
    %1796 = vmatprep.subr.mxu0 0.0
    %1797 = vmatpush1.xpose.msra.mxu0 %v1794
    %1798 = vmatprep.subr.mxu0 0.0
    %1799 = vmatpush1.xpose.msra.mxu0 0.0
    %1800 = vmatprep.subr.mxu0 0.0
    %1801 = vmatpush1.xpose.msra.mxu0 0.0
    %1802 = vmatprep.subr.mxu0 0.0
    %1803 = vmatpush1.xpose.msra.mxu0 0.0
    %1804 = vmatprep.subr.mxu0 0.0
    %1805 = vmatpush1.xpose.msra.mxu0 0.0
    %1806 = vmatprep.subr.mxu0 0.0
    %1807 = vmatpush1.xpose.msra.mxu0 0.0
    %1808 = vmatprep.subr.mxu0 0.0
    %1809 = vmatpush1.xpose.msra.mxu0 0.0
    %1810 = vmatprep.subr.mxu0 0.0
    %1811 = vmatpush1.xpose.msra.mxu0 0.0
    %1812 = vmatprep.subr.mxu0 0.0
    %1813 = vmatpush1.xpose.msra.mxu0 0.0
    %1814 = vmatprep.subr.mxu0 0.0
    %1815 = vmatpush1.xpose.msra.mxu0 0.0
    %1816 = vmatprep.subr.mxu0 0.0
    %1817 = vmatpush1.xpose.msra.mxu0 0.0
    %1818 = vmatprep.subr.mxu0 0.0
    %1819 = vmatpush1.xpose.msra.mxu0 0.0
    %1820 = vmatprep.subr.mxu0 0.0
    %1821 = vmatpush1.xpose.msra.mxu0 0.0
    %1822 = vmatprep.subr.mxu0 0.0
    %1823 = vmatpush1.xpose.msra.mxu0 0.0
    %1824 = vmatprep.subr.mxu0 0.0
    %1825 = vmatpush1.xpose.msra.mxu0 0.0
    %1826 = vmatprep.subr.mxu0 0.0
    %1827 = vmatpush1.xpose.msra.mxu0 0.0
    %1828 = vmatprep.subr.mxu0 0.0
    %1829 = vmatpush1.xpose.msra.mxu0 0.0
    %1830 = vmatprep.subr.mxu0 0.0
    %1831 = vmatpush1.xpose.msra.mxu0 0.0
    %1832 = vmatprep.subr.mxu0 0.0
    %1833 = vmatpush1.xpose.msra.mxu0 0.0
    %1834 = vmatprep.subr.mxu0 0.0
    %1835 = vmatpush1.xpose.msra.mxu0 0.0
    %1836 = vmatprep.subr.mxu0 0.0
    %1837 = vmatpush1.xpose.msra.mxu0 0.0
    %1838 = vmatprep.subr.mxu0 0.0
    %1839 = vmatpush1.xpose.msra.mxu0 0.0
    %1840 = vmatprep.subr.mxu0 0.0
    %1841 = vmatpush1.xpose.msra.mxu0 0.0
    %1842 = vmatprep.subr.mxu0 0.0
    %1843 = vmatpush1.xpose.msra.mxu0 0.0
    %1844 = vmatprep.subr.mxu0 0.0
    %1845 = vmatpush1.xpose.msra.mxu0 0.0
    %1846 = vmatprep.subr.mxu0 0.0
    %1847 = vmatpush1.xpose.msra.mxu0 0.0
    %1848 = vmatprep.subr.mxu0 0.0
    %1849 = vmatpush1.xpose.msra.mxu0 0.0
    %1850 = vmatprep.subr.mxu0 0.0
    %1851 = vmatpush1.xpose.msra.mxu0 0.0
    %1852 = vmatprep.subr.mxu0 0.0
    %1853 = vmatpush1.xpose.msra.mxu0 0.0
    %1854 = vmatprep.subr.mxu0 0.0
    %1855 = vmatpush1.xpose.msra.mxu0 0.0
    %1856 = vmatprep.subr.mxu0 0.0
    %1857 = vmatpush1.xpose.msra.mxu0 0.0
    %1858 = vmatprep.subr.mxu0 0.0
    %1859 = vmatpush1.xpose.msra.mxu0 0.0
    %1860 = vmatprep.mubr.f32.mxu0 0.0
    %1861 = vmatmul.mubr.f32.gmra.mrb[0].mxu0 %v1792
    %v1862 = vpop.f32.mrb[0].mxu0
    %v1863 = vadd.f32 0.0, %v1862
    %v1864 = vpop.f32.mrb[0].mxu0
    %1865 = vdwg.mxu0
    %vm1866 = vcmp.gt.f32.partialorder %v270, 0.5
    %v1867 = vsel %vm1866, 1, 0
    %vm1868 = vcmp.eq.s32.totalorder %v1867, 1
    %v1869 = vsel %vm1868, -1e+30, %v1789
    %v1870 = vsel %vm1868, -1e+30, %v1863
    %v1871 = vsel %vm532, %v1869, -inf
    %1872 = vmax.xlane.f32.xlu0 %v1871
    %v1873 = vpop.xlane.xlu0 %1872
    %v1874 = vsel %vm532, %v1870, -inf
    %1875 = vmax.xlane.f32.xlu0 %v1874
    %v1876 = vpop.xlane.xlu0 %1875
    %v1877 = vsub.f32 %v1869, %v1873
    %v1878 = vsub.f32 %v1870, %v1876
    %v1879 = vmul.f32 %v1877, 1.442695
    %v1880 = vpow.pop %v1879
    %v1881 = vmul.f32 %v1878, 1.442695
    %v1882 = vpow.pop %v1881
    %v1883 = vsel %vm532, %v1880, 0.0
    %1884 = vadd.xlane.f32.xlu0 %v1883
    %v1885 = vpop.xlane.xlu0 %1884
    %v1886 = vsel %vm532, %v1882, 0.0
    %1887 = vadd.xlane.f32.xlu0 %v1886
    %v1888 = vpop.xlane.xlu0 %1887
    %v1889 = vrcp.pop %v1885
    %v1890 = vrcp.pop %v1888
    %v1891 = vmul.f32 %v1880, %v1889
    %v1892 = vmul.f32 %v1882, %v1890
    %1893 = vrot.lane.b32.xlu0 %v1364, 96
    %v1894 = vpop.permute.xlu0 %1893
    %v1897 = vsel %vm532, %v1891, 0
    %1899 = vmatprep.subr.mxu0 0.0
    %1900 = vmatpush1.msra.mxu0 %v1894
    %1901 = vmatprep.subr.mxu0 0.0
    %1902 = vmatpush1.msra.mxu0 0.0
    %1903 = vmatprep.subr.mxu0 0.0
    %1904 = vmatpush1.msra.mxu0 0.0
    %1905 = vmatprep.subr.mxu0 0.0
    %1906 = vmatpush1.msra.mxu0 0.0
    %1907 = vmatprep.subr.mxu0 0.0
    %1908 = vmatpush1.msra.mxu0 0.0
    %1909 = vmatprep.subr.mxu0 0.0
    %1910 = vmatpush1.msra.mxu0 0.0
    %1911 = vmatprep.subr.mxu0 0.0
    %1912 = vmatpush1.msra.mxu0 0.0
    %1913 = vmatprep.subr.mxu0 0.0
    %1914 = vmatpush1.msra.mxu0 0.0
    %1915 = vmatprep.subr.mxu0 0.0
    %1916 = vmatpush1.msra.mxu0 0.0
    %1917 = vmatprep.subr.mxu0 0.0
    %1918 = vmatpush1.msra.mxu0 0.0
    %1919 = vmatprep.subr.mxu0 0.0
    %1920 = vmatpush1.msra.mxu0 0.0
    %1921 = vmatprep.subr.mxu0 0.0
    %1922 = vmatpush1.msra.mxu0 0.0
    %1923 = vmatprep.subr.mxu0 0.0
    %1924 = vmatpush1.msra.mxu0 0.0
    %1925 = vmatprep.subr.mxu0 0.0
    %1926 = vmatpush1.msra.mxu0 0.0
    %1927 = vmatprep.subr.mxu0 0.0
    %1928 = vmatpush1.msra.mxu0 0.0
    %1929 = vmatprep.subr.mxu0 0.0
    %1930 = vmatpush1.msra.mxu0 0.0
    %1931 = vmatprep.subr.mxu0 0.0
    %1932 = vmatpush1.msra.mxu0 0.0
    %1933 = vmatprep.subr.mxu0 0.0
    %1934 = vmatpush1.msra.mxu0 0.0
    %1935 = vmatprep.subr.mxu0 0.0
    %1936 = vmatpush1.msra.mxu0 0.0
    %1937 = vmatprep.subr.mxu0 0.0
    %1938 = vmatpush1.msra.mxu0 0.0
    %1939 = vmatprep.subr.mxu0 0.0
    %1940 = vmatpush1.msra.mxu0 0.0
    %1941 = vmatprep.subr.mxu0 0.0
    %1942 = vmatpush1.msra.mxu0 0.0
    %1943 = vmatprep.subr.mxu0 0.0
    %1944 = vmatpush1.msra.mxu0 0.0
    %1945 = vmatprep.subr.mxu0 0.0
    %1946 = vmatpush1.msra.mxu0 0.0
    %1947 = vmatprep.subr.mxu0 0.0
    %1948 = vmatpush1.msra.mxu0 0.0
    %1949 = vmatprep.subr.mxu0 0.0
    %1950 = vmatpush1.msra.mxu0 0.0
    %1951 = vmatprep.subr.mxu0 0.0
    %1952 = vmatpush1.msra.mxu0 0.0
    %1953 = vmatprep.subr.mxu0 0.0
    %1954 = vmatpush1.msra.mxu0 0.0
    %1955 = vmatprep.subr.mxu0 0.0
    %1956 = vmatpush1.msra.mxu0 0.0
    %1957 = vmatprep.subr.mxu0 0.0
    %1958 = vmatpush1.msra.mxu0 0.0
    %1959 = vmatprep.subr.mxu0 0.0
    %1960 = vmatpush1.msra.mxu0 0.0
    %1961 = vmatprep.subr.mxu0 0.0
    %1962 = vmatpush1.msra.mxu0 0.0
    %1963 = vmatprep.mubr.f32.mxu0 0.0
    %1964 = vmatmul.mubr.f32.gmra.mrb[0].mxu0 %v1897
    %v1965 = vpop.f32.mrb[0].mxu0
    %v1966 = vadd.f32 0.0, %v1965
    %v1967 = vpop.f32.mrb[0].mxu0
    %1968 = vdwg.mxu0
    %1969 = vrot.lane.b32.xlu0 %v1717, 96
    %v1970 = vpop.permute.xlu0 %1969
    %v1973 = vsel %vm532, %v1892, 0
    %1975 = vmatprep.subr.mxu0 0.0
    %1976 = vmatpush1.msra.mxu0 %v1970
    %1977 = vmatprep.subr.mxu0 0.0
    %1978 = vmatpush1.msra.mxu0 0.0
    %1979 = vmatprep.subr.mxu0 0.0
    %1980 = vmatpush1.msra.mxu0 0.0
    %1981 = vmatprep.subr.mxu0 0.0
    %1982 = vmatpush1.msra.mxu0 0.0
    %1983 = vmatprep.subr.mxu0 0.0
    %1984 = vmatpush1.msra.mxu0 0.0
    %1985 = vmatprep.subr.mxu0 0.0
    %1986 = vmatpush1.msra.mxu0 0.0
    %1987 = vmatprep.subr.mxu0 0.0
    %1988 = vmatpush1.msra.mxu0 0.0
    %1989 = vmatprep.subr.mxu0 0.0
    %1990 = vmatpush1.msra.mxu0 0.0
    %1991 = vmatprep.subr.mxu0 0.0
    %1992 = vmatpush1.msra.mxu0 0.0
    %1993 = vmatprep.subr.mxu0 0.0
    %1994 = vmatpush1.msra.mxu0 0.0
    %1995 = vmatprep.subr.mxu0 0.0
    %1996 = vmatpush1.msra.mxu0 0.0
    %1997 = vmatprep.subr.mxu0 0.0
    %1998 = vmatpush1.msra.mxu0 0.0
    %1999 = vmatprep.subr.mxu0 0.0
    %2000 = vmatpush1.msra.mxu0 0.0
    %2001 = vmatprep.subr.mxu0 0.0
    %2002 = vmatpush1.msra.mxu0 0.0
    %2003 = vmatprep.subr.mxu0 0.0
    %2004 = vmatpush1.msra.mxu0 0.0
    %2005 = vmatprep.subr.mxu0 0.0
    %2006 = vmatpush1.msra.mxu0 0.0
    %2007 = vmatprep.subr.mxu0 0.0
    %2008 = vmatpush1.msra.mxu0 0.0
    %2009 = vmatprep.subr.mxu0 0.0
    %2010 = vmatpush1.msra.mxu0 0.0
    %2011 = vmatprep.subr.mxu0 0.0
    %2012 = vmatpush1.msra.mxu0 0.0
    %2013 = vmatprep.subr.mxu0 0.0
    %2014 = vmatpush1.msra.mxu0 0.0
    %2015 = vmatprep.subr.mxu0 0.0
    %2016 = vmatpush1.msra.mxu0 0.0
    %2017 = vmatprep.subr.mxu0 0.0
    %2018 = vmatpush1.msra.mxu0 0.0
    %2019 = vmatprep.subr.mxu0 0.0
    %2020 = vmatpush1.msra.mxu0 0.0
    %2021 = vmatprep.subr.mxu0 0.0
    %2022 = vmatpush1.msra.mxu0 0.0
    %2023 = vmatprep.subr.mxu0 0.0
    %2024 = vmatpush1.msra.mxu0 0.0
    %2025 = vmatprep.subr.mxu0 0.0
    %2026 = vmatpush1.msra.mxu0 0.0
    %2027 = vmatprep.subr.mxu0 0.0
    %2028 = vmatpush1.msra.mxu0 0.0
    %2029 = vmatprep.subr.mxu0 0.0
    %2030 = vmatpush1.msra.mxu0 0.0
    %2031 = vmatprep.subr.mxu0 0.0
    %2032 = vmatpush1.msra.mxu0 0.0
    %2033 = vmatprep.subr.mxu0 0.0
    %2034 = vmatpush1.msra.mxu0 0.0
    %2035 = vmatprep.subr.mxu0 0.0
    %2036 = vmatpush1.msra.mxu0 0.0
    %2037 = vmatprep.subr.mxu0 0.0
    %2038 = vmatpush1.msra.mxu0 0.0
    %2039 = vmatprep.mubr.f32.mxu0 0.0
    %2040 = vmatmul.mubr.f32.gmra.mrb[0].mxu0 %v1973
    %v2041 = vpop.f32.mrb[0].mxu0
    %v2042 = vadd.f32 0.0, %v2041
    %v2043 = vpop.f32.mrb[0].mxu0
    %2044 = vdwg.mxu0
    %2046 = vrot.lane.b32.xlu0 %v2042, 16
    %v2047 = vpop.permute.xlu0 %2046
    %v2049 = vsel %vm376, %v1966, %v2047
    %v2051 = vlaneseq
    %v2052 = vshrl.u32 %v2051, 7
    %v2053 = vsub.s32 0, %v2052
    %v2054 = vrot.slane %v1371, %v2053
    %v2057 = vsel %vm282, %v1711, 0
    %v2060 = vsel %vm282, %v2049, 0
    %2062 = vmatprep.subr.mxu0 0.0
    %2063 = vmatpush1.msra.mxu0 %v1367
    %2064 = vmatprep.subr.mxu0 0.0
    %2065 = vmatpush1.msra.mxu0 %v1368
    %2066 = vmatprep.subr.mxu0 0.0
    %2067 = vmatpush1.msra.mxu0 %v1369
    %2068 = vmatprep.subr.mxu0 0.0
    %2069 = vmatpush1.msra.mxu0 %v1370
    %2070 = vmatprep.subr.mxu0 0.0
    %2071 = vmatpush1.msra.mxu0 0.0
    %2072 = vmatprep.subr.mxu0 0.0
    %2073 = vmatpush1.msra.mxu0 0.0
    %2074 = vmatprep.subr.mxu0 0.0
    %2075 = vmatpush1.msra.mxu0 0.0
    %2076 = vmatprep.subr.mxu0 0.0
    %2077 = vmatpush1.msra.mxu0 0.0
    %2078 = vmatprep.subr.mxu0 0.0
    %2079 = vmatpush1.msra.mxu0 0.0
    %2080 = vmatprep.subr.mxu0 0.0
    %2081 = vmatpush1.msra.mxu0 0.0
    %2082 = vmatprep.subr.mxu0 0.0
    %2083 = vmatpush1.msra.mxu0 0.0
    %2084 = vmatprep.subr.mxu0 0.0
    %2085 = vmatpush1.msra.mxu0 0.0
    %2086 = vmatprep.subr.mxu0 0.0
    %2087 = vmatpush1.msra.mxu0 0.0
    %2088 = vmatprep.subr.mxu0 0.0
    %2089 = vmatpush1.msra.mxu0 0.0
    %2090 = vmatprep.subr.mxu0 0.0
    %2091 = vmatpush1.msra.mxu0 0.0
    %2092 = vmatprep.subr.mxu0 0.0
    %2093 = vmatpush1.msra.mxu0 0.0
    %2094 = vmatprep.subr.mxu0 0.0
    %2095 = vmatpush1.msra.mxu0 0.0
    %2096 = vmatprep.subr.mxu0 0.0
    %2097 = vmatpush1.msra.mxu0 0.0
    %2098 = vmatprep.subr.mxu0 0.0
    %2099 = vmatpush1.msra.mxu0 0.0
    %2100 = vmatprep.subr.mxu0 0.0
    %2101 = vmatpush1.msra.mxu0 0.0
    %2102 = vmatprep.subr.mxu0 0.0
    %2103 = vmatpush1.msra.mxu0 0.0
    %2104 = vmatprep.subr.mxu0 0.0
    %2105 = vmatpush1.msra.mxu0 0.0
    %2106 = vmatprep.subr.mxu0 0.0
    %2107 = vmatpush1.msra.mxu0 0.0
    %2108 = vmatprep.subr.mxu0 0.0
    %2109 = vmatpush1.msra.mxu0 0.0
    %2110 = vmatprep.subr.mxu0 0.0
    %2111 = vmatpush1.msra.mxu0 0.0
    %2112 = vmatprep.subr.mxu0 0.0
    %2113 = vmatpush1.msra.mxu0 0.0
    %2114 = vmatprep.subr.mxu0 0.0
    %2115 = vmatpush1.msra.mxu0 0.0
    %2116 = vmatprep.subr.mxu0 0.0
    %2117 = vmatpush1.msra.mxu0 0.0
    %2118 = vmatprep.subr.mxu0 0.0
    %2119 = vmatpush1.msra.mxu0 0.0
    %2120 = vmatprep.subr.mxu0 0.0
    %2121 = vmatpush1.msra.mxu0 0.0
    %2122 = vmatprep.subr.mxu0 0.0
    %2123 = vmatpush1.msra.mxu0 0.0
    %2124 = vmatprep.subr.mxu0 0.0
    %2125 = vmatpush1.msra.mxu0 0.0
    %2126 = vmatprep.mubr.f32.mxu0 0.0
    %2127 = vmatmul.mubr.f32.gmra.mrb[0].mxu0 %v2057
    %v2128 = vpop.f32.mrb[0].mxu0
    %v2129 = vadd.f32 %v2054, %v2128
    %v2130 = vpop.f32.mrb[0].mxu0
    %2131 = vmatprep.mubr.f32.mxu0 0.0
    %2132 = vmatmul.mubr.f32.gmra.mrb[0].mxu0 %v2060
    %v2133 = vpop.f32.mrb[0].mxu0
    %v2134 = vadd.f32 %v2054, %v2133
    %v2135 = vpop.f32.mrb[0].mxu0
    %2136 = vdwg.mxu0
    %v2137 = vadd.f32 %v1181, %v2129
    %v2138 = vadd.f32 %v1182, %v2134
    %v2139 = vsel %vm282, %v2137, 0.0
    %2140 = vadd.xlane.f32.xlu0 %v2139
    %v2141 = vpop.xlane.xlu0 %2140
    %v2142 = vsel %vm282, %v2138, 0.0
    %2143 = vadd.xlane.f32.xlu0 %v2142
    %v2144 = vpop.xlane.xlu0 %2143
    %v2145 = vmul.f32 %v2141, %v1146
    %v2146 = vmul.f32 %v2144, %v1146
    %v2147 = vsub.f32 %v2137, %v2145
    %v2148 = vsub.f32 %v2138, %v2146
    %v2149 = vmul.f32 %v2147, %v2147
    %v2150 = vmul.f32 %v2148, %v2148
    %v2151 = vsel %vm282, %v2149, 0.0
    %2152 = vadd.xlane.f32.xlu0 %v2151
    %v2153 = vpop.xlane.xlu0 %2152
    %v2154 = vsel %vm282, %v2150, 0.0
    %2155 = vadd.xlane.f32.xlu0 %v2154
    %v2156 = vpop.xlane.xlu0 %2155
    %v2157 = vmul.f32 %v2153, %v1146
    %v2158 = vmul.f32 %v2156, %v1146
    %v2159 = vadd.f32 %v2157, 1e-06
    %v2160 = vadd.f32 %v2158, 1e-06
    %v2161 = vrsqrt.pop %v2159
    %v2162 = vrsqrt.pop %v2160
    %v2163 = vmul.f32 %v2147, %v2161
    %v2164 = vmul.f32 %v2148, %v2162
    %v2166 = vlaneseq
    %v2167 = vshrl.u32 %v2166, 7
    %v2168 = vsub.s32 0, %v2167
    %v2169 = vrot.slane %v1372, %v2168
    %v2171 = vmul.f32 %v2163, %v2169
    %v2172 = vmul.f32 %v2164, %v2169
    %v2174 = vlaneseq
    %v2175 = vshrl.u32 %v2174, 7
    %v2176 = vsub.s32 0, %v2175
    %v2177 = vrot.slane %v1373, %v2176
    %v2179 = vadd.f32 %v2171, %v2177
    %v2180 = vadd.f32 %v2172, %v2177
    %v2181 = vld [vmem:[#allocation25] sm:$0xff]
    %v2182 = vld [vmem:[#allocation25 + $0x8] sm:$0xff]
    %v2183 = vld [vmem:[#allocation25 + $0x10] sm:$0xff]
    %v2184 = vld [vmem:[#allocation25 + $0x18] sm:$0xff]
    %v2185 = vld [vmem:[%s19] sm:$0x1]
    %v2187 = vlaneseq
    %v2188 = vshrl.u32 %v2187, 7
    %v2189 = vsub.s32 0, %v2188
    %v2190 = vrot.slane %v2185, %v2189
    %v2193 = vsel %vm282, %v2179, 0
    %v2196 = vsel %vm282, %v2180, 0
    %2198 = vmatprep.subr.mxu0 0.0
    %2199 = vmatpush1.msra.mxu0 %v2181
    %2200 = vmatprep.subr.mxu0 0.0
    %2201 = vmatpush1.msra.mxu0 %v2182
    %2202 = vmatprep.subr.mxu0 0.0
    %2203 = vmatpush1.msra.mxu0 %v2183
    %2204 = vmatprep.subr.mxu0 0.0
    %2205 = vmatpush1.msra.mxu0 %v2184
    %2206 = vmatprep.subr.mxu0 0.0
    %2207 = vmatpush1.msra.mxu0 0.0
    %2208 = vmatprep.subr.mxu0 0.0
    %2209 = vmatpush1.msra.mxu0 0.0
    %2210 = vmatprep.subr.mxu0 0.0
    %2211 = vmatpush1.msra.mxu0 0.0
    %2212 = vmatprep.subr.mxu0 0.0
    %2213 = vmatpush1.msra.mxu0 0.0
    %2214 = vmatprep.subr.mxu0 0.0
    %2215 = vmatpush1.msra.mxu0 0.0
    %2216 = vmatprep.subr.mxu0 0.0
    %2217 = vmatpush1.msra.mxu0 0.0
    %2218 = vmatprep.subr.mxu0 0.0
    %2219 = vmatpush1.msra.mxu0 0.0
    %2220 = vmatprep.subr.mxu0 0.0
    %2221 = vmatpush1.msra.mxu0 0.0
    %2222 = vmatprep.subr.mxu0 0.0
    %2223 = vmatpush1.msra.mxu0 0.0
    %2224 = vmatprep.subr.mxu0 0.0
    %2225 = vmatpush1.msra.mxu0 0.0
    %2226 = vmatprep.subr.mxu0 0.0
    %2227 = vmatpush1.msra.mxu0 0.0
    %2228 = vmatprep.subr.mxu0 0.0
    %2229 = vmatpush1.msra.mxu0 0.0
    %2230 = vmatprep.subr.mxu0 0.0
    %2231 = vmatpush1.msra.mxu0 0.0
    %2232 = vmatprep.subr.mxu0 0.0
    %2233 = vmatpush1.msra.mxu0 0.0
    %2234 = vmatprep.subr.mxu0 0.0
    %2235 = vmatpush1.msra.mxu0 0.0
    %2236 = vmatprep.subr.mxu0 0.0
    %2237 = vmatpush1.msra.mxu0 0.0
    %2238 = vmatprep.subr.mxu0 0.0
    %2239 = vmatpush1.msra.mxu0 0.0
    %2240 = vmatprep.subr.mxu0 0.0
    %2241 = vmatpush1.msra.mxu0 0.0
    %2242 = vmatprep.subr.mxu0 0.0
    %2243 = vmatpush1.msra.mxu0 0.0
    %2244 = vmatprep.subr.mxu0 0.0
    %2245 = vmatpush1.msra.mxu0 0.0
    %2246 = vmatprep.subr.mxu0 0.0
    %2247 = vmatpush1.msra.mxu0 0.0
    %2248 = vmatprep.subr.mxu0 0.0
    %2249 = vmatpush1.msra.mxu0 0.0
    %2250 = vmatprep.subr.mxu0 0.0
    %2251 = vmatpush1.msra.mxu0 0.0
    %2252 = vmatprep.subr.mxu0 0.0
    %2253 = vmatpush1.msra.mxu0 0.0
    %2254 = vmatprep.subr.mxu0 0.0
    %2255 = vmatpush1.msra.mxu0 0.0
    %2256 = vmatprep.subr.mxu0 0.0
    %2257 = vmatpush1.msra.mxu0 0.0
    %2258 = vmatprep.subr.mxu0 0.0
    %2259 = vmatpush1.msra.mxu0 0.0
    %2260 = vmatprep.subr.mxu0 0.0
    %2261 = vmatpush1.msra.mxu0 0.0
    %2262 = vmatprep.mubr.f32.mxu0 0.0
    %2263 = vmatmul.mubr.f32.gmra.mrb[0].mxu0 %v2193
    %v2264 = vpop.f32.mrb[0].mxu0
    %v2265 = vadd.f32 %v2190, %v2264
    %v2266 = vpop.f32.mrb[0].mxu0
    %2267 = vmatprep.mubr.f32.mxu0 0.0
    %2268 = vmatmul.mubr.f32.gmra.mrb[0].mxu0 %v2196
    %v2269 = vpop.f32.mrb[0].mxu0
    %v2270 = vadd.f32 %v2190, %v2269
    %v2271 = vpop.f32.mrb[0].mxu0
    %2272 = vdwg.mxu0
    %v2273 = vmax.f32 %v2265, 0.0
    %v2274 = vmax.f32 %v2270, 0.0
    %v2275 = vld [vmem:[%s20] sm:$0xff]
    %v2276 = vld [vmem:[%s20 + $0x8] sm:$0xff]
    %v2277 = vld [vmem:[%s20 + $0x10] sm:$0xff]
    %v2278 = vld [vmem:[%s20 + $0x18] sm:$0xff]
    %v2279 = vld [vmem:[%s20 + $0x20] sm:$0xff]
    %v2280 = vld [vmem:[%s20 + $0x28] sm:$0xff]
    %v2281 = vld [vmem:[%s20 + $0x30] sm:$0xff]
    %v2282 = vld [vmem:[%s20 + $0x38] sm:$0xff]
    %v2283 = vld [vmem:[%s21] sm:$0x1]
    %v2285 = vlaneseq
    %v2286 = vshrl.u32 %v2285, 7
    %v2287 = vsub.s32 0, %v2286
    %v2288 = vrot.slane %v2283, %v2287
    %vm2290 = vcmask 523264
    %v2292 = vsel %vm2290, %v2273, 0
    %v2295 = vsel %vm2290, %v2274, 0
    %2297 = vmatprep.subr.mxu0 0.0
    %2298 = vmatpush1.msra.mxu0 %v2275
    %2299 = vmatprep.subr.mxu0 0.0
    %2300 = vmatpush1.msra.mxu0 %v2276
    %2301 = vmatprep.subr.mxu0 0.0
    %2302 = vmatpush1.msra.mxu0 %v2277
    %2303 = vmatprep.subr.mxu0 0.0
    %2304 = vmatpush1.msra.mxu0 %v2278
    %2305 = vmatprep.subr.mxu0 0.0
    %2306 = vmatpush1.msra.mxu0 %v2279
    %2307 = vmatprep.subr.mxu0 0.0
    %2308 = vmatpush1.msra.mxu0 %v2280
    %2309 = vmatprep.subr.mxu0 0.0
    %2310 = vmatpush1.msra.mxu0 %v2281
    %2311 = vmatprep.subr.mxu0 0.0
    %2312 = vmatpush1.msra.mxu0 %v2282
    %2313 = vmatprep.subr.mxu0 0.0
    %2314 = vmatpush1.msra.mxu0 0.0
    %2315 = vmatprep.subr.mxu0 0.0
    %2316 = vmatpush1.msra.mxu0 0.0
    %2317 = vmatprep.subr.mxu0 0.0
    %2318 = vmatpush1.msra.mxu0 0.0
    %2319 = vmatprep.subr.mxu0 0.0
    %2320 = vmatpush1.msra.mxu0 0.0
    %2321 = vmatprep.subr.mxu0 0.0
    %2322 = vmatpush1.msra.mxu0 0.0
    %2323 = vmatprep.subr.mxu0 0.0
    %2324 = vmatpush1.msra.mxu0 0.0
    %2325 = vmatprep.subr.mxu0 0.0
    %2326 = vmatpush1.msra.mxu0 0.0
    %2327 = vmatprep.subr.mxu0 0.0
    %2328 = vmatpush1.msra.mxu0 0.0
    %2329 = vmatprep.subr.mxu0 0.0
    %2330 = vmatpush1.msra.mxu0 0.0
    %2331 = vmatprep.subr.mxu0 0.0
    %2332 = vmatpush1.msra.mxu0 0.0
    %2333 = vmatprep.subr.mxu0 0.0
    %2334 = vmatpush1.msra.mxu0 0.0
    %2335 = vmatprep.subr.mxu0 0.0
    %2336 = vmatpush1.msra.mxu0 0.0
    %2337 = vmatprep.subr.mxu0 0.0
    %2338 = vmatpush1.msra.mxu0 0.0
    %2339 = vmatprep.subr.mxu0 0.0
    %2340 = vmatpush1.msra.mxu0 0.0
    %2341 = vmatprep.subr.mxu0 0.0
    %2342 = vmatpush1.msra.mxu0 0.0
    %2343 = vmatprep.subr.mxu0 0.0
    %2344 = vmatpush1.msra.mxu0 0.0
    %2345 = vmatprep.subr.mxu0 0.0
    %2346 = vmatpush1.msra.mxu0 0.0
    %2347 = vmatprep.subr.mxu0 0.0
    %2348 = vmatpush1.msra.mxu0 0.0
    %2349 = vmatprep.subr.mxu0 0.0
    %2350 = vmatpush1.msra.mxu0 0.0
    %2351 = vmatprep.subr.mxu0 0.0
    %2352 = vmatpush1.msra.mxu0 0.0
    %2353 = vmatprep.subr.mxu0 0.0
    %2354 = vmatpush1.msra.mxu0 0.0
    %2355 = vmatprep.subr.mxu0 0.0
    %2356 = vmatpush1.msra.mxu0 0.0
    %2357 = vmatprep.subr.mxu0 0.0
    %2358 = vmatpush1.msra.mxu0 0.0
    %2359 = vmatprep.subr.mxu0 0.0
    %2360 = vmatpush1.msra.mxu0 0.0
    %2361 = vmatprep.mubr.f32.mxu0 0.0
    %2362 = vmatmul.mubr.f32.gmra.mrb[0].mxu0 %v2292
    %v2363 = vpop.f32.mrb[0].mxu0
    %v2364 = vadd.f32 %v2288, %v2363
    %v2365 = vpop.f32.mrb[0].mxu0
    %2366 = vmatprep.mubr.f32.mxu0 0.0
    %2367 = vmatmul.mubr.f32.gmra.mrb[0].mxu0 %v2295
    %v2368 = vpop.f32.mrb[0].mxu0
    %v2369 = vadd.f32 %v2288, %v2368
    %v2370 = vpop.f32.mrb[0].mxu0
    %2371 = vdwg.mxu0
    %v2372 = vmax.f32 %v2364, 0.0
    %v2373 = vmax.f32 %v2369, 0.0
    %v2374 = vadd.f32 %v2372, %v2179
    %v2375 = vadd.f32 %v2373, %v2180
    %v2376 = vld [vmem:[%s22] sm:$0x1]
    %v2377 = vld [vmem:[%s23] sm:$0x1]
    %v2378 = vsel %vm282, %v2374, 0.0
    %2379 = vadd.xlane.f32.xlu0 %v2378
    %v2380 = vpop.xlane.xlu0 %2379
    %v2381 = vsel %vm282, %v2375, 0.0
    %2382 = vadd.xlane.f32.xlu0 %v2381
    %v2383 = vpop.xlane.xlu0 %2382
    %v2384 = vmul.f32 %v2380, %v1146
    %v2385 = vmul.f32 %v2383, %v1146
    %v2386 = vsub.f32 %v2374, %v2384
    %v2387 = vsub.f32 %v2375, %v2385
    %v2388 = vmul.f32 %v2386, %v2386
    %v2389 = vmul.f32 %v2387, %v2387
    %v2390 = vsel %vm282, %v2388, 0.0
    %2391 = vadd.xlane.f32.xlu0 %v2390
    %v2392 = vpop.xlane.xlu0 %2391
    %v2393 = vsel %vm282, %v2389, 0.0
    %2394 = vadd.xlane.f32.xlu0 %v2393
    %v2395 = vpop.xlane.xlu0 %2394
    %v2396 = vmul.f32 %v2392, %v1146
    %v2397 = vmul.f32 %v2395, %v1146
    %v2398 = vadd.f32 %v2396, 1e-06
    %v2399 = vadd.f32 %v2397, 1e-06
    %v2400 = vrsqrt.pop %v2398
    %v2401 = vrsqrt.pop %v2399
    %v2402 = vmul.f32 %v2386, %v2400
    %v2403 = vmul.f32 %v2387, %v2401
    %v2405 = vlaneseq
    %v2406 = vshrl.u32 %v2405, 7
    %v2407 = vsub.s32 0, %v2406
    %v2408 = vrot.slane %v2376, %v2407
    %v2410 = vmul.f32 %v2402, %v2408
    %v2411 = vmul.f32 %v2403, %v2408
    %v2413 = vlaneseq
    %v2414 = vshrl.u32 %v2413, 7
    %v2415 = vsub.s32 0, %v2414
    %v2416 = vrot.slane %v2377, %v2415
    %v2418 = vadd.f32 %v2410, %v2416
    %v2419 = vadd.f32 %v2411, %v2416
    %2420 = vst.msk [vmem:[#allocation26] sm:$0xff] %vm282, %v2418
    %2421 = vst.msk [vmem:[#allocation26 + $0x8] sm:$0xff] %vm282, %v2419
    // Predicated region
    $region158: #{tpu_custom_call.1} parent=1 // pred_check
      _
    $region159: #{tpu_custom_call.1} parent=1 // pred_check_branch
      %2423 = sbr.rel (0) target = $region161
    $region160: #{tpu_custom_call.1} parent=1 // pred_region
      %s2425 = ssub.s32 256, 256
      %2426 = vsyncadd [#allocation4], %s2425
      %s2427 = sshll.u32 [#allocation26], 4
      %s2428 = int_to_ptr.vmem [resolvable:$true] %s2427
      %2433 = dma.vmem_to_hbm [thread:$0]  %s2428, 256, %s24, [#allocation4], 128, 128, 8
    $region161: #{tpu_custom_call.1} parent=1 // pred_fallthru
      _
    // Predicated region
    $region162: #{tpu_custom_call.1} parent=1 // pred_check
      _
    $region163: #{tpu_custom_call.1} parent=1 // pred_check_branch
      %2435 = sbr.rel (0) target = $region165
    $region164: #{tpu_custom_call.1} parent=1 // pred_region
      %2436 = dma.done [#allocation4], 256
    $region165: #{tpu_custom_call.1} parent=1 // pred_fallthru
      _
    %2437 = vsyncpa [#allocation3], 1
    %2438 = vsyncpa [#allocation6], 1
    %2439 = vsyncpa [#allocation9], 1
    %2440 = vsyncpa [#allocation12], 1
    %2441 = vsyncpa [#allocation15], 1
    %2442 = vsyncpa [#allocation18], 1
    %2443 = vsyncpa [#allocation21], 1
    %2444 = vsyncpa [#allocation24], 1
    %2445 = vsyncpa [#allocation4], 1

</llo_original>
